<compile_context>
chip_gen: v6e
topology: v6e:2x2x1
jax: 0.10.0
libtpu: 0.0.40
codegen_flags: <defaults>
</compile_context>

<pallas_src>
import functools

import jax
import jax.numpy as jnp
from jax.experimental import pallas as pl
from jax.experimental.pallas import tpu as pltpu

EPS = 1e-5


# --------------------------------------------------------------------------------------
# Kernel: one grid step == one batch item, everything lives in VMEM.
# Activation layout: (C, Ho*Wrow) where each spatial row has Wo real columns followed by
# `d` zero columns (Wrow = Wo + d).  3x3 stride-1 convs are computed with the "flat shift"
# trick: pad (Wrow+1) zeros on both ends of the lane axis, then tap (ky,kx) is the lane
# slice starting at ky*Wrow + kx.  The zero pad columns/rows make boundary taps exact.
# --------------------------------------------------------------------------------------
def _down_kernel(a1ph_ref, xs_ref, w1_ref, wsk_ref, w234_ref,
                 bn_s_ref, bn_t_ref, bias_ref, mask_ref, o_ref,
                 *, dil, Ho, Wo, Wrow, Cout):
    f32 = jnp.float32
    SEG = Ho * Wrow
    mask = mask_ref[...]                                   # (1, SEG): 1.0 on real columns

    # ---- conv1: 3x3, stride 2, dilation `dil` (input is pre-activated + phase-split) ----
    acc = jnp.zeros((Cout, SEG), f32)
    phases = {}
    for ky in range(3):
        for kx in range(3):
            py, qy = (ky * dil) % 2, (ky * dil) // 2
            px, qx = (kx * dil) % 2, (kx * dil) // 2
            pid = py * 2 + px
            if pid not in phases:
                phases[pid] = a1ph_ref[0, pid]             # (Cin, F1p)
            start = qy * Wrow + qx
            xt = phases[pid][:, start:start + SEG]         # (Cin, SEG) contiguous lane slice
            acc = acc + jnp.dot(w1_ref[ky * 3 + kx], xt,
                                preferred_element_type=f32)
    h1 = (acc + bias_ref[0]) * mask                        # (Cout, SEG)

    # ---- skip path: 1x1 stride-2 conv of the raw input (subsampled on host) ----
    sk = (jnp.dot(wsk_ref[...], xs_ref[0], preferred_element_type=f32)
          + bias_ref[1]) * mask

    def act(v, i):
        # fused eval-mode BatchNorm (scale/shift) + ReLU; re-zero the pad columns so the
        # flat-shift conv below sees exact zero padding.
        return jnp.maximum(v * bn_s_ref[i] + bn_t_ref[i], 0.0) * mask

    def conv3x3(a, w):                                     # a: (Cout, SEG) masked; w: (9, Cout, Cout)
        zpad = jnp.zeros((Cout, Wrow + 1), f32)
        flat = jnp.concatenate([zpad, a, zpad], axis=1)    # (Cout, (Ho+2)*Wrow + 2)
        r = jnp.zeros((Cout, SEG), f32)
        for ky in range(3):
            for kx in range(3):
                s = ky * Wrow + kx
                r = r + jnp.dot(w[ky * 3 + kx], flat[:, s:s + SEG],
                                preferred_element_type=f32)
        return r

    w2 = w234_ref[0]
    w3 = w234_ref[1]
    w4 = w234_ref[2]

    out3 = (conv3x3(act(h1, 0), w2) + bias_ref[2]) * mask + sk      # net1(x) + skip(x)
    h3 = (conv3x3(act(out3, 1), w3) + bias_ref[3]) * mask
    out5 = (conv3x3(act(h3, 2), w4) + bias_ref[4]) * mask + out3    # net2(out3) + out3
    o_ref[0] = out5


# --------------------------------------------------------------------------------------
# Host wrapper
# --------------------------------------------------------------------------------------
def _fold_bn(gamma, beta, mean, var):
    s = gamma / jnp.sqrt(var + EPS)
    return s, beta - mean * s


def _taps(w):  # torch conv weight (Cout, Cin, 3, 3) -> (9, Cout, Cin), tap index = ky*3+kx
    co, ci = w.shape[0], w.shape[1]
    return jnp.transpose(w, (2, 3, 0, 1)).reshape(9, co, ci)


@functools.partial(jax.jit, static_argnums=(2,))
def down_forward_pallas(x, p, dilation):
    """Forward pass of the Down block.  x: (N, Cin, H, W) float32 -> (N, Cout, H/2, W/2)."""
    N, Cin, H, W = x.shape
    Cout = p["w1"].shape[0]
    assert H % 2 == 0 and W % 2 == 0, "even spatial size required"
    d = int(dilation)
    Ho, Wo = H // 2, W // 2
    Wrow = Wo + d                       # row pitch: Wo real columns + d zero columns
    SEG = Ho * Wrow
    Hp, Wp = H + 2 * d, W + 2 * d
    F1 = (Hp // 2) * (Wp // 2)
    F1p = F1 + d                        # small zero tail so every tap slice is in-bounds

    # bn1 + ReLU fused (by XLA) with the single layout pass over x: pad + even/odd phase split.
    s1, t1 = _fold_bn(p["bn1_g"], p["bn1_b"], p["bn1_m"], p["bn1_v"])
    a1 = jnp.maximum(x * s1[None, :, None, None] + t1[None, :, None, None], 0.0)
    a1p = jnp.pad(a1, ((0, 0), (0, 0), (d, d), (d, d)))
    a1ph = a1p.reshape(N, Cin, Hp // 2, 2, Wp // 2, 2)
    a1ph = jnp.transpose(a1ph, (0, 3, 5, 1, 2, 4)).reshape(N, 4, Cin, F1)
    a1ph = jnp.pad(a1ph, ((0, 0), (0, 0), (0, 0), (0, d)))          # (N, 4, Cin, F1p)

    # skip-path input: stride-2 subsample of raw x, laid out with the same Wrow pitch.
    xs = x[:, :, ::2, ::2]
    xs = jnp.pad(xs, ((0, 0), (0, 0), (0, 0), (0, Wrow - Wo))).reshape(N, Cin, SEG)

    # weights: one (Cout, Cin) matrix per 3x3 tap
    w1t = _taps(p["w1"])                                            # (9, Cout, Cin)
    w234 = jnp.stack([_taps(p["w2"]), _taps(p["w3"]), _taps(p["w4"])], 0)  # (3, 9, Cout, Cout)
    wsk = p["wsk"][:, :, 0, 0]                                      # (Cout, Cin)

    # folded BN (bn2..bn4) and all conv biases, packed as tiny per-channel columns
    s2, t2 = _fold_bn(p["bn2_g"], p["bn2_b"], p["bn2_m"], p["bn2_v"])
    s3, t3 = _fold_bn(p["bn3_g"], p["bn3_b"], p["bn3_m"], p["bn3_v"])
    s4, t4 = _fold_bn(p["bn4_g"], p["bn4_b"], p["bn4_m"], p["bn4_v"])
    bn_s = jnp.stack([s2, s3, s4], 0)[:, :, None]                   # (3, Cout, 1)
    bn_t = jnp.stack([t2, t3, t4], 0)[:, :, None]
    bias = jnp.stack([p["b1"], p["bsk"], p["b2"], p["b3"], p["b4"]], 0)[:, :, None]  # (5, Cout, 1)

    colmask = (jnp.arange(SEG) % Wrow < Wo).astype(jnp.float32)[None, :]             # (1, SEG)

    flops = 2 * N * SEG * (Cin * Cout * 10 + 27 * Cout * Cout)
    bytes_accessed = 4 * int(a1ph.size + xs.size + w1t.size + w234.size + wsk.size
                             + bn_s.size + bn_t.size + bias.size + colmask.size
                             + N * Cout * SEG)

    kernel = functools.partial(_down_kernel, dil=d, Ho=Ho, Wo=Wo, Wrow=Wrow, Cout=Cout)
    out = pl.pallas_call(
        kernel,
        out_shape=jax.ShapeDtypeStruct((N, Cout, SEG), jnp.float32),
        grid_spec=pltpu.PrefetchScalarGridSpec(
            num_scalar_prefetch=0,
            grid=(N,),
            in_specs=[
                pl.BlockSpec((1, 4, Cin, F1p), lambda n: (n, 0, 0, 0)),
                pl.BlockSpec((1, Cin, SEG), lambda n: (n, 0, 0)),
                pl.BlockSpec((9, Cout, Cin), lambda n: (0, 0, 0)),
                pl.BlockSpec((Cout, Cin), lambda n: (0, 0)),
                pl.BlockSpec((3, 9, Cout, Cout), lambda n: (0, 0, 0, 0)),
                pl.BlockSpec((3, Cout, 1), lambda n: (0, 0, 0)),
                pl.BlockSpec((3, Cout, 1), lambda n: (0, 0, 0)),
                pl.BlockSpec((5, Cout, 1), lambda n: (0, 0, 0)),
                pl.BlockSpec((1, SEG), lambda n: (0, 0)),
            ],
            out_specs=pl.BlockSpec((1, Cout, SEG), lambda n: (n, 0, 0)),
        ),
        compiler_params=pltpu.CompilerParams(dimension_semantics=("parallel",)),
        cost_estimate=pl.CostEstimate(flops=flops, transcendentals=0,
                                      bytes_accessed=bytes_accessed),
    )(a1ph, xs, w1t, wsk, w234, bn_s, bn_t, bias, colmask)

    # drop the d zero columns per row pitch -> NCHW (pure reshape + slice, no transpose)
    return out.reshape(N, Cout, Ho, Wrow)[..., :Wo]


# --------------------------------------------------------------------------------------
# Pure-JAX reference (eval-mode BN) for the correctness check
# --------------------------------------------------------------------------------------
def _conv_ref(x, w, b, stride, pad, dil):
    out = jax.lax.conv_general_dilated(
        x, w, window_strides=(stride, stride),
        padding=((pad, pad), (pad, pad)),
        rhs_dilation=(dil, dil),
        dimension_numbers=("NCHW", "OIHW", "NCHW"))
    return out + b[None, :, None, None]


def down_forward_ref(x, p, dilation):
    d = int(dilation)

    def bnrelu(v, g, b, m, var):
        s, t = _fold_bn(g, b, m, var)
        return jnp.maximum(v * s[None, :, None, None] + t[None, :, None, None], 0.0)

    h = _conv_ref(bnrelu(x, p["bn1_g"], p["bn1_b"], p["bn1_m"], p["bn1_v"]),
                  p["w1"], p["b1"], 2, d, d)
    h = _conv_ref(bnrelu(h, p["bn2_g"], p["bn2_b"], p["bn2_m"], p["bn2_v"]),
                  p["w2"], p["b2"], 1, 1, 1)
    out3 = h + _conv_ref(x, p["wsk"], p["bsk"], 2, 0, 1)
    g2 = _conv_ref(bnrelu(out3, p["bn3_g"], p["bn3_b"], p["bn3_m"], p["bn3_v"]),
                   p["w3"], p["b3"], 1, 1, 1)
    g2 = _conv_ref(bnrelu(g2, p["bn4_g"], p["bn4_b"], p["bn4_m"], p["bn4_v"]),
                   p["w4"], p["b4"], 1, 1, 1)
    return g2 + out3


# --------------------------------------------------------------------------------------
# Parameter construction + test driver
# --------------------------------------------------------------------------------------
def init_down_params(key, cin, cout):
    ks = jax.random.split(key, 14)

    def conv_w(k, co, ci, ksz):
        bound = 1.0 / (ci * ksz * ksz) ** 0.5
        return jax.random.uniform(k, (co, ci, ksz, ksz), jnp.float32, -bound, bound)

    def conv_b(k, co, ci, ksz):
        bound = 1.0 / (ci * ksz * ksz) ** 0.5
        return jax.random.uniform(k, (co,), jnp.float32, -bound, bound)

    p = {}
    p["w1"], p["b1"] = conv_w(ks[0], cout, cin, 3), conv_b(ks[1], cout, cin, 3)
    p["w2"], p["b2"] = conv_w(ks[2], cout, cout, 3), conv_b(ks[3], cout, cout, 3)
    p["w3"], p["b3"] = conv_w(ks[4], cout, cout, 3), conv_b(ks[5], cout, cout, 3)
    p["w4"], p["b4"] = conv_w(ks[6], cout, cout, 3), conv_b(ks[7], cout, cout, 3)
    p["wsk"], p["bsk"] = conv_w(ks[8], cout, cin, 1), conv_b(ks[9], cout, cin, 1)
    for i, (name, c) in enumerate([("bn1", cin), ("bn2", cout), ("bn3", cout), ("bn4", cout)]):
        k1, k2, k3, k4 = jax.random.split(ks[10 + i], 4)
        p[f"{name}_g"] = jax.random.uniform(k1, (c,), jnp.float32, 0.5, 1.5)
        p[f"{name}_b"] = 0.2 * jax.random.normal(k2, (c,), jnp.float32)
        p[f"{name}_m"] = 0.2 * jax.random.normal(k3, (c,), jnp.float32)
        p[f"{name}_v"] = jax.random.uniform(k4, (c,), jnp.float32, 0.5, 1.5)
    return p


if __name__ == "__main__":
    key = jax.random.PRNGKey(0)
    kx, kp = jax.random.split(key)

    N, Cin, Cout, H, W = 2, 4, 8, 16, 16
    x = jax.random.normal(kx, (N, Cin, H, W), jnp.float32)
    params = init_down_params(kp, Cin, Cout)

    for dilation in (1, 2):
        out = jax.block_until_ready(down_forward_pallas(x, params, dilation))
        assert out.shape == (N, Cout, H // 2, W // 2) and out.dtype == jnp.float32
        ref = down_forward_ref(x, params, dilation)
        err = float(jnp.max(jnp.abs(out - ref)))
        scale = max(1.0, float(jnp.max(jnp.abs(ref))))
        if err > 1e-2 * scale:
            raise AssertionError(f"Pallas mismatch vs reference (dilation={dilation}): max|err|={err}")

    print("KERNEL_OK")
</pallas_src>

<mosaic_0001>
module attributes {stable_mosaic.version = 11 : i64} {
  func.func @_down_kernel(%arg0: i32, %arg1: memref<1x4x4x82xf32, #tpu.memory_space<vmem>>, %arg2: memref<1x4x72xf32, #tpu.memory_space<vmem>>, %arg3: memref<9x8x4xf32, #tpu.memory_space<vmem>>, %arg4: memref<8x4xf32, #tpu.memory_space<vmem>>, %arg5: memref<3x9x8x8xf32, #tpu.memory_space<vmem>>, %arg6: memref<3x8x1xf32, #tpu.memory_space<vmem>>, %arg7: memref<3x8x1xf32, #tpu.memory_space<vmem>>, %arg8: memref<5x8x1xf32, #tpu.memory_space<vmem>>, %arg9: memref<1x72xf32, #tpu.memory_space<vmem>>, %arg10: memref<1x8x72xf32, #tpu.memory_space<vmem>>) attributes {dimension_semantics = [#tpu.dimension_semantics<parallel>], iteration_bounds = array<i64: 2>, scalar_prefetch = 0 : i64, scratch_operands = 0 : i64, tpu.core_type = #tpu.core_type<tc>, window_params = [{transform_indices = @transform_0, window_bounds = array<i64: 1, 4, 4, 82>}, {transform_indices = @transform_1, window_bounds = array<i64: 1, 4, 72>}, {pipeline_mode = #tpu.pipeline_mode<synchronous>, transform_indices = @transform_2, window_bounds = array<i64: 9, 8, 4>}, {pipeline_mode = #tpu.pipeline_mode<synchronous>, transform_indices = @transform_3, window_bounds = array<i64: 8, 4>}, {pipeline_mode = #tpu.pipeline_mode<synchronous>, transform_indices = @transform_4, window_bounds = array<i64: 3, 9, 8, 8>}, {pipeline_mode = #tpu.pipeline_mode<synchronous>, transform_indices = @transform_5, window_bounds = array<i64: 3, 8, 1>}, {pipeline_mode = #tpu.pipeline_mode<synchronous>, transform_indices = @transform_6, window_bounds = array<i64: 3, 8, 1>}, {pipeline_mode = #tpu.pipeline_mode<synchronous>, transform_indices = @transform_7, window_bounds = array<i64: 5, 8, 1>}, {pipeline_mode = #tpu.pipeline_mode<synchronous>, transform_indices = @transform_8, window_bounds = array<i64: 1, 72>}, {transform_indices = @transform_9, window_bounds = array<i64: 1, 8, 72>}]} {
    %c0 = arith.constant 0 : index
    %c0_0 = arith.constant 0 : index
    %0 = vector.load %arg9[%c0, %c0_0] : memref<1x72xf32, #tpu.memory_space<vmem>>, vector<1x72xf32>
    %cst = arith.constant 0.000000e+00 : f32
    %1 = vector.broadcast %cst : f32 to vector<8x72xf32>
    %c0_1 = arith.constant 0 : index
    %c0_2 = arith.constant 0 : index
    %c0_3 = arith.constant 0 : index
    %c0_4 = arith.constant 0 : index
    %2 = vector.load %arg1[%c0_1, %c0_2, %c0_3, %c0_4] : memref<1x4x4x82xf32, #tpu.memory_space<vmem>>, vector<1x1x4x82xf32>
    %3 = vector.shape_cast %2 : vector<1x1x4x82xf32> to vector<4x82xf32>
    %4 = vector.extract_strided_slice %3 {offsets = [0, 0], sizes = [4, 72], strides = [1, 1]} : vector<4x82xf32> to vector<4x72xf32>
    %c0_5 = arith.constant 0 : index
    %c0_6 = arith.constant 0 : index
    %c0_7 = arith.constant 0 : index
    %5 = vector.load %arg3[%c0_5, %c0_6, %c0_7] : memref<9x8x4xf32, #tpu.memory_space<vmem>>, vector<1x8x4xf32>
    %6 = vector.shape_cast %5 : vector<1x8x4xf32> to vector<8x4xf32>
    %cst_8 = arith.constant dense<0.000000e+00> : vector<8x72xf32>
    %7 = tpu.matmul %6, %4, %cst_8 {dimension_numbers = #tpu.dot_dimension_numbers<[1], [0], [0], [1], [0, 0, 1, 1], [], []>} : vector<8x4xf32>, vector<4x72xf32>, vector<8x72xf32> -> vector<8x72xf32>
    %8 = arith.addf %1, %7 : vector<8x72xf32>
    %c0_9 = arith.constant 0 : index
    %c1 = arith.constant 1 : index
    %c0_10 = arith.constant 0 : index
    %c0_11 = arith.constant 0 : index
    %9 = vector.load %arg1[%c0_9, %c1, %c0_10, %c0_11] : memref<1x4x4x82xf32, #tpu.memory_space<vmem>>, vector<1x1x4x82xf32>
    %10 = vector.shape_cast %9 : vector<1x1x4x82xf32> to vector<4x82xf32>
    %11 = vector.extract_strided_slice %10 {offsets = [0, 0], sizes = [4, 72], strides = [1, 1]} : vector<4x82xf32> to vector<4x72xf32>
    %c1_12 = arith.constant 1 : index
    %c0_13 = arith.constant 0 : index
    %c0_14 = arith.constant 0 : index
    %12 = vector.load %arg3[%c1_12, %c0_13, %c0_14] : memref<9x8x4xf32, #tpu.memory_space<vmem>>, vector<1x8x4xf32>
    %13 = vector.shape_cast %12 : vector<1x8x4xf32> to vector<8x4xf32>
    %cst_15 = arith.constant dense<0.000000e+00> : vector<8x72xf32>
    %14 = tpu.matmul %13, %11, %cst_15 {dimension_numbers = #tpu.dot_dimension_numbers<[1], [0], [0], [1], [0, 0, 1, 1], [], []>} : vector<8x4xf32>, vector<4x72xf32>, vector<8x72xf32> -> vector<8x72xf32>
    %15 = arith.addf %8, %14 : vector<8x72xf32>
    %16 = vector.extract_strided_slice %3 {offsets = [0, 1], sizes = [4, 72], strides = [1, 1]} : vector<4x82xf32> to vector<4x72xf32>
    %c2 = arith.constant 2 : index
    %c0_16 = arith.constant 0 : index
    %c0_17 = arith.constant 0 : index
    %17 = vector.load %arg3[%c2, %c0_16, %c0_17] : memref<9x8x4xf32, #tpu.memory_space<vmem>>, vector<1x8x4xf32>
    %18 = vector.shape_cast %17 : vector<1x8x4xf32> to vector<8x4xf32>
    %cst_18 = arith.constant dense<0.000000e+00> : vector<8x72xf32>
    %19 = tpu.matmul %18, %16, %cst_18 {dimension_numbers = #tpu.dot_dimension_numbers<[1], [0], [0], [1], [0, 0, 1, 1], [], []>} : vector<8x4xf32>, vector<4x72xf32>, vector<8x72xf32> -> vector<8x72xf32>
    %20 = arith.addf %15, %19 : vector<8x72xf32>
    %c0_19 = arith.constant 0 : index
    %c2_20 = arith.constant 2 : index
    %c0_21 = arith.constant 0 : index
    %c0_22 = arith.constant 0 : index
    %21 = vector.load %arg1[%c0_19, %c2_20, %c0_21, %c0_22] : memref<1x4x4x82xf32, #tpu.memory_space<vmem>>, vector<1x1x4x82xf32>
    %22 = vector.shape_cast %21 : vector<1x1x4x82xf32> to vector<4x82xf32>
    %23 = vector.extract_strided_slice %22 {offsets = [0, 0], sizes = [4, 72], strides = [1, 1]} : vector<4x82xf32> to vector<4x72xf32>
    %c3 = arith.constant 3 : index
    %c0_23 = arith.constant 0 : index
    %c0_24 = arith.constant 0 : index
    %24 = vector.load %arg3[%c3, %c0_23, %c0_24] : memref<9x8x4xf32, #tpu.memory_space<vmem>>, vector<1x8x4xf32>
    %25 = vector.shape_cast %24 : vector<1x8x4xf32> to vector<8x4xf32>
    %cst_25 = arith.constant dense<0.000000e+00> : vector<8x72xf32>
    %26 = tpu.matmul %25, %23, %cst_25 {dimension_numbers = #tpu.dot_dimension_numbers<[1], [0], [0], [1], [0, 0, 1, 1], [], []>} : vector<8x4xf32>, vector<4x72xf32>, vector<8x72xf32> -> vector<8x72xf32>
    %27 = arith.addf %20, %26 : vector<8x72xf32>
    %c0_26 = arith.constant 0 : index
    %c3_27 = arith.constant 3 : index
    %c0_28 = arith.constant 0 : index
    %c0_29 = arith.constant 0 : index
    %28 = vector.load %arg1[%c0_26, %c3_27, %c0_28, %c0_29] : memref<1x4x4x82xf32, #tpu.memory_space<vmem>>, vector<1x1x4x82xf32>
    %29 = vector.shape_cast %28 : vector<1x1x4x82xf32> to vector<4x82xf32>
    %30 = vector.extract_strided_slice %29 {offsets = [0, 0], sizes = [4, 72], strides = [1, 1]} : vector<4x82xf32> to vector<4x72xf32>
    %c4 = arith.constant 4 : index
    %c0_30 = arith.constant 0 : index
    %c0_31 = arith.constant 0 : index
    %31 = vector.load %arg3[%c4, %c0_30, %c0_31] : memref<9x8x4xf32, #tpu.memory_space<vmem>>, vector<1x8x4xf32>
    %32 = vector.shape_cast %31 : vector<1x8x4xf32> to vector<8x4xf32>
    %cst_32 = arith.constant dense<0.000000e+00> : vector<8x72xf32>
    %33 = tpu.matmul %32, %30, %cst_32 {dimension_numbers = #tpu.dot_dimension_numbers<[1], [0], [0], [1], [0, 0, 1, 1], [], []>} : vector<8x4xf32>, vector<4x72xf32>, vector<8x72xf32> -> vector<8x72xf32>
    %34 = arith.addf %27, %33 : vector<8x72xf32>
    %35 = vector.extract_strided_slice %22 {offsets = [0, 1], sizes = [4, 72], strides = [1, 1]} : vector<4x82xf32> to vector<4x72xf32>
    %c5 = arith.constant 5 : index
    %c0_33 = arith.constant 0 : index
    %c0_34 = arith.constant 0 : index
    %36 = vector.load %arg3[%c5, %c0_33, %c0_34] : memref<9x8x4xf32, #tpu.memory_space<vmem>>, vector<1x8x4xf32>
    %37 = vector.shape_cast %36 : vector<1x8x4xf32> to vector<8x4xf32>
    %cst_35 = arith.constant dense<0.000000e+00> : vector<8x72xf32>
    %38 = tpu.matmul %37, %35, %cst_35 {dimension_numbers = #tpu.dot_dimension_numbers<[1], [0], [0], [1], [0, 0, 1, 1], [], []>} : vector<8x4xf32>, vector<4x72xf32>, vector<8x72xf32> -> vector<8x72xf32>
    %39 = arith.addf %34, %38 : vector<8x72xf32>
    %40 = vector.extract_strided_slice %3 {offsets = [0, 9], sizes = [4, 72], strides = [1, 1]} : vector<4x82xf32> to vector<4x72xf32>
    %c6 = arith.constant 6 : index
    %c0_36 = arith.constant 0 : index
    %c0_37 = arith.constant 0 : index
    %41 = vector.load %arg3[%c6, %c0_36, %c0_37] : memref<9x8x4xf32, #tpu.memory_space<vmem>>, vector<1x8x4xf32>
    %42 = vector.shape_cast %41 : vector<1x8x4xf32> to vector<8x4xf32>
    %cst_38 = arith.constant dense<0.000000e+00> : vector<8x72xf32>
    %43 = tpu.matmul %42, %40, %cst_38 {dimension_numbers = #tpu.dot_dimension_numbers<[1], [0], [0], [1], [0, 0, 1, 1], [], []>} : vector<8x4xf32>, vector<4x72xf32>, vector<8x72xf32> -> vector<8x72xf32>
    %44 = arith.addf %39, %43 : vector<8x72xf32>
    %45 = vector.extract_strided_slice %10 {offsets = [0, 9], sizes = [4, 72], strides = [1, 1]} : vector<4x82xf32> to vector<4x72xf32>
    %c7 = arith.constant 7 : index
    %c0_39 = arith.constant 0 : index
    %c0_40 = arith.constant 0 : index
    %46 = vector.load %arg3[%c7, %c0_39, %c0_40] : memref<9x8x4xf32, #tpu.memory_space<vmem>>, vector<1x8x4xf32>
    %47 = vector.shape_cast %46 : vector<1x8x4xf32> to vector<8x4xf32>
    %cst_41 = arith.constant dense<0.000000e+00> : vector<8x72xf32>
    %48 = tpu.matmul %47, %45, %cst_41 {dimension_numbers = #tpu.dot_dimension_numbers<[1], [0], [0], [1], [0, 0, 1, 1], [], []>} : vector<8x4xf32>, vector<4x72xf32>, vector<8x72xf32> -> vector<8x72xf32>
    %49 = arith.addf %44, %48 : vector<8x72xf32>
    %50 = vector.extract_strided_slice %3 {offsets = [0, 10], sizes = [4, 72], strides = [1, 1]} : vector<4x82xf32> to vector<4x72xf32>
    %c8 = arith.constant 8 : index
    %c0_42 = arith.constant 0 : index
    %c0_43 = arith.constant 0 : index
    %51 = vector.load %arg3[%c8, %c0_42, %c0_43] : memref<9x8x4xf32, #tpu.memory_space<vmem>>, vector<1x8x4xf32>
    %52 = vector.shape_cast %51 : vector<1x8x4xf32> to vector<8x4xf32>
    %cst_44 = arith.constant dense<0.000000e+00> : vector<8x72xf32>
    %53 = tpu.matmul %52, %50, %cst_44 {dimension_numbers = #tpu.dot_dimension_numbers<[1], [0], [0], [1], [0, 0, 1, 1], [], []>} : vector<8x4xf32>, vector<4x72xf32>, vector<8x72xf32> -> vector<8x72xf32>
    %54 = arith.addf %49, %53 : vector<8x72xf32>
    %c0_45 = arith.constant 0 : index
    %c0_46 = arith.constant 0 : index
    %c0_47 = arith.constant 0 : index
    %55 = vector.load %arg8[%c0_45, %c0_46, %c0_47] : memref<5x8x1xf32, #tpu.memory_space<vmem>>, vector<1x8x1xf32>
    %56 = vector.shape_cast %55 : vector<1x8x1xf32> to vector<8x1xf32>
    %57 = vector.broadcast %56 : vector<8x1xf32> to vector<8x72xf32>
    %58 = arith.addf %54, %57 : vector<8x72xf32>
    %59 = vector.broadcast %0 : vector<1x72xf32> to vector<8x72xf32>
    %60 = arith.mulf %58, %59 : vector<8x72xf32>
    %c0_48 = arith.constant 0 : index
    %c0_49 = arith.constant 0 : index
    %61 = vector.load %arg4[%c0_48, %c0_49] : memref<8x4xf32, #tpu.memory_space<vmem>>, vector<8x4xf32>
    %c0_50 = arith.constant 0 : index
    %c0_51 = arith.constant 0 : index
    %c0_52 = arith.constant 0 : index
    %62 = vector.load %arg2[%c0_50, %c0_51, %c0_52] : memref<1x4x72xf32, #tpu.memory_space<vmem>>, vector<1x4x72xf32>
    %63 = vector.shape_cast %62 : vector<1x4x72xf32> to vector<4x72xf32>
    %cst_53 = arith.constant dense<0.000000e+00> : vector<8x72xf32>
    %64 = tpu.matmul %61, %63, %cst_53 {dimension_numbers = #tpu.dot_dimension_numbers<[1], [0], [0], [1], [0, 0, 1, 1], [], []>} : vector<8x4xf32>, vector<4x72xf32>, vector<8x72xf32> -> vector<8x72xf32>
    %c1_54 = arith.constant 1 : index
    %c0_55 = arith.constant 0 : index
    %c0_56 = arith.constant 0 : index
    %65 = vector.load %arg8[%c1_54, %c0_55, %c0_56] : memref<5x8x1xf32, #tpu.memory_space<vmem>>, vector<1x8x1xf32>
    %66 = vector.shape_cast %65 : vector<1x8x1xf32> to vector<8x1xf32>
    %67 = vector.broadcast %66 : vector<8x1xf32> to vector<8x72xf32>
    %68 = arith.addf %64, %67 : vector<8x72xf32>
    %69 = vector.broadcast %0 : vector<1x72xf32> to vector<8x72xf32>
    %70 = arith.mulf %68, %69 : vector<8x72xf32>
    %c0_57 = arith.constant 0 : index
    %c0_58 = arith.constant 0 : index
    %c0_59 = arith.constant 0 : index
    %c0_60 = arith.constant 0 : index
    %71 = vector.load %arg5[%c0_57, %c0_58, %c0_59, %c0_60] : memref<3x9x8x8xf32, #tpu.memory_space<vmem>>, vector<1x9x8x8xf32>
    %72 = vector.shape_cast %71 : vector<1x9x8x8xf32> to vector<9x8x8xf32>
    %c1_61 = arith.constant 1 : index
    %c0_62 = arith.constant 0 : index
    %c0_63 = arith.constant 0 : index
    %c0_64 = arith.constant 0 : index
    %73 = vector.load %arg5[%c1_61, %c0_62, %c0_63, %c0_64] : memref<3x9x8x8xf32, #tpu.memory_space<vmem>>, vector<1x9x8x8xf32>
    %74 = vector.shape_cast %73 : vector<1x9x8x8xf32> to vector<9x8x8xf32>
    %c2_65 = arith.constant 2 : index
    %c0_66 = arith.constant 0 : index
    %c0_67 = arith.constant 0 : index
    %c0_68 = arith.constant 0 : index
    %75 = vector.load %arg5[%c2_65, %c0_66, %c0_67, %c0_68] : memref<3x9x8x8xf32, #tpu.memory_space<vmem>>, vector<1x9x8x8xf32>
    %76 = vector.shape_cast %75 : vector<1x9x8x8xf32> to vector<9x8x8xf32>
    %c0_69 = arith.constant 0 : index
    %c0_70 = arith.constant 0 : index
    %c0_71 = arith.constant 0 : index
    %77 = vector.load %arg6[%c0_69, %c0_70, %c0_71] : memref<3x8x1xf32, #tpu.memory_space<vmem>>, vector<1x8x1xf32>
    %78 = vector.shape_cast %77 : vector<1x8x1xf32> to vector<8x1xf32>
    %79 = vector.broadcast %78 : vector<8x1xf32> to vector<8x72xf32>
    %80 = arith.mulf %60, %79 : vector<8x72xf32>
    %c0_72 = arith.constant 0 : index
    %c0_73 = arith.constant 0 : index
    %c0_74 = arith.constant 0 : index
    %81 = vector.load %arg7[%c0_72, %c0_73, %c0_74] : memref<3x8x1xf32, #tpu.memory_space<vmem>>, vector<1x8x1xf32>
    %82 = vector.shape_cast %81 : vector<1x8x1xf32> to vector<8x1xf32>
    %83 = vector.broadcast %82 : vector<8x1xf32> to vector<8x72xf32>
    %84 = arith.addf %80, %83 : vector<8x72xf32>
    %cst_75 = arith.constant 0.000000e+00 : f32
    %85 = vector.broadcast %cst_75 : f32 to vector<8x72xf32>
    %86 = arith.maximumf %84, %85 : vector<8x72xf32>
    %87 = vector.broadcast %0 : vector<1x72xf32> to vector<8x72xf32>
    %88 = arith.mulf %86, %87 : vector<8x72xf32>
    %cst_76 = arith.constant 0.000000e+00 : f32
    %89 = vector.broadcast %cst_76 : f32 to vector<8x10xf32>
    %90 = tpu.concatenate %89, %88, %89 in 1 : vector<8x10xf32>, vector<8x72xf32>, vector<8x10xf32> -> vector<8x92xf32>
    %cst_77 = arith.constant 0.000000e+00 : f32
    %91 = vector.broadcast %cst_77 : f32 to vector<8x72xf32>
    %92 = vector.extract_strided_slice %72 {offsets = [0, 0, 0], sizes = [1, 8, 8], strides = [1, 1, 1]} : vector<9x8x8xf32> to vector<1x8x8xf32>
    %93 = vector.shape_cast %92 : vector<1x8x8xf32> to vector<8x8xf32>
    %94 = vector.extract_strided_slice %90 {offsets = [0, 0], sizes = [8, 72], strides = [1, 1]} : vector<8x92xf32> to vector<8x72xf32>
    %cst_78 = arith.constant dense<0.000000e+00> : vector<8x72xf32>
    %95 = tpu.matmul %93, %94, %cst_78 {dimension_numbers = #tpu.dot_dimension_numbers<[1], [0], [0], [1], [0, 0, 1, 1], [], []>} : vector<8x8xf32>, vector<8x72xf32>, vector<8x72xf32> -> vector<8x72xf32>
    %96 = arith.addf %91, %95 : vector<8x72xf32>
    %97 = vector.extract_strided_slice %72 {offsets = [1, 0, 0], sizes = [1, 8, 8], strides = [1, 1, 1]} : vector<9x8x8xf32> to vector<1x8x8xf32>
    %98 = vector.shape_cast %97 : vector<1x8x8xf32> to vector<8x8xf32>
    %99 = vector.extract_strided_slice %90 {offsets = [0, 1], sizes = [8, 72], strides = [1, 1]} : vector<8x92xf32> to vector<8x72xf32>
    %cst_79 = arith.constant dense<0.000000e+00> : vector<8x72xf32>
    %100 = tpu.matmul %98, %99, %cst_79 {dimension_numbers = #tpu.dot_dimension_numbers<[1], [0], [0], [1], [0, 0, 1, 1], [], []>} : vector<8x8xf32>, vector<8x72xf32>, vector<8x72xf32> -> vector<8x72xf32>
    %101 = arith.addf %96, %100 : vector<8x72xf32>
    %102 = vector.extract_strided_slice %72 {offsets = [2, 0, 0], sizes = [1, 8, 8], strides = [1, 1, 1]} : vector<9x8x8xf32> to vector<1x8x8xf32>
    %103 = vector.shape_cast %102 : vector<1x8x8xf32> to vector<8x8xf32>
    %104 = vector.extract_strided_slice %90 {offsets = [0, 2], sizes = [8, 72], strides = [1, 1]} : vector<8x92xf32> to vector<8x72xf32>
    %cst_80 = arith.constant dense<0.000000e+00> : vector<8x72xf32>
    %105 = tpu.matmul %103, %104, %cst_80 {dimension_numbers = #tpu.dot_dimension_numbers<[1], [0], [0], [1], [0, 0, 1, 1], [], []>} : vector<8x8xf32>, vector<8x72xf32>, vector<8x72xf32> -> vector<8x72xf32>
    %106 = arith.addf %101, %105 : vector<8x72xf32>
    %107 = vector.extract_strided_slice %72 {offsets = [3, 0, 0], sizes = [1, 8, 8], strides = [1, 1, 1]} : vector<9x8x8xf32> to vector<1x8x8xf32>
    %108 = vector.shape_cast %107 : vector<1x8x8xf32> to vector<8x8xf32>
    %109 = vector.extract_strided_slice %90 {offsets = [0, 9], sizes = [8, 72], strides = [1, 1]} : vector<8x92xf32> to vector<8x72xf32>
    %cst_81 = arith.constant dense<0.000000e+00> : vector<8x72xf32>
    %110 = tpu.matmul %108, %109, %cst_81 {dimension_numbers = #tpu.dot_dimension_numbers<[1], [0], [0], [1], [0, 0, 1, 1], [], []>} : vector<8x8xf32>, vector<8x72xf32>, vector<8x72xf32> -> vector<8x72xf32>
    %111 = arith.addf %106, %110 : vector<8x72xf32>
    %112 = vector.extract_strided_slice %72 {offsets = [4, 0, 0], sizes = [1, 8, 8], strides = [1, 1, 1]} : vector<9x8x8xf32> to vector<1x8x8xf32>
    %113 = vector.shape_cast %112 : vector<1x8x8xf32> to vector<8x8xf32>
    %114 = vector.extract_strided_slice %90 {offsets = [0, 10], sizes = [8, 72], strides = [1, 1]} : vector<8x92xf32> to vector<8x72xf32>
    %cst_82 = arith.constant dense<0.000000e+00> : vector<8x72xf32>
    %115 = tpu.matmul %113, %114, %cst_82 {dimension_numbers = #tpu.dot_dimension_numbers<[1], [0], [0], [1], [0, 0, 1, 1], [], []>} : vector<8x8xf32>, vector<8x72xf32>, vector<8x72xf32> -> vector<8x72xf32>
    %116 = arith.addf %111, %115 : vector<8x72xf32>
    %117 = vector.extract_strided_slice %72 {offsets = [5, 0, 0], sizes = [1, 8, 8], strides = [1, 1, 1]} : vector<9x8x8xf32> to vector<1x8x8xf32>
    %118 = vector.shape_cast %117 : vector<1x8x8xf32> to vector<8x8xf32>
    %119 = vector.extract_strided_slice %90 {offsets = [0, 11], sizes = [8, 72], strides = [1, 1]} : vector<8x92xf32> to vector<8x72xf32>
    %cst_83 = arith.constant dense<0.000000e+00> : vector<8x72xf32>
    %120 = tpu.matmul %118, %119, %cst_83 {dimension_numbers = #tpu.dot_dimension_numbers<[1], [0], [0], [1], [0, 0, 1, 1], [], []>} : vector<8x8xf32>, vector<8x72xf32>, vector<8x72xf32> -> vector<8x72xf32>
    %121 = arith.addf %116, %120 : vector<8x72xf32>
    %122 = vector.extract_strided_slice %72 {offsets = [6, 0, 0], sizes = [1, 8, 8], strides = [1, 1, 1]} : vector<9x8x8xf32> to vector<1x8x8xf32>
    %123 = vector.shape_cast %122 : vector<1x8x8xf32> to vector<8x8xf32>
    %124 = vector.extract_strided_slice %90 {offsets = [0, 18], sizes = [8, 72], strides = [1, 1]} : vector<8x92xf32> to vector<8x72xf32>
    %cst_84 = arith.constant dense<0.000000e+00> : vector<8x72xf32>
    %125 = tpu.matmul %123, %124, %cst_84 {dimension_numbers = #tpu.dot_dimension_numbers<[1], [0], [0], [1], [0, 0, 1, 1], [], []>} : vector<8x8xf32>, vector<8x72xf32>, vector<8x72xf32> -> vector<8x72xf32>
    %126 = arith.addf %121, %125 : vector<8x72xf32>
    %127 = vector.extract_strided_slice %72 {offsets = [7, 0, 0], sizes = [1, 8, 8], strides = [1, 1, 1]} : vector<9x8x8xf32> to vector<1x8x8xf32>
    %128 = vector.shape_cast %127 : vector<1x8x8xf32> to vector<8x8xf32>
    %129 = vector.extract_strided_slice %90 {offsets = [0, 19], sizes = [8, 72], strides = [1, 1]} : vector<8x92xf32> to vector<8x72xf32>
    %cst_85 = arith.constant dense<0.000000e+00> : vector<8x72xf32>
    %130 = tpu.matmul %128, %129, %cst_85 {dimension_numbers = #tpu.dot_dimension_numbers<[1], [0], [0], [1], [0, 0, 1, 1], [], []>} : vector<8x8xf32>, vector<8x72xf32>, vector<8x72xf32> -> vector<8x72xf32>
    %131 = arith.addf %126, %130 : vector<8x72xf32>
    %132 = vector.extract_strided_slice %72 {offsets = [8, 0, 0], sizes = [1, 8, 8], strides = [1, 1, 1]} : vector<9x8x8xf32> to vector<1x8x8xf32>
    %133 = vector.shape_cast %132 : vector<1x8x8xf32> to vector<8x8xf32>
    %134 = vector.extract_strided_slice %90 {offsets = [0, 20], sizes = [8, 72], strides = [1, 1]} : vector<8x92xf32> to vector<8x72xf32>
    %cst_86 = arith.constant dense<0.000000e+00> : vector<8x72xf32>
    %135 = tpu.matmul %133, %134, %cst_86 {dimension_numbers = #tpu.dot_dimension_numbers<[1], [0], [0], [1], [0, 0, 1, 1], [], []>} : vector<8x8xf32>, vector<8x72xf32>, vector<8x72xf32> -> vector<8x72xf32>
    %136 = arith.addf %131, %135 : vector<8x72xf32>
    %c2_87 = arith.constant 2 : index
    %c0_88 = arith.constant 0 : index
    %c0_89 = arith.constant 0 : index
    %137 = vector.load %arg8[%c2_87, %c0_88, %c0_89] : memref<5x8x1xf32, #tpu.memory_space<vmem>>, vector<1x8x1xf32>
    %138 = vector.shape_cast %137 : vector<1x8x1xf32> to vector<8x1xf32>
    %139 = vector.broadcast %138 : vector<8x1xf32> to vector<8x72xf32>
    %140 = arith.addf %136, %139 : vector<8x72xf32>
    %141 = vector.broadcast %0 : vector<1x72xf32> to vector<8x72xf32>
    %142 = arith.mulf %140, %141 : vector<8x72xf32>
    %143 = arith.addf %142, %70 : vector<8x72xf32>
    %c1_90 = arith.constant 1 : index
    %c0_91 = arith.constant 0 : index
    %c0_92 = arith.constant 0 : index
    %144 = vector.load %arg6[%c1_90, %c0_91, %c0_92] : memref<3x8x1xf32, #tpu.memory_space<vmem>>, vector<1x8x1xf32>
    %145 = vector.shape_cast %144 : vector<1x8x1xf32> to vector<8x1xf32>
    %146 = vector.broadcast %145 : vector<8x1xf32> to vector<8x72xf32>
    %147 = arith.mulf %143, %146 : vector<8x72xf32>
    %c1_93 = arith.constant 1 : index
    %c0_94 = arith.constant 0 : index
    %c0_95 = arith.constant 0 : index
    %148 = vector.load %arg7[%c1_93, %c0_94, %c0_95] : memref<3x8x1xf32, #tpu.memory_space<vmem>>, vector<1x8x1xf32>
    %149 = vector.shape_cast %148 : vector<1x8x1xf32> to vector<8x1xf32>
    %150 = vector.broadcast %149 : vector<8x1xf32> to vector<8x72xf32>
    %151 = arith.addf %147, %150 : vector<8x72xf32>
    %cst_96 = arith.constant 0.000000e+00 : f32
    %152 = vector.broadcast %cst_96 : f32 to vector<8x72xf32>
    %153 = arith.maximumf %151, %152 : vector<8x72xf32>
    %154 = vector.broadcast %0 : vector<1x72xf32> to vector<8x72xf32>
    %155 = arith.mulf %153, %154 : vector<8x72xf32>
    %cst_97 = arith.constant 0.000000e+00 : f32
    %156 = vector.broadcast %cst_97 : f32 to vector<8x10xf32>
    %157 = tpu.concatenate %156, %155, %156 in 1 : vector<8x10xf32>, vector<8x72xf32>, vector<8x10xf32> -> vector<8x92xf32>
    %cst_98 = arith.constant 0.000000e+00 : f32
    %158 = vector.broadcast %cst_98 : f32 to vector<8x72xf32>
    %159 = vector.extract_strided_slice %74 {offsets = [0, 0, 0], sizes = [1, 8, 8], strides = [1, 1, 1]} : vector<9x8x8xf32> to vector<1x8x8xf32>
    %160 = vector.shape_cast %159 : vector<1x8x8xf32> to vector<8x8xf32>
    %161 = vector.extract_strided_slice %157 {offsets = [0, 0], sizes = [8, 72], strides = [1, 1]} : vector<8x92xf32> to vector<8x72xf32>
    %cst_99 = arith.constant dense<0.000000e+00> : vector<8x72xf32>
    %162 = tpu.matmul %160, %161, %cst_99 {dimension_numbers = #tpu.dot_dimension_numbers<[1], [0], [0], [1], [0, 0, 1, 1], [], []>} : vector<8x8xf32>, vector<8x72xf32>, vector<8x72xf32> -> vector<8x72xf32>
    %163 = arith.addf %158, %162 : vector<8x72xf32>
    %164 = vector.extract_strided_slice %74 {offsets = [1, 0, 0], sizes = [1, 8, 8], strides = [1, 1, 1]} : vector<9x8x8xf32> to vector<1x8x8xf32>
    %165 = vector.shape_cast %164 : vector<1x8x8xf32> to vector<8x8xf32>
    %166 = vector.extract_strided_slice %157 {offsets = [0, 1], sizes = [8, 72], strides = [1, 1]} : vector<8x92xf32> to vector<8x72xf32>
    %cst_100 = arith.constant dense<0.000000e+00> : vector<8x72xf32>
    %167 = tpu.matmul %165, %166, %cst_100 {dimension_numbers = #tpu.dot_dimension_numbers<[1], [0], [0], [1], [0, 0, 1, 1], [], []>} : vector<8x8xf32>, vector<8x72xf32>, vector<8x72xf32> -> vector<8x72xf32>
    %168 = arith.addf %163, %167 : vector<8x72xf32>
    %169 = vector.extract_strided_slice %74 {offsets = [2, 0, 0], sizes = [1, 8, 8], strides = [1, 1, 1]} : vector<9x8x8xf32> to vector<1x8x8xf32>
    %170 = vector.shape_cast %169 : vector<1x8x8xf32> to vector<8x8xf32>
    %171 = vector.extract_strided_slice %157 {offsets = [0, 2], sizes = [8, 72], strides = [1, 1]} : vector<8x92xf32> to vector<8x72xf32>
    %cst_101 = arith.constant dense<0.000000e+00> : vector<8x72xf32>
    %172 = tpu.matmul %170, %171, %cst_101 {dimension_numbers = #tpu.dot_dimension_numbers<[1], [0], [0], [1], [0, 0, 1, 1], [], []>} : vector<8x8xf32>, vector<8x72xf32>, vector<8x72xf32> -> vector<8x72xf32>
    %173 = arith.addf %168, %172 : vector<8x72xf32>
    %174 = vector.extract_strided_slice %74 {offsets = [3, 0, 0], sizes = [1, 8, 8], strides = [1, 1, 1]} : vector<9x8x8xf32> to vector<1x8x8xf32>
    %175 = vector.shape_cast %174 : vector<1x8x8xf32> to vector<8x8xf32>
    %176 = vector.extract_strided_slice %157 {offsets = [0, 9], sizes = [8, 72], strides = [1, 1]} : vector<8x92xf32> to vector<8x72xf32>
    %cst_102 = arith.constant dense<0.000000e+00> : vector<8x72xf32>
    %177 = tpu.matmul %175, %176, %cst_102 {dimension_numbers = #tpu.dot_dimension_numbers<[1], [0], [0], [1], [0, 0, 1, 1], [], []>} : vector<8x8xf32>, vector<8x72xf32>, vector<8x72xf32> -> vector<8x72xf32>
    %178 = arith.addf %173, %177 : vector<8x72xf32>
    %179 = vector.extract_strided_slice %74 {offsets = [4, 0, 0], sizes = [1, 8, 8], strides = [1, 1, 1]} : vector<9x8x8xf32> to vector<1x8x8xf32>
    %180 = vector.shape_cast %179 : vector<1x8x8xf32> to vector<8x8xf32>
    %181 = vector.extract_strided_slice %157 {offsets = [0, 10], sizes = [8, 72], strides = [1, 1]} : vector<8x92xf32> to vector<8x72xf32>
    %cst_103 = arith.constant dense<0.000000e+00> : vector<8x72xf32>
    %182 = tpu.matmul %180, %181, %cst_103 {dimension_numbers = #tpu.dot_dimension_numbers<[1], [0], [0], [1], [0, 0, 1, 1], [], []>} : vector<8x8xf32>, vector<8x72xf32>, vector<8x72xf32> -> vector<8x72xf32>
    %183 = arith.addf %178, %182 : vector<8x72xf32>
    %184 = vector.extract_strided_slice %74 {offsets = [5, 0, 0], sizes = [1, 8, 8], strides = [1, 1, 1]} : vector<9x8x8xf32> to vector<1x8x8xf32>
    %185 = vector.shape_cast %184 : vector<1x8x8xf32> to vector<8x8xf32>
    %186 = vector.extract_strided_slice %157 {offsets = [0, 11], sizes = [8, 72], strides = [1, 1]} : vector<8x92xf32> to vector<8x72xf32>
    %cst_104 = arith.constant dense<0.000000e+00> : vector<8x72xf32>
    %187 = tpu.matmul %185, %186, %cst_104 {dimension_numbers = #tpu.dot_dimension_numbers<[1], [0], [0], [1], [0, 0, 1, 1], [], []>} : vector<8x8xf32>, vector<8x72xf32>, vector<8x72xf32> -> vector<8x72xf32>
    %188 = arith.addf %183, %187 : vector<8x72xf32>
    %189 = vector.extract_strided_slice %74 {offsets = [6, 0, 0], sizes = [1, 8, 8], strides = [1, 1, 1]} : vector<9x8x8xf32> to vector<1x8x8xf32>
    %190 = vector.shape_cast %189 : vector<1x8x8xf32> to vector<8x8xf32>
    %191 = vector.extract_strided_slice %157 {offsets = [0, 18], sizes = [8, 72], strides = [1, 1]} : vector<8x92xf32> to vector<8x72xf32>
    %cst_105 = arith.constant dense<0.000000e+00> : vector<8x72xf32>
    %192 = tpu.matmul %190, %191, %cst_105 {dimension_numbers = #tpu.dot_dimension_numbers<[1], [0], [0], [1], [0, 0, 1, 1], [], []>} : vector<8x8xf32>, vector<8x72xf32>, vector<8x72xf32> -> vector<8x72xf32>
    %193 = arith.addf %188, %192 : vector<8x72xf32>
    %194 = vector.extract_strided_slice %74 {offsets = [7, 0, 0], sizes = [1, 8, 8], strides = [1, 1, 1]} : vector<9x8x8xf32> to vector<1x8x8xf32>
    %195 = vector.shape_cast %194 : vector<1x8x8xf32> to vector<8x8xf32>
    %196 = vector.extract_strided_slice %157 {offsets = [0, 19], sizes = [8, 72], strides = [1, 1]} : vector<8x92xf32> to vector<8x72xf32>
    %cst_106 = arith.constant dense<0.000000e+00> : vector<8x72xf32>
    %197 = tpu.matmul %195, %196, %cst_106 {dimension_numbers = #tpu.dot_dimension_numbers<[1], [0], [0], [1], [0, 0, 1, 1], [], []>} : vector<8x8xf32>, vector<8x72xf32>, vector<8x72xf32> -> vector<8x72xf32>
    %198 = arith.addf %193, %197 : vector<8x72xf32>
    %199 = vector.extract_strided_slice %74 {offsets = [8, 0, 0], sizes = [1, 8, 8], strides = [1, 1, 1]} : vector<9x8x8xf32> to vector<1x8x8xf32>
    %200 = vector.shape_cast %199 : vector<1x8x8xf32> to vector<8x8xf32>
    %201 = vector.extract_strided_slice %157 {offsets = [0, 20], sizes = [8, 72], strides = [1, 1]} : vector<8x92xf32> to vector<8x72xf32>
    %cst_107 = arith.constant dense<0.000000e+00> : vector<8x72xf32>
    %202 = tpu.matmul %200, %201, %cst_107 {dimension_numbers = #tpu.dot_dimension_numbers<[1], [0], [0], [1], [0, 0, 1, 1], [], []>} : vector<8x8xf32>, vector<8x72xf32>, vector<8x72xf32> -> vector<8x72xf32>
    %203 = arith.addf %198, %202 : vector<8x72xf32>
    %c3_108 = arith.constant 3 : index
    %c0_109 = arith.constant 0 : index
    %c0_110 = arith.constant 0 : index
    %204 = vector.load %arg8[%c3_108, %c0_109, %c0_110] : memref<5x8x1xf32, #tpu.memory_space<vmem>>, vector<1x8x1xf32>
    %205 = vector.shape_cast %204 : vector<1x8x1xf32> to vector<8x1xf32>
    %206 = vector.broadcast %205 : vector<8x1xf32> to vector<8x72xf32>
    %207 = arith.addf %203, %206 : vector<8x72xf32>
    %208 = vector.broadcast %0 : vector<1x72xf32> to vector<8x72xf32>
    %209 = arith.mulf %207, %208 : vector<8x72xf32>
    %c2_111 = arith.constant 2 : index
    %c0_112 = arith.constant 0 : index
    %c0_113 = arith.constant 0 : index
    %210 = vector.load %arg6[%c2_111, %c0_112, %c0_113] : memref<3x8x1xf32, #tpu.memory_space<vmem>>, vector<1x8x1xf32>
    %211 = vector.shape_cast %210 : vector<1x8x1xf32> to vector<8x1xf32>
    %212 = vector.broadcast %211 : vector<8x1xf32> to vector<8x72xf32>
    %213 = arith.mulf %209, %212 : vector<8x72xf32>
    %c2_114 = arith.constant 2 : index
    %c0_115 = arith.constant 0 : index
    %c0_116 = arith.constant 0 : index
    %214 = vector.load %arg7[%c2_114, %c0_115, %c0_116] : memref<3x8x1xf32, #tpu.memory_space<vmem>>, vector<1x8x1xf32>
    %215 = vector.shape_cast %214 : vector<1x8x1xf32> to vector<8x1xf32>
    %216 = vector.broadcast %215 : vector<8x1xf32> to vector<8x72xf32>
    %217 = arith.addf %213, %216 : vector<8x72xf32>
    %cst_117 = arith.constant 0.000000e+00 : f32
    %218 = vector.broadcast %cst_117 : f32 to vector<8x72xf32>
    %219 = arith.maximumf %217, %218 : vector<8x72xf32>
    %220 = vector.broadcast %0 : vector<1x72xf32> to vector<8x72xf32>
    %221 = arith.mulf %219, %220 : vector<8x72xf32>
    %cst_118 = arith.constant 0.000000e+00 : f32
    %222 = vector.broadcast %cst_118 : f32 to vector<8x10xf32>
    %223 = tpu.concatenate %222, %221, %222 in 1 : vector<8x10xf32>, vector<8x72xf32>, vector<8x10xf32> -> vector<8x92xf32>
    %cst_119 = arith.constant 0.000000e+00 : f32
    %224 = vector.broadcast %cst_119 : f32 to vector<8x72xf32>
    %225 = vector.extract_strided_slice %76 {offsets = [0, 0, 0], sizes = [1, 8, 8], strides = [1, 1, 1]} : vector<9x8x8xf32> to vector<1x8x8xf32>
    %226 = vector.shape_cast %225 : vector<1x8x8xf32> to vector<8x8xf32>
    %227 = vector.extract_strided_slice %223 {offsets = [0, 0], sizes = [8, 72], strides = [1, 1]} : vector<8x92xf32> to vector<8x72xf32>
    %cst_120 = arith.constant dense<0.000000e+00> : vector<8x72xf32>
    %228 = tpu.matmul %226, %227, %cst_120 {dimension_numbers = #tpu.dot_dimension_numbers<[1], [0], [0], [1], [0, 0, 1, 1], [], []>} : vector<8x8xf32>, vector<8x72xf32>, vector<8x72xf32> -> vector<8x72xf32>
    %229 = arith.addf %224, %228 : vector<8x72xf32>
    %230 = vector.extract_strided_slice %76 {offsets = [1, 0, 0], sizes = [1, 8, 8], strides = [1, 1, 1]} : vector<9x8x8xf32> to vector<1x8x8xf32>
    %231 = vector.shape_cast %230 : vector<1x8x8xf32> to vector<8x8xf32>
    %232 = vector.extract_strided_slice %223 {offsets = [0, 1], sizes = [8, 72], strides = [1, 1]} : vector<8x92xf32> to vector<8x72xf32>
    %cst_121 = arith.constant dense<0.000000e+00> : vector<8x72xf32>
    %233 = tpu.matmul %231, %232, %cst_121 {dimension_numbers = #tpu.dot_dimension_numbers<[1], [0], [0], [1], [0, 0, 1, 1], [], []>} : vector<8x8xf32>, vector<8x72xf32>, vector<8x72xf32> -> vector<8x72xf32>
    %234 = arith.addf %229, %233 : vector<8x72xf32>
    %235 = vector.extract_strided_slice %76 {offsets = [2, 0, 0], sizes = [1, 8, 8], strides = [1, 1, 1]} : vector<9x8x8xf32> to vector<1x8x8xf32>
    %236 = vector.shape_cast %235 : vector<1x8x8xf32> to vector<8x8xf32>
    %237 = vector.extract_strided_slice %223 {offsets = [0, 2], sizes = [8, 72], strides = [1, 1]} : vector<8x92xf32> to vector<8x72xf32>
    %cst_122 = arith.constant dense<0.000000e+00> : vector<8x72xf32>
    %238 = tpu.matmul %236, %237, %cst_122 {dimension_numbers = #tpu.dot_dimension_numbers<[1], [0], [0], [1], [0, 0, 1, 1], [], []>} : vector<8x8xf32>, vector<8x72xf32>, vector<8x72xf32> -> vector<8x72xf32>
    %239 = arith.addf %234, %238 : vector<8x72xf32>
    %240 = vector.extract_strided_slice %76 {offsets = [3, 0, 0], sizes = [1, 8, 8], strides = [1, 1, 1]} : vector<9x8x8xf32> to vector<1x8x8xf32>
    %241 = vector.shape_cast %240 : vector<1x8x8xf32> to vector<8x8xf32>
    %242 = vector.extract_strided_slice %223 {offsets = [0, 9], sizes = [8, 72], strides = [1, 1]} : vector<8x92xf32> to vector<8x72xf32>
    %cst_123 = arith.constant dense<0.000000e+00> : vector<8x72xf32>
    %243 = tpu.matmul %241, %242, %cst_123 {dimension_numbers = #tpu.dot_dimension_numbers<[1], [0], [0], [1], [0, 0, 1, 1], [], []>} : vector<8x8xf32>, vector<8x72xf32>, vector<8x72xf32> -> vector<8x72xf32>
    %244 = arith.addf %239, %243 : vector<8x72xf32>
    %245 = vector.extract_strided_slice %76 {offsets = [4, 0, 0], sizes = [1, 8, 8], strides = [1, 1, 1]} : vector<9x8x8xf32> to vector<1x8x8xf32>
    %246 = vector.shape_cast %245 : vector<1x8x8xf32> to vector<8x8xf32>
    %247 = vector.extract_strided_slice %223 {offsets = [0, 10], sizes = [8, 72], strides = [1, 1]} : vector<8x92xf32> to vector<8x72xf32>
    %cst_124 = arith.constant dense<0.000000e+00> : vector<8x72xf32>
    %248 = tpu.matmul %246, %247, %cst_124 {dimension_numbers = #tpu.dot_dimension_numbers<[1], [0], [0], [1], [0, 0, 1, 1], [], []>} : vector<8x8xf32>, vector<8x72xf32>, vector<8x72xf32> -> vector<8x72xf32>
    %249 = arith.addf %244, %248 : vector<8x72xf32>
    %250 = vector.extract_strided_slice %76 {offsets = [5, 0, 0], sizes = [1, 8, 8], strides = [1, 1, 1]} : vector<9x8x8xf32> to vector<1x8x8xf32>
    %251 = vector.shape_cast %250 : vector<1x8x8xf32> to vector<8x8xf32>
    %252 = vector.extract_strided_slice %223 {offsets = [0, 11], sizes = [8, 72], strides = [1, 1]} : vector<8x92xf32> to vector<8x72xf32>
    %cst_125 = arith.constant dense<0.000000e+00> : vector<8x72xf32>
    %253 = tpu.matmul %251, %252, %cst_125 {dimension_numbers = #tpu.dot_dimension_numbers<[1], [0], [0], [1], [0, 0, 1, 1], [], []>} : vector<8x8xf32>, vector<8x72xf32>, vector<8x72xf32> -> vector<8x72xf32>
    %254 = arith.addf %249, %253 : vector<8x72xf32>
    %255 = vector.extract_strided_slice %76 {offsets = [6, 0, 0], sizes = [1, 8, 8], strides = [1, 1, 1]} : vector<9x8x8xf32> to vector<1x8x8xf32>
    %256 = vector.shape_cast %255 : vector<1x8x8xf32> to vector<8x8xf32>
    %257 = vector.extract_strided_slice %223 {offsets = [0, 18], sizes = [8, 72], strides = [1, 1]} : vector<8x92xf32> to vector<8x72xf32>
    %cst_126 = arith.constant dense<0.000000e+00> : vector<8x72xf32>
    %258 = tpu.matmul %256, %257, %cst_126 {dimension_numbers = #tpu.dot_dimension_numbers<[1], [0], [0], [1], [0, 0, 1, 1], [], []>} : vector<8x8xf32>, vector<8x72xf32>, vector<8x72xf32> -> vector<8x72xf32>
    %259 = arith.addf %254, %258 : vector<8x72xf32>
    %260 = vector.extract_strided_slice %76 {offsets = [7, 0, 0], sizes = [1, 8, 8], strides = [1, 1, 1]} : vector<9x8x8xf32> to vector<1x8x8xf32>
    %261 = vector.shape_cast %260 : vector<1x8x8xf32> to vector<8x8xf32>
    %262 = vector.extract_strided_slice %223 {offsets = [0, 19], sizes = [8, 72], strides = [1, 1]} : vector<8x92xf32> to vector<8x72xf32>
    %cst_127 = arith.constant dense<0.000000e+00> : vector<8x72xf32>
    %263 = tpu.matmul %261, %262, %cst_127 {dimension_numbers = #tpu.dot_dimension_numbers<[1], [0], [0], [1], [0, 0, 1, 1], [], []>} : vector<8x8xf32>, vector<8x72xf32>, vector<8x72xf32> -> vector<8x72xf32>
    %264 = arith.addf %259, %263 : vector<8x72xf32>
    %265 = vector.extract_strided_slice %76 {offsets = [8, 0, 0], sizes = [1, 8, 8], strides = [1, 1, 1]} : vector<9x8x8xf32> to vector<1x8x8xf32>
    %266 = vector.shape_cast %265 : vector<1x8x8xf32> to vector<8x8xf32>
    %267 = vector.extract_strided_slice %223 {offsets = [0, 20], sizes = [8, 72], strides = [1, 1]} : vector<8x92xf32> to vector<8x72xf32>
    %cst_128 = arith.constant dense<0.000000e+00> : vector<8x72xf32>
    %268 = tpu.matmul %266, %267, %cst_128 {dimension_numbers = #tpu.dot_dimension_numbers<[1], [0], [0], [1], [0, 0, 1, 1], [], []>} : vector<8x8xf32>, vector<8x72xf32>, vector<8x72xf32> -> vector<8x72xf32>
    %269 = arith.addf %264, %268 : vector<8x72xf32>
    %c4_129 = arith.constant 4 : index
    %c0_130 = arith.constant 0 : index
    %c0_131 = arith.constant 0 : index
    %270 = vector.load %arg8[%c4_129, %c0_130, %c0_131] : memref<5x8x1xf32, #tpu.memory_space<vmem>>, vector<1x8x1xf32>
    %271 = vector.shape_cast %270 : vector<1x8x1xf32> to vector<8x1xf32>
    %272 = vector.broadcast %271 : vector<8x1xf32> to vector<8x72xf32>
    %273 = arith.addf %269, %272 : vector<8x72xf32>
    %274 = vector.broadcast %0 : vector<1x72xf32> to vector<8x72xf32>
    %275 = arith.mulf %273, %274 : vector<8x72xf32>
    %276 = arith.addf %275, %143 : vector<8x72xf32>
    %c0_132 = arith.constant 0 : index
    %c0_133 = arith.constant 0 : index
    %c0_134 = arith.constant 0 : index
    %277 = vector.load %arg10[%c0_132, %c0_133, %c0_134] : memref<1x8x72xf32, #tpu.memory_space<vmem>>, vector<1x8x72xf32>
    %278 = vector.shape_cast %277 : vector<1x8x72xf32> to vector<8x72xf32>
    %279 = vector.shape_cast %276 : vector<8x72xf32> to vector<1x8x72xf32>
    tpu.vector_store %arg10[%c0_132, %c0_133, %c0_134], %279 {strides = array<i32>} : memref<1x8x72xf32, #tpu.memory_space<vmem>>, vector<1x8x72xf32>,
    return
  }
  func.func @transform_0(%arg0: i32) -> (i32, i32, i32, i32) {
    %c0_i32 = arith.constant 0 : i32
    %c0_i32_0 = arith.constant 0 : i32
    %c0_i32_1 = arith.constant 0 : i32
    %c0_i32_2 = arith.constant 0 : i32
    return %arg0, %c0_i32, %c0_i32_0, %c0_i32_1 : i32, i32, i32, i32
  }
  func.func @transform_1(%arg0: i32) -> (i32, i32, i32) {
    %c0_i32 = arith.constant 0 : i32
    %c0_i32_0 = arith.constant 0 : i32
    %c0_i32_1 = arith.constant 0 : i32
    return %arg0, %c0_i32, %c0_i32_0 : i32, i32, i32
  }
  func.func @transform_2(%arg0: i32) -> (i32, i32, i32) {
    %c0_i32 = arith.constant 0 : i32
    %c0_i32_0 = arith.constant 0 : i32
    %c0_i32_1 = arith.constant 0 : i32
    %c0_i32_2 = arith.constant 0 : i32
    return %c0_i32, %c0_i32_0, %c0_i32_1 : i32, i32, i32
  }
  func.func @transform_3(%arg0: i32) -> (i32, i32) {
    %c0_i32 = arith.constant 0 : i32
    %c0_i32_0 = arith.constant 0 : i32
    %c0_i32_1 = arith.constant 0 : i32
    return %c0_i32, %c0_i32_0 : i32, i32
  }
  func.func @transform_4(%arg0: i32) -> (i32, i32, i32, i32) {
    %c0_i32 = arith.constant 0 : i32
    %c0_i32_0 = arith.constant 0 : i32
    %c0_i32_1 = arith.constant 0 : i32
    %c0_i32_2 = arith.constant 0 : i32
    %c0_i32_3 = arith.constant 0 : i32
    return %c0_i32, %c0_i32_0, %c0_i32_1, %c0_i32_2 : i32, i32, i32, i32
  }
  func.func @transform_5(%arg0: i32) -> (i32, i32, i32) {
    %c0_i32 = arith.constant 0 : i32
    %c0_i32_0 = arith.constant 0 : i32
    %c0_i32_1 = arith.constant 0 : i32
    %c0_i32_2 = arith.constant 0 : i32
    return %c0_i32, %c0_i32_0, %c0_i32_1 : i32, i32, i32
  }
  func.func @transform_6(%arg0: i32) -> (i32, i32, i32) {
    %c0_i32 = arith.constant 0 : i32
    %c0_i32_0 = arith.constant 0 : i32
    %c0_i32_1 = arith.constant 0 : i32
    %c0_i32_2 = arith.constant 0 : i32
    return %c0_i32, %c0_i32_0, %c0_i32_1 : i32, i32, i32
  }
  func.func @transform_7(%arg0: i32) -> (i32, i32, i32) {
    %c0_i32 = arith.constant 0 : i32
    %c0_i32_0 = arith.constant 0 : i32
    %c0_i32_1 = arith.constant 0 : i32
    %c0_i32_2 = arith.constant 0 : i32
    return %c0_i32, %c0_i32_0, %c0_i32_1 : i32, i32, i32
  }
  func.func @transform_8(%arg0: i32) -> (i32, i32) {
    %c0_i32 = arith.constant 0 : i32
    %c0_i32_0 = arith.constant 0 : i32
    %c0_i32_1 = arith.constant 0 : i32
    return %c0_i32, %c0_i32_0 : i32, i32
  }
  func.func @transform_9(%arg0: i32) -> (i32, i32, i32) {
    %c0_i32 = arith.constant 0 : i32
    %c0_i32_0 = arith.constant 0 : i32
    %c0_i32_1 = arith.constant 0 : i32
    return %arg0, %c0_i32, %c0_i32_0 : i32, i32, i32
  }
}

</mosaic_0001>

<llo_original>
// kernel: down_forward_pallas.1
$region0: #{down_forward_pallas.1}
  #allocation0 [shape = 'u32[]', space=smem, size = 0x4, offset = 0x4, fixed_abs, tag = 'smem constant byte address 0x4 - core index']
  #allocation1 [shape = 'u32[144,128]{1,0:T(1,128)}', space=vmem, size = 0x12000, scoped, tag = 'internal scratch']
  %s0 = inlined_call_operand.vmem [shape: f32[2,4,4,82], index: 0, kind: input, shape index: {}]
  %s1 = inlined_call_operand.vmem [shape: f32[2,4,72], index: 1, kind: input, shape index: {}]
  %s2 = inlined_call_operand.vmem [shape: f32[9,8,4], index: 2, kind: input, shape index: {}]
  %s3 = inlined_call_operand.vmem [shape: f32[8,4], index: 3, kind: input, shape index: {}]
  %s4 = inlined_call_operand.vmem [shape: f32[3,9,8,8], index: 4, kind: input, shape index: {}]
  %s5 = inlined_call_operand.vmem [shape: f32[3,8,1], index: 5, kind: input, shape index: {}]
  %s6 = inlined_call_operand.vmem [shape: f32[3,8,1], index: 6, kind: input, shape index: {}]
  %s7 = inlined_call_operand.vmem [shape: f32[5,8,1], index: 7, kind: input, shape index: {}]
  %s8 = inlined_call_operand.vmem [shape: f32[1,72], index: 8, kind: input, shape index: {}]
  %s9 = inlined_call_operand.vmem [shape: f32[2,8,72], index: 9, kind: output, shape index: {}]
  %s10 = sld [smem:[#allocation0]]
  $region69: #{down_forward_pallas.1} parent=0
    _
  %s12 = ssub.s32 1, %s10
  %s13 = scalar_select 0, %s12, %s10
  loop: start=0, step=1, limit=4
  $region2: #{down_forward_pallas.1} parent=0 // loop_pre_header
    _
  $region3: #{down_forward_pallas.1} parent=0 // loop_header
    %s15 = sphi 0, %s19
    %p16 = scmp.ge.s32.totalorder %s15, 4
    %s25 = sphi 0, %s27
    %s28 = sphi 0, %s25
    %s29 = sphi 0, %s28
    %s45 = sphi 0, %s29
    %s51 = sphi 0, %s53
    %s54 = sphi 0, %s51
    %s55 = sphi 0, %s54
    %s71 = sphi 0, %s55
    %s75 = sphi 0, %s75
    %s77 = sphi 0, %s75
    %s78 = sphi 0, %s77
    %s92 = sphi 0, %s78
    %s96 = sphi 0, %s96
    %s98 = sphi 0, %s96
    %s99 = sphi 0, %s98
    %s113 = sphi 0, %s99
    %s117 = sphi 0, %s117
    %s119 = sphi 0, %s117
    %s120 = sphi 0, %s119
    %s134 = sphi 0, %s120
    %s138 = sphi 0, %s138
    %s140 = sphi 0, %s138
    %s141 = sphi 0, %s140
    %s155 = sphi 0, %s141
    %s159 = sphi 0, %s159
    %s161 = sphi 0, %s159
    %s162 = sphi 0, %s161
    %s176 = sphi 0, %s162
    %s180 = sphi 0, %s180
    %s182 = sphi 0, %s180
    %s183 = sphi 0, %s182
    %s197 = sphi 0, %s183
    %s201 = sphi 0, %s201
    %s203 = sphi 0, %s201
    %s204 = sphi 0, %s203
    %s218 = sphi 0, %s204
    %s224 = sphi 0, %s226
    %s227 = sphi 0, %s224
    %s228 = sphi 0, %s227
    %s244 = sphi 0, %s228
  $region4: #{down_forward_pallas.1} parent=0 // loop_header_branch
    %18 = sbr.rel (%p16) target = $region8
  $region5: #{down_forward_pallas.1} parent=0 // loop_body
    %s20 = ssub.s32 %s15, 1
    %s21 = ssub.s32 %s15, 2
    %s22 = sadd.s32 %s15, 1
    %s23 = ssub.s32 %s15, %s22
    %p24 = scmp.eq.s32.totalorder %s23, 0
    %s26 = sadd.s32 %s25, 1
    %s27 = scalar_select %p24, %s25, %s26
    %p30 = pneg %p24
    %p31 = scmp.eq.s32.totalorder %s15, 1
    %p32 = por %p30, %p31
    %p33 = scmp.ne.s32.totalorder %s25, %s28
    %p34 = scmp.eq.s32.totalorder %s15, 0
    %p35 = por %p33, %p34
    %p36 = scmp.ne.s32.totalorder %s25, %s28
    %p37 = scmp.eq.s32.totalorder %s20, 1
    %p38 = por %p36, %p37
    %p39 = scmp.ne.s32.totalorder %s28, %s29
    %p40 = scmp.eq.s32.totalorder %s20, 0
    %p41 = por %p39, %p40
    %p42 = scmp.ne.s32.totalorder %s28, %s29
    %p43 = scmp.eq.s32.totalorder %s21, 1
    %p44 = por %p42, %p43
    %p46 = scmp.ne.s32.totalorder %s29, %s45
    %p47 = scmp.eq.s32.totalorder %s21, 0
    %p48 = por %p46, %p47
    %s49 = ssub.s32 %s15, %s22
    %p50 = scmp.eq.s32.totalorder %s49, 0
    %s52 = sadd.s32 %s51, 1
    %s53 = scalar_select %p50, %s51, %s52
    %p56 = pneg %p50
    %p57 = scmp.eq.s32.totalorder %s15, 1
    %p58 = por %p56, %p57
    %p59 = scmp.ne.s32.totalorder %s51, %s54
    %p60 = scmp.eq.s32.totalorder %s15, 0
    %p61 = por %p59, %p60
    %p62 = scmp.ne.s32.totalorder %s51, %s54
    %p63 = scmp.eq.s32.totalorder %s20, 1
    %p64 = por %p62, %p63
    %p65 = scmp.ne.s32.totalorder %s54, %s55
    %p66 = scmp.eq.s32.totalorder %s20, 0
    %p67 = por %p65, %p66
    %p68 = scmp.ne.s32.totalorder %s54, %s55
    %p69 = scmp.eq.s32.totalorder %s21, 1
    %p70 = por %p68, %p69
    %p72 = scmp.ne.s32.totalorder %s55, %s71
    %p73 = scmp.eq.s32.totalorder %s21, 0
    %p74 = por %p72, %p73
    %s76 = sadd.s32 %s75, 1
    %p79 = scmp.eq.s32.totalorder %s15, 1
    %p80 = scmp.ne.s32.totalorder %s75, %s77
    %p81 = scmp.eq.s32.totalorder %s15, 0
    %p82 = por %p80, %p81
    %p83 = scmp.ne.s32.totalorder %s75, %s77
    %p84 = scmp.eq.s32.totalorder %s20, 1
    %p85 = por %p83, %p84
    %p86 = scmp.ne.s32.totalorder %s77, %s78
    %p87 = scmp.eq.s32.totalorder %s20, 0
    %p88 = por %p86, %p87
    %p89 = scmp.ne.s32.totalorder %s77, %s78
    %p90 = scmp.eq.s32.totalorder %s21, 1
    %p91 = por %p89, %p90
    %p93 = scmp.ne.s32.totalorder %s78, %s92
    %p94 = scmp.eq.s32.totalorder %s21, 0
    %p95 = por %p93, %p94
    %s97 = sadd.s32 %s96, 1
    %p100 = scmp.eq.s32.totalorder %s15, 1
    %p101 = scmp.ne.s32.totalorder %s96, %s98
    %p102 = scmp.eq.s32.totalorder %s15, 0
    %p103 = por %p101, %p102
    %p104 = scmp.ne.s32.totalorder %s96, %s98
    %p105 = scmp.eq.s32.totalorder %s20, 1
    %p106 = por %p104, %p105
    %p107 = scmp.ne.s32.totalorder %s98, %s99
    %p108 = scmp.eq.s32.totalorder %s20, 0
    %p109 = por %p107, %p108
    %p110 = scmp.ne.s32.totalorder %s98, %s99
    %p111 = scmp.eq.s32.totalorder %s21, 1
    %p112 = por %p110, %p111
    %p114 = scmp.ne.s32.totalorder %s99, %s113
    %p115 = scmp.eq.s32.totalorder %s21, 0
    %p116 = por %p114, %p115
    %s118 = sadd.s32 %s117, 1
    %p121 = scmp.eq.s32.totalorder %s15, 1
    %p122 = scmp.ne.s32.totalorder %s117, %s119
    %p123 = scmp.eq.s32.totalorder %s15, 0
    %p124 = por %p122, %p123
    %p125 = scmp.ne.s32.totalorder %s117, %s119
    %p126 = scmp.eq.s32.totalorder %s20, 1
    %p127 = por %p125, %p126
    %p128 = scmp.ne.s32.totalorder %s119, %s120
    %p129 = scmp.eq.s32.totalorder %s20, 0
    %p130 = por %p128, %p129
    %p131 = scmp.ne.s32.totalorder %s119, %s120
    %p132 = scmp.eq.s32.totalorder %s21, 1
    %p133 = por %p131, %p132
    %p135 = scmp.ne.s32.totalorder %s120, %s134
    %p136 = scmp.eq.s32.totalorder %s21, 0
    %p137 = por %p135, %p136
    %s139 = sadd.s32 %s138, 1
    %p142 = scmp.eq.s32.totalorder %s15, 1
    %p143 = scmp.ne.s32.totalorder %s138, %s140
    %p144 = scmp.eq.s32.totalorder %s15, 0
    %p145 = por %p143, %p144
    %p146 = scmp.ne.s32.totalorder %s138, %s140
    %p147 = scmp.eq.s32.totalorder %s20, 1
    %p148 = por %p146, %p147
    %p149 = scmp.ne.s32.totalorder %s140, %s141
    %p150 = scmp.eq.s32.totalorder %s20, 0
    %p151 = por %p149, %p150
    %p152 = scmp.ne.s32.totalorder %s140, %s141
    %p153 = scmp.eq.s32.totalorder %s21, 1
    %p154 = por %p152, %p153
    %p156 = scmp.ne.s32.totalorder %s141, %s155
    %p157 = scmp.eq.s32.totalorder %s21, 0
    %p158 = por %p156, %p157
    %s160 = sadd.s32 %s159, 1
    %p163 = scmp.eq.s32.totalorder %s15, 1
    %p164 = scmp.ne.s32.totalorder %s159, %s161
    %p165 = scmp.eq.s32.totalorder %s15, 0
    %p166 = por %p164, %p165
    %p167 = scmp.ne.s32.totalorder %s159, %s161
    %p168 = scmp.eq.s32.totalorder %s20, 1
    %p169 = por %p167, %p168
    %p170 = scmp.ne.s32.totalorder %s161, %s162
    %p171 = scmp.eq.s32.totalorder %s20, 0
    %p172 = por %p170, %p171
    %p173 = scmp.ne.s32.totalorder %s161, %s162
    %p174 = scmp.eq.s32.totalorder %s21, 1
    %p175 = por %p173, %p174
    %p177 = scmp.ne.s32.totalorder %s162, %s176
    %p178 = scmp.eq.s32.totalorder %s21, 0
    %p179 = por %p177, %p178
    %s181 = sadd.s32 %s180, 1
    %p184 = scmp.eq.s32.totalorder %s15, 1
    %p185 = scmp.ne.s32.totalorder %s180, %s182
    %p186 = scmp.eq.s32.totalorder %s15, 0
    %p187 = por %p185, %p186
    %p188 = scmp.ne.s32.totalorder %s180, %s182
    %p189 = scmp.eq.s32.totalorder %s20, 1
    %p190 = por %p188, %p189
    %p191 = scmp.ne.s32.totalorder %s182, %s183
    %p192 = scmp.eq.s32.totalorder %s20, 0
    %p193 = por %p191, %p192
    %p194 = scmp.ne.s32.totalorder %s182, %s183
    %p195 = scmp.eq.s32.totalorder %s21, 1
    %p196 = por %p194, %p195
    %p198 = scmp.ne.s32.totalorder %s183, %s197
    %p199 = scmp.eq.s32.totalorder %s21, 0
    %p200 = por %p198, %p199
    %s202 = sadd.s32 %s201, 1
    %p205 = scmp.eq.s32.totalorder %s15, 1
    %p206 = scmp.ne.s32.totalorder %s201, %s203
    %p207 = scmp.eq.s32.totalorder %s15, 0
    %p208 = por %p206, %p207
    %p209 = scmp.ne.s32.totalorder %s201, %s203
    %p210 = scmp.eq.s32.totalorder %s20, 1
    %p211 = por %p209, %p210
    %p212 = scmp.ne.s32.totalorder %s203, %s204
    %p213 = scmp.eq.s32.totalorder %s20, 0
    %p214 = por %p212, %p213
    %p215 = scmp.ne.s32.totalorder %s203, %s204
    %p216 = scmp.eq.s32.totalorder %s21, 1
    %p217 = por %p215, %p216
    %p219 = scmp.ne.s32.totalorder %s204, %s218
    %p220 = scmp.eq.s32.totalorder %s21, 0
    %p221 = por %p219, %p220
    %s222 = ssub.s32 %s15, %s22
    %p223 = scmp.eq.s32.totalorder %s222, 0
    %s225 = sadd.s32 %s224, 1
    %s226 = scalar_select %p223, %s224, %s225
    %p229 = pneg %p223
    %p230 = scmp.eq.s32.totalorder %s15, 1
    %p231 = por %p229, %p230
    %p232 = scmp.ne.s32.totalorder %s224, %s227
    %p233 = scmp.eq.s32.totalorder %s15, 0
    %p234 = por %p232, %p233
    %p235 = scmp.ne.s32.totalorder %s224, %s227
    %p236 = scmp.eq.s32.totalorder %s20, 1
    %p237 = por %p235, %p236
    %p238 = scmp.ne.s32.totalorder %s227, %s228
    %p239 = scmp.eq.s32.totalorder %s20, 0
    %p240 = por %p238, %p239
    %p241 = scmp.ne.s32.totalorder %s227, %s228
    %p242 = scmp.eq.s32.totalorder %s21, 1
    %p243 = por %p241, %p242
    %p245 = scmp.ne.s32.totalorder %s228, %s244
    %p246 = scmp.eq.s32.totalorder %s21, 0
    %p247 = por %p245, %p246
    %p248 = scmp.le.s32.totalorder 1, %s15
    %p249 = scmp.lt.s32.totalorder %s15, 3
    %p250 = pnand %p248, %p249
    %p251 = pneg %p250
    // Predicated region
    $region9: #{down_forward_pallas.1} parent=5 // pred_check
      _
    $region10: #{down_forward_pallas.1} parent=5 // pred_check_branch
      %253 = sbr.rel (%p250) target = $region12
    $region11: #{down_forward_pallas.1} parent=5 // pred_region
      %s254 = ssub.s32 %s15, 1
      // Predicated region
      $region13: #{down_forward_pallas.1} parent=11 // pred_check
        %p255 = pneg %p88
      $region14: #{down_forward_pallas.1} parent=11 // pred_check_branch
        %257 = sbr.rel (%p255) target = $region16
      $region15: #{down_forward_pallas.1} parent=11 // pred_region
        _
      $region16: #{down_forward_pallas.1} parent=11 // pred_fallthru
        _
      // Predicated region
      $region17: #{down_forward_pallas.1} parent=11 // pred_check
        %p258 = pneg %p109
      $region18: #{down_forward_pallas.1} parent=11 // pred_check_branch
        %260 = sbr.rel (%p258) target = $region20
      $region19: #{down_forward_pallas.1} parent=11 // pred_region
        _
      $region20: #{down_forward_pallas.1} parent=11 // pred_fallthru
        _
      // Predicated region
      $region21: #{down_forward_pallas.1} parent=11 // pred_check
        %p261 = pneg %p130
      $region22: #{down_forward_pallas.1} parent=11 // pred_check_branch
        %263 = sbr.rel (%p261) target = $region24
      $region23: #{down_forward_pallas.1} parent=11 // pred_region
        _
      $region24: #{down_forward_pallas.1} parent=11 // pred_fallthru
        _
      // Predicated region
      $region25: #{down_forward_pallas.1} parent=11 // pred_check
        %p264 = pneg %p151
      $region26: #{down_forward_pallas.1} parent=11 // pred_check_branch
        %266 = sbr.rel (%p264) target = $region28
      $region27: #{down_forward_pallas.1} parent=11 // pred_region
        _
      $region28: #{down_forward_pallas.1} parent=11 // pred_fallthru
        _
      // Predicated region
      $region29: #{down_forward_pallas.1} parent=11 // pred_check
        %p267 = pneg %p172
      $region30: #{down_forward_pallas.1} parent=11 // pred_check_branch
        %269 = sbr.rel (%p267) target = $region32
      $region31: #{down_forward_pallas.1} parent=11 // pred_region
        _
      $region32: #{down_forward_pallas.1} parent=11 // pred_fallthru
        _
      // Predicated region
      $region33: #{down_forward_pallas.1} parent=11 // pred_check
        %p270 = pneg %p193
      $region34: #{down_forward_pallas.1} parent=11 // pred_check_branch
        %272 = sbr.rel (%p270) target = $region36
      $region35: #{down_forward_pallas.1} parent=11 // pred_region
        _
      $region36: #{down_forward_pallas.1} parent=11 // pred_fallthru
        _
      // Predicated region
      $region37: #{down_forward_pallas.1} parent=11 // pred_check
        %p273 = pneg %p214
      $region38: #{down_forward_pallas.1} parent=11 // pred_check_branch
        %275 = sbr.rel (%p273) target = $region40
      $region39: #{down_forward_pallas.1} parent=11 // pred_region
        _
      $region40: #{down_forward_pallas.1} parent=11 // pred_fallthru
        _
    $region12: #{down_forward_pallas.1} parent=5 // pred_fallthru
      _
    %p276 = scmp.lt.s32.totalorder %s15, 2
    // Predicated region
    $region41: #{down_forward_pallas.1} parent=5 // pred_check
      %p277 = pneg %p276
    $region42: #{down_forward_pallas.1} parent=5 // pred_check_branch
      %279 = sbr.rel (%p277) target = $region44
    $region43: #{down_forward_pallas.1} parent=5 // pred_region
      // Predicated region
      $region45: #{down_forward_pallas.1} parent=43 // pred_check
        %p280 = pneg %p35
      $region46: #{down_forward_pallas.1} parent=43 // pred_check_branch
        %282 = sbr.rel (%p280) target = $region48
      $region47: #{down_forward_pallas.1} parent=43 // pred_region
        %p283 = scmp.lt.s32.totalorder %s15, 1
        %s284 = scalar_select %p283, %s15, 1
        %s285 = smul.addr %s284, 4
        %s286 = smul.addr %s285, 4
        %s287 = scalar_lea.vmem %s0, %s286
      $region48: #{down_forward_pallas.1} parent=43 // pred_fallthru
        _
      // Predicated region
      $region49: #{down_forward_pallas.1} parent=43 // pred_check
        %p288 = pneg %p61
      $region50: #{down_forward_pallas.1} parent=43 // pred_check_branch
        %290 = sbr.rel (%p288) target = $region52
      $region51: #{down_forward_pallas.1} parent=43 // pred_region
        %p291 = scmp.lt.s32.totalorder %s15, 1
        %s292 = scalar_select %p291, %s15, 1
        %s293 = smul.addr %s292, 4
        %s294 = scalar_lea.vmem %s1, %s293
      $region52: #{down_forward_pallas.1} parent=43 // pred_fallthru
        _
    $region44: #{down_forward_pallas.1} parent=5 // pred_fallthru
      _
    %p295 = scmp.le.s32.totalorder 1, %s15
    %p296 = scmp.lt.s32.totalorder %s15, 3
    %p297 = pnand %p295, %p296
    %p298 = pneg %p297
    // Predicated region
    $region53: #{down_forward_pallas.1} parent=5 // pred_check
      _
    $region54: #{down_forward_pallas.1} parent=5 // pred_check_branch
      %300 = sbr.rel (%p297) target = $region56
    $region55: #{down_forward_pallas.1} parent=5 // pred_region
      %s301 = ssub.s32 %s15, 1
      %p302 = scmp.lt.s32.totalorder %s20, 1
      %s303 = scalar_select %p302, %s20, 1
      %s304 = smul.addr %s303, 4
      %s305 = smul.addr %s304, 4
      %s306 = scalar_lea.vmem %s0, %s305
      %p307 = pneg %p41
      %p308 = pneg %p38
      %p309 = scmp.lt.s32.totalorder %s20, 1
      %s310 = scalar_select %p309, %s20, 1
      %s311 = smul.addr %s310, 4
      %s312 = scalar_lea.vmem %s1, %s311
      %p313 = pneg %p67
      %p314 = pneg %p64
      %p315 = pneg %p88
      %p316 = pneg %p85
      %p317 = pneg %p109
      %p318 = pneg %p106
      %p319 = pneg %p130
      %p320 = pneg %p127
      %p321 = pneg %p151
      %p322 = pneg %p148
      %p323 = pneg %p172
      %p324 = pneg %p169
      %p325 = pneg %p193
      %p326 = pneg %p190
      %p327 = pneg %p214
      %p328 = pneg %p211
      %p329 = pneg %p240
      %p330 = pneg %p237
      %p331 = scmp.lt.s32.totalorder %s20, 1
      %s332 = scalar_select %p331, %s20, 1
      %s333 = smul.addr %s332, 8
      %s334 = scalar_lea.vmem %s9, %s333
      %p335 = scmp.lt.s32.totalorder %s20, 1
      %s336 = scalar_select %p335, %s20, 1
      %s337 = smul.addr %s336, 4
      %s338 = smul.addr %s337, 4
      %s339 = scalar_lea.vmem %s0, %s338
      %p340 = scmp.lt.s32.totalorder %s20, 1
      %s341 = scalar_select %p340, %s20, 1
      %s342 = smul.addr %s341, 4
      %s343 = scalar_lea.vmem %s1, %s342
      %p344 = scmp.lt.s32.totalorder %s20, 1
      %s345 = scalar_select %p344, %s20, 1
      %s346 = smul.addr %s345, 8
      %s347 = scalar_lea.vmem %s9, %s346
      %v348 = vld [vmem:[%s8] sm:$0x1]
      %v349 = vld [vmem:[%s339] sm:$0xf]
      %v350 = vld [vmem:[%s2] sm:$0xff]
      %s351 = scalar_lea.vmem %s339, 4
      %v352 = vld [vmem:[%s351] sm:$0xf]
      %s353 = scalar_lea.vmem %s2, 8
      %v354 = vld [vmem:[%s353] sm:$0xff]
      %vm355 = vcmask 31744
      %v357 = vsel %vm355, %v354, 0
      %vm359 = vcmask 1043456
      %v361 = vsel %vm359, %v352, 0
      %363 = vmatprep.subr.mxu0 0.0
      %364 = vmatpush1.msra.mxu0 0.0
      %365 = vmatprep.subr.mxu0 0.0
      %366 = vmatpush1.msra.mxu0 0.0
      %367 = vmatprep.subr.mxu0 0.0
      %368 = vmatpush1.msra.mxu0 0.0
      %369 = vmatprep.subr.mxu0 0.0
      %370 = vmatpush1.msra.mxu0 0.0
      %371 = vmatprep.subr.mxu0 0.0
      %372 = vmatpush1.msra.mxu0 0.0
      %373 = vmatprep.subr.mxu0 0.0
      %374 = vmatpush1.msra.mxu0 0.0
      %375 = vmatprep.subr.mxu0 0.0
      %376 = vmatpush1.msra.mxu0 0.0
      %377 = vmatprep.subr.mxu0 0.0
      %378 = vmatpush1.msra.mxu0 0.0
      %379 = vmatprep.subr.mxu0 0.0
      %380 = vmatpush1.msra.mxu0 0.0
      %381 = vmatprep.subr.mxu0 0.0
      %382 = vmatpush1.msra.mxu0 0.0
      %383 = vmatprep.subr.mxu0 0.0
      %384 = vmatpush1.msra.mxu0 0.0
      %385 = vmatprep.subr.mxu0 0.0
      %386 = vmatpush1.msra.mxu0 0.0
      %387 = vmatprep.subr.mxu0 0.0
      %388 = vmatpush1.msra.mxu0 0.0
      %389 = vmatprep.subr.mxu0 0.0
      %390 = vmatpush1.msra.mxu0 0.0
      %391 = vmatprep.subr.mxu0 0.0
      %392 = vmatpush1.msra.mxu0 0.0
      %393 = vmatprep.subr.mxu0 0.0
      %394 = vmatpush1.msra.mxu0 %v361
      %395 = vmatprep.subr.mxu0 0.0
      %396 = vmatpush2.msra.mxu0 0.0
      %397 = vmatprep.subr.mxu0 0.0
      %398 = vmatpush2.msra.mxu0 0.0
      %399 = vmatprep.subr.mxu0 0.0
      %400 = vmatpush2.msra.mxu0 0.0
      %401 = vmatprep.subr.mxu0 0.0
      %402 = vmatpush2.msra.mxu0 0.0
      %403 = vmatprep.subr.mxu0 0.0
      %404 = vmatpush2.msra.mxu0 0.0
      %405 = vmatprep.subr.mxu0 0.0
      %406 = vmatpush2.msra.mxu0 0.0
      %407 = vmatprep.subr.mxu0 0.0
      %408 = vmatpush2.msra.mxu0 0.0
      %409 = vmatprep.subr.mxu0 0.0
      %410 = vmatpush2.msra.mxu0 0.0
      %411 = vmatprep.subr.mxu0 0.0
      %412 = vmatpush2.msra.mxu0 0.0
      %413 = vmatprep.subr.mxu0 0.0
      %414 = vmatpush2.msra.mxu0 0.0
      %415 = vmatprep.subr.mxu0 0.0
      %416 = vmatpush2.msra.mxu0 0.0
      %417 = vmatprep.subr.mxu0 0.0
      %418 = vmatpush2.msra.mxu0 0.0
      %419 = vmatprep.subr.mxu0 0.0
      %420 = vmatpush2.msra.mxu0 0.0
      %421 = vmatprep.subr.mxu0 0.0
      %422 = vmatpush2.msra.mxu0 0.0
      %423 = vmatprep.subr.mxu0 0.0
      %424 = vmatpush2.msra.mxu0 0.0
      %425 = vmatprep.subr.mxu0 0.0
      %426 = vmatpush2.msra.mxu0 0.0
      %427 = vmatprep.mubr.f32.mxu0 0.0
      %428 = vmatmul.mubr.f32.gmra.mxu0 %v357
      %v429 = vpop.f32.mrf.mxu0
      %v430 = vadd.f32 0.0, %v429
      %v431 = vpop.f32.mrf.mxu0
      %432 = vdwg.mxu0
      %v434 = vsel %vm355, %v350, 0
      %v437 = vsel %vm359, %v349, 0
      %439 = vmatprep.subr.mxu0 0.0
      %440 = vmatpush1.msra.mxu0 0.0
      %441 = vmatprep.subr.mxu0 0.0
      %442 = vmatpush1.msra.mxu0 0.0
      %443 = vmatprep.subr.mxu0 0.0
      %444 = vmatpush1.msra.mxu0 0.0
      %445 = vmatprep.subr.mxu0 0.0
      %446 = vmatpush1.msra.mxu0 0.0
      %447 = vmatprep.subr.mxu0 0.0
      %448 = vmatpush1.msra.mxu0 0.0
      %449 = vmatprep.subr.mxu0 0.0
      %450 = vmatpush1.msra.mxu0 0.0
      %451 = vmatprep.subr.mxu0 0.0
      %452 = vmatpush1.msra.mxu0 0.0
      %453 = vmatprep.subr.mxu0 0.0
      %454 = vmatpush1.msra.mxu0 0.0
      %455 = vmatprep.subr.mxu0 0.0
      %456 = vmatpush1.msra.mxu0 0.0
      %457 = vmatprep.subr.mxu0 0.0
      %458 = vmatpush1.msra.mxu0 0.0
      %459 = vmatprep.subr.mxu0 0.0
      %460 = vmatpush1.msra.mxu0 0.0
      %461 = vmatprep.subr.mxu0 0.0
      %462 = vmatpush1.msra.mxu0 0.0
      %463 = vmatprep.subr.mxu0 0.0
      %464 = vmatpush1.msra.mxu0 0.0
      %465 = vmatprep.subr.mxu0 0.0
      %466 = vmatpush1.msra.mxu0 0.0
      %467 = vmatprep.subr.mxu0 0.0
      %468 = vmatpush1.msra.mxu0 0.0
      %469 = vmatprep.subr.mxu0 0.0
      %470 = vmatpush1.msra.mxu0 %v437
      %471 = vmatprep.subr.mxu0 0.0
      %472 = vmatpush2.msra.mxu0 0.0
      %473 = vmatprep.subr.mxu0 0.0
      %474 = vmatpush2.msra.mxu0 0.0
      %475 = vmatprep.subr.mxu0 0.0
      %476 = vmatpush2.msra.mxu0 0.0
      %477 = vmatprep.subr.mxu0 0.0
      %478 = vmatpush2.msra.mxu0 0.0
      %479 = vmatprep.subr.mxu0 0.0
      %480 = vmatpush2.msra.mxu0 0.0
      %481 = vmatprep.subr.mxu0 0.0
      %482 = vmatpush2.msra.mxu0 0.0
      %483 = vmatprep.subr.mxu0 0.0
      %484 = vmatpush2.msra.mxu0 0.0
      %485 = vmatprep.subr.mxu0 0.0
      %486 = vmatpush2.msra.mxu0 0.0
      %487 = vmatprep.subr.mxu0 0.0
      %488 = vmatpush2.msra.mxu0 0.0
      %489 = vmatprep.subr.mxu0 0.0
      %490 = vmatpush2.msra.mxu0 0.0
      %491 = vmatprep.subr.mxu0 0.0
      %492 = vmatpush2.msra.mxu0 0.0
      %493 = vmatprep.subr.mxu0 0.0
      %494 = vmatpush2.msra.mxu0 0.0
      %495 = vmatprep.subr.mxu0 0.0
      %496 = vmatpush2.msra.mxu0 0.0
      %497 = vmatprep.subr.mxu0 0.0
      %498 = vmatpush2.msra.mxu0 0.0
      %499 = vmatprep.subr.mxu0 0.0
      %500 = vmatpush2.msra.mxu0 0.0
      %501 = vmatprep.subr.mxu0 0.0
      %502 = vmatpush2.msra.mxu0 0.0
      %503 = vmatprep.mubr.f32.mxu0 0.0
      %504 = vmatmul.mubr.f32.gmra.mxu0 %v434
      %v505 = vpop.f32.mrf.mxu0
      %v506 = vadd.f32 %v430, %v505
      %v507 = vpop.f32.mrf.mxu0
      %508 = vdwg.mxu0
      %s509 = scalar_lea.vmem %s2, 16
      %v510 = vld [vmem:[%s509] sm:$0xff]
      %511 = vrot.lane.b32.xlu0 %v349, 127
      %v512 = vpop.permute.xlu0 %511
      %v514 = vsel %vm355, %v510, 0
      %v516 = vsel %vm359, %v512, 0
      %518 = vmatprep.subr.mxu0 0.0
      %519 = vmatpush1.msra.mxu0 0.0
      %520 = vmatprep.subr.mxu0 0.0
      %521 = vmatpush1.msra.mxu0 0.0
      %522 = vmatprep.subr.mxu0 0.0
      %523 = vmatpush1.msra.mxu0 0.0
      %524 = vmatprep.subr.mxu0 0.0
      %525 = vmatpush1.msra.mxu0 0.0
      %526 = vmatprep.subr.mxu0 0.0
      %527 = vmatpush1.msra.mxu0 0.0
      %528 = vmatprep.subr.mxu0 0.0
      %529 = vmatpush1.msra.mxu0 0.0
      %530 = vmatprep.subr.mxu0 0.0
      %531 = vmatpush1.msra.mxu0 0.0
      %532 = vmatprep.subr.mxu0 0.0
      %533 = vmatpush1.msra.mxu0 0.0
      %534 = vmatprep.subr.mxu0 0.0
      %535 = vmatpush1.msra.mxu0 0.0
      %536 = vmatprep.subr.mxu0 0.0
      %537 = vmatpush1.msra.mxu0 0.0
      %538 = vmatprep.subr.mxu0 0.0
      %539 = vmatpush1.msra.mxu0 0.0
      %540 = vmatprep.subr.mxu0 0.0
      %541 = vmatpush1.msra.mxu0 0.0
      %542 = vmatprep.subr.mxu0 0.0
      %543 = vmatpush1.msra.mxu0 0.0
      %544 = vmatprep.subr.mxu0 0.0
      %545 = vmatpush1.msra.mxu0 0.0
      %546 = vmatprep.subr.mxu0 0.0
      %547 = vmatpush1.msra.mxu0 0.0
      %548 = vmatprep.subr.mxu0 0.0
      %549 = vmatpush1.msra.mxu0 %v516
      %550 = vmatprep.subr.mxu0 0.0
      %551 = vmatpush2.msra.mxu0 0.0
      %552 = vmatprep.subr.mxu0 0.0
      %553 = vmatpush2.msra.mxu0 0.0
      %554 = vmatprep.subr.mxu0 0.0
      %555 = vmatpush2.msra.mxu0 0.0
      %556 = vmatprep.subr.mxu0 0.0
      %557 = vmatpush2.msra.mxu0 0.0
      %558 = vmatprep.subr.mxu0 0.0
      %559 = vmatpush2.msra.mxu0 0.0
      %560 = vmatprep.subr.mxu0 0.0
      %561 = vmatpush2.msra.mxu0 0.0
      %562 = vmatprep.subr.mxu0 0.0
      %563 = vmatpush2.msra.mxu0 0.0
      %564 = vmatprep.subr.mxu0 0.0
      %565 = vmatpush2.msra.mxu0 0.0
      %566 = vmatprep.subr.mxu0 0.0
      %567 = vmatpush2.msra.mxu0 0.0
      %568 = vmatprep.subr.mxu0 0.0
      %569 = vmatpush2.msra.mxu0 0.0
      %570 = vmatprep.subr.mxu0 0.0
      %571 = vmatpush2.msra.mxu0 0.0
      %572 = vmatprep.subr.mxu0 0.0
      %573 = vmatpush2.msra.mxu0 0.0
      %574 = vmatprep.subr.mxu0 0.0
      %575 = vmatpush2.msra.mxu0 0.0
      %576 = vmatprep.subr.mxu0 0.0
      %577 = vmatpush2.msra.mxu0 0.0
      %578 = vmatprep.subr.mxu0 0.0
      %579 = vmatpush2.msra.mxu0 0.0
      %580 = vmatprep.subr.mxu0 0.0
      %581 = vmatpush2.msra.mxu0 0.0
      %582 = vmatprep.mubr.f32.mxu0 0.0
      %583 = vmatmul.mubr.f32.gmra.mxu0 %v514
      %v584 = vpop.f32.mrf.mxu0
      %v585 = vadd.f32 0.0, %v584
      %v586 = vpop.f32.mrf.mxu0
      %587 = vdwg.mxu0
      %v588 = vadd.f32 %v506, %v585
      %s589 = scalar_lea.vmem %s339, 8
      %v590 = vld [vmem:[%s589] sm:$0xf]
      %s591 = scalar_lea.vmem %s2, 24
      %v592 = vld [vmem:[%s591] sm:$0xff]
      %v594 = vsel %vm355, %v592, 0
      %v597 = vsel %vm359, %v590, 0
      %599 = vmatprep.subr.mxu0 0.0
      %600 = vmatpush1.msra.mxu0 0.0
      %601 = vmatprep.subr.mxu0 0.0
      %602 = vmatpush1.msra.mxu0 0.0
      %603 = vmatprep.subr.mxu0 0.0
      %604 = vmatpush1.msra.mxu0 0.0
      %605 = vmatprep.subr.mxu0 0.0
      %606 = vmatpush1.msra.mxu0 0.0
      %607 = vmatprep.subr.mxu0 0.0
      %608 = vmatpush1.msra.mxu0 0.0
      %609 = vmatprep.subr.mxu0 0.0
      %610 = vmatpush1.msra.mxu0 0.0
      %611 = vmatprep.subr.mxu0 0.0
      %612 = vmatpush1.msra.mxu0 0.0
      %613 = vmatprep.subr.mxu0 0.0
      %614 = vmatpush1.msra.mxu0 0.0
      %615 = vmatprep.subr.mxu0 0.0
      %616 = vmatpush1.msra.mxu0 0.0
      %617 = vmatprep.subr.mxu0 0.0
      %618 = vmatpush1.msra.mxu0 0.0
      %619 = vmatprep.subr.mxu0 0.0
      %620 = vmatpush1.msra.mxu0 0.0
      %621 = vmatprep.subr.mxu0 0.0
      %622 = vmatpush1.msra.mxu0 0.0
      %623 = vmatprep.subr.mxu0 0.0
      %624 = vmatpush1.msra.mxu0 0.0
      %625 = vmatprep.subr.mxu0 0.0
      %626 = vmatpush1.msra.mxu0 0.0
      %627 = vmatprep.subr.mxu0 0.0
      %628 = vmatpush1.msra.mxu0 0.0
      %629 = vmatprep.subr.mxu0 0.0
      %630 = vmatpush1.msra.mxu0 %v597
      %631 = vmatprep.subr.mxu0 0.0
      %632 = vmatpush2.msra.mxu0 0.0
      %633 = vmatprep.subr.mxu0 0.0
      %634 = vmatpush2.msra.mxu0 0.0
      %635 = vmatprep.subr.mxu0 0.0
      %636 = vmatpush2.msra.mxu0 0.0
      %637 = vmatprep.subr.mxu0 0.0
      %638 = vmatpush2.msra.mxu0 0.0
      %639 = vmatprep.subr.mxu0 0.0
      %640 = vmatpush2.msra.mxu0 0.0
      %641 = vmatprep.subr.mxu0 0.0
      %642 = vmatpush2.msra.mxu0 0.0
      %643 = vmatprep.subr.mxu0 0.0
      %644 = vmatpush2.msra.mxu0 0.0
      %645 = vmatprep.subr.mxu0 0.0
      %646 = vmatpush2.msra.mxu0 0.0
      %647 = vmatprep.subr.mxu0 0.0
      %648 = vmatpush2.msra.mxu0 0.0
      %649 = vmatprep.subr.mxu0 0.0
      %650 = vmatpush2.msra.mxu0 0.0
      %651 = vmatprep.subr.mxu0 0.0
      %652 = vmatpush2.msra.mxu0 0.0
      %653 = vmatprep.subr.mxu0 0.0
      %654 = vmatpush2.msra.mxu0 0.0
      %655 = vmatprep.subr.mxu0 0.0
      %656 = vmatpush2.msra.mxu0 0.0
      %657 = vmatprep.subr.mxu0 0.0
      %658 = vmatpush2.msra.mxu0 0.0
      %659 = vmatprep.subr.mxu0 0.0
      %660 = vmatpush2.msra.mxu0 0.0
      %661 = vmatprep.subr.mxu0 0.0
      %662 = vmatpush2.msra.mxu0 0.0
      %663 = vmatprep.mubr.f32.mxu0 0.0
      %664 = vmatmul.mubr.f32.gmra.mxu0 %v594
      %v665 = vpop.f32.mrf.mxu0
      %v666 = vadd.f32 0.0, %v665
      %v667 = vpop.f32.mrf.mxu0
      %668 = vdwg.mxu0
      %v669 = vadd.f32 %v588, %v666
      %s670 = scalar_lea.vmem %s339, 12
      %v671 = vld [vmem:[%s670] sm:$0xf]
      %s672 = scalar_lea.vmem %s2, 32
      %v673 = vld [vmem:[%s672] sm:$0xff]
      %v675 = vsel %vm355, %v673, 0
      %v678 = vsel %vm359, %v671, 0
      %680 = vmatprep.subr.mxu0 0.0
      %681 = vmatpush1.msra.mxu0 0.0
      %682 = vmatprep.subr.mxu0 0.0
      %683 = vmatpush1.msra.mxu0 0.0
      %684 = vmatprep.subr.mxu0 0.0
      %685 = vmatpush1.msra.mxu0 0.0
      %686 = vmatprep.subr.mxu0 0.0
      %687 = vmatpush1.msra.mxu0 0.0
      %688 = vmatprep.subr.mxu0 0.0
      %689 = vmatpush1.msra.mxu0 0.0
      %690 = vmatprep.subr.mxu0 0.0
      %691 = vmatpush1.msra.mxu0 0.0
      %692 = vmatprep.subr.mxu0 0.0
      %693 = vmatpush1.msra.mxu0 0.0
      %694 = vmatprep.subr.mxu0 0.0
      %695 = vmatpush1.msra.mxu0 0.0
      %696 = vmatprep.subr.mxu0 0.0
      %697 = vmatpush1.msra.mxu0 0.0
      %698 = vmatprep.subr.mxu0 0.0
      %699 = vmatpush1.msra.mxu0 0.0
      %700 = vmatprep.subr.mxu0 0.0
      %701 = vmatpush1.msra.mxu0 0.0
      %702 = vmatprep.subr.mxu0 0.0
      %703 = vmatpush1.msra.mxu0 0.0
      %704 = vmatprep.subr.mxu0 0.0
      %705 = vmatpush1.msra.mxu0 0.0
      %706 = vmatprep.subr.mxu0 0.0
      %707 = vmatpush1.msra.mxu0 0.0
      %708 = vmatprep.subr.mxu0 0.0
      %709 = vmatpush1.msra.mxu0 0.0
      %710 = vmatprep.subr.mxu0 0.0
      %711 = vmatpush1.msra.mxu0 %v678
      %712 = vmatprep.subr.mxu0 0.0
      %713 = vmatpush2.msra.mxu0 0.0
      %714 = vmatprep.subr.mxu0 0.0
      %715 = vmatpush2.msra.mxu0 0.0
      %716 = vmatprep.subr.mxu0 0.0
      %717 = vmatpush2.msra.mxu0 0.0
      %718 = vmatprep.subr.mxu0 0.0
      %719 = vmatpush2.msra.mxu0 0.0
      %720 = vmatprep.subr.mxu0 0.0
      %721 = vmatpush2.msra.mxu0 0.0
      %722 = vmatprep.subr.mxu0 0.0
      %723 = vmatpush2.msra.mxu0 0.0
      %724 = vmatprep.subr.mxu0 0.0
      %725 = vmatpush2.msra.mxu0 0.0
      %726 = vmatprep.subr.mxu0 0.0
      %727 = vmatpush2.msra.mxu0 0.0
      %728 = vmatprep.subr.mxu0 0.0
      %729 = vmatpush2.msra.mxu0 0.0
      %730 = vmatprep.subr.mxu0 0.0
      %731 = vmatpush2.msra.mxu0 0.0
      %732 = vmatprep.subr.mxu0 0.0
      %733 = vmatpush2.msra.mxu0 0.0
      %734 = vmatprep.subr.mxu0 0.0
      %735 = vmatpush2.msra.mxu0 0.0
      %736 = vmatprep.subr.mxu0 0.0
      %737 = vmatpush2.msra.mxu0 0.0
      %738 = vmatprep.subr.mxu0 0.0
      %739 = vmatpush2.msra.mxu0 0.0
      %740 = vmatprep.subr.mxu0 0.0
      %741 = vmatpush2.msra.mxu0 0.0
      %742 = vmatprep.subr.mxu0 0.0
      %743 = vmatpush2.msra.mxu0 0.0
      %744 = vmatprep.mubr.f32.mxu0 0.0
      %745 = vmatmul.mubr.f32.gmra.mxu0 %v675
      %v746 = vpop.f32.mrf.mxu0
      %v747 = vadd.f32 0.0, %v746
      %v748 = vpop.f32.mrf.mxu0
      %749 = vdwg.mxu0
      %v750 = vadd.f32 %v669, %v747
      %s751 = scalar_lea.vmem %s2, 40
      %v752 = vld [vmem:[%s751] sm:$0xff]
      %753 = vrot.lane.b32.xlu0 %v590, 127
      %v754 = vpop.permute.xlu0 %753
      %v756 = vsel %vm355, %v752, 0
      %v758 = vsel %vm359, %v754, 0
      %760 = vmatprep.subr.mxu0 0.0
      %761 = vmatpush1.msra.mxu0 0.0
      %762 = vmatprep.subr.mxu0 0.0
      %763 = vmatpush1.msra.mxu0 0.0
      %764 = vmatprep.subr.mxu0 0.0
      %765 = vmatpush1.msra.mxu0 0.0
      %766 = vmatprep.subr.mxu0 0.0
      %767 = vmatpush1.msra.mxu0 0.0
      %768 = vmatprep.subr.mxu0 0.0
      %769 = vmatpush1.msra.mxu0 0.0
      %770 = vmatprep.subr.mxu0 0.0
      %771 = vmatpush1.msra.mxu0 0.0
      %772 = vmatprep.subr.mxu0 0.0
      %773 = vmatpush1.msra.mxu0 0.0
      %774 = vmatprep.subr.mxu0 0.0
      %775 = vmatpush1.msra.mxu0 0.0
      %776 = vmatprep.subr.mxu0 0.0
      %777 = vmatpush1.msra.mxu0 0.0
      %778 = vmatprep.subr.mxu0 0.0
      %779 = vmatpush1.msra.mxu0 0.0
      %780 = vmatprep.subr.mxu0 0.0
      %781 = vmatpush1.msra.mxu0 0.0
      %782 = vmatprep.subr.mxu0 0.0
      %783 = vmatpush1.msra.mxu0 0.0
      %784 = vmatprep.subr.mxu0 0.0
      %785 = vmatpush1.msra.mxu0 0.0
      %786 = vmatprep.subr.mxu0 0.0
      %787 = vmatpush1.msra.mxu0 0.0
      %788 = vmatprep.subr.mxu0 0.0
      %789 = vmatpush1.msra.mxu0 0.0
      %790 = vmatprep.subr.mxu0 0.0
      %791 = vmatpush1.msra.mxu0 %v758
      %792 = vmatprep.subr.mxu0 0.0
      %793 = vmatpush2.msra.mxu0 0.0
      %794 = vmatprep.subr.mxu0 0.0
      %795 = vmatpush2.msra.mxu0 0.0
      %796 = vmatprep.subr.mxu0 0.0
      %797 = vmatpush2.msra.mxu0 0.0
      %798 = vmatprep.subr.mxu0 0.0
      %799 = vmatpush2.msra.mxu0 0.0
      %800 = vmatprep.subr.mxu0 0.0
      %801 = vmatpush2.msra.mxu0 0.0
      %802 = vmatprep.subr.mxu0 0.0
      %803 = vmatpush2.msra.mxu0 0.0
      %804 = vmatprep.subr.mxu0 0.0
      %805 = vmatpush2.msra.mxu0 0.0
      %806 = vmatprep.subr.mxu0 0.0
      %807 = vmatpush2.msra.mxu0 0.0
      %808 = vmatprep.subr.mxu0 0.0
      %809 = vmatpush2.msra.mxu0 0.0
      %810 = vmatprep.subr.mxu0 0.0
      %811 = vmatpush2.msra.mxu0 0.0
      %812 = vmatprep.subr.mxu0 0.0
      %813 = vmatpush2.msra.mxu0 0.0
      %814 = vmatprep.subr.mxu0 0.0
      %815 = vmatpush2.msra.mxu0 0.0
      %816 = vmatprep.subr.mxu0 0.0
      %817 = vmatpush2.msra.mxu0 0.0
      %818 = vmatprep.subr.mxu0 0.0
      %819 = vmatpush2.msra.mxu0 0.0
      %820 = vmatprep.subr.mxu0 0.0
      %821 = vmatpush2.msra.mxu0 0.0
      %822 = vmatprep.subr.mxu0 0.0
      %823 = vmatpush2.msra.mxu0 0.0
      %824 = vmatprep.mubr.f32.mxu0 0.0
      %825 = vmatmul.mubr.f32.gmra.mxu0 %v756
      %v826 = vpop.f32.mrf.mxu0
      %v827 = vadd.f32 0.0, %v826
      %v828 = vpop.f32.mrf.mxu0
      %829 = vdwg.mxu0
      %v830 = vadd.f32 %v750, %v827
      %s831 = scalar_lea.vmem %s2, 48
      %v832 = vld [vmem:[%s831] sm:$0xff]
      %833 = vrot.lane.b32.xlu0 %v349, 119
      %v834 = vpop.permute.xlu0 %833
      %v836 = vsel %vm355, %v832, 0
      %v838 = vsel %vm359, %v834, 0
      %840 = vmatprep.subr.mxu0 0.0
      %841 = vmatpush1.msra.mxu0 0.0
      %842 = vmatprep.subr.mxu0 0.0
      %843 = vmatpush1.msra.mxu0 0.0
      %844 = vmatprep.subr.mxu0 0.0
      %845 = vmatpush1.msra.mxu0 0.0
      %846 = vmatprep.subr.mxu0 0.0
      %847 = vmatpush1.msra.mxu0 0.0
      %848 = vmatprep.subr.mxu0 0.0
      %849 = vmatpush1.msra.mxu0 0.0
      %850 = vmatprep.subr.mxu0 0.0
      %851 = vmatpush1.msra.mxu0 0.0
      %852 = vmatprep.subr.mxu0 0.0
      %853 = vmatpush1.msra.mxu0 0.0
      %854 = vmatprep.subr.mxu0 0.0
      %855 = vmatpush1.msra.mxu0 0.0
      %856 = vmatprep.subr.mxu0 0.0
      %857 = vmatpush1.msra.mxu0 0.0
      %858 = vmatprep.subr.mxu0 0.0
      %859 = vmatpush1.msra.mxu0 0.0
      %860 = vmatprep.subr.mxu0 0.0
      %861 = vmatpush1.msra.mxu0 0.0
      %862 = vmatprep.subr.mxu0 0.0
      %863 = vmatpush1.msra.mxu0 0.0
      %864 = vmatprep.subr.mxu0 0.0
      %865 = vmatpush1.msra.mxu0 0.0
      %866 = vmatprep.subr.mxu0 0.0
      %867 = vmatpush1.msra.mxu0 0.0
      %868 = vmatprep.subr.mxu0 0.0
      %869 = vmatpush1.msra.mxu0 0.0
      %870 = vmatprep.subr.mxu0 0.0
      %871 = vmatpush1.msra.mxu0 %v838
      %872 = vmatprep.subr.mxu0 0.0
      %873 = vmatpush2.msra.mxu0 0.0
      %874 = vmatprep.subr.mxu0 0.0
      %875 = vmatpush2.msra.mxu0 0.0
      %876 = vmatprep.subr.mxu0 0.0
      %877 = vmatpush2.msra.mxu0 0.0
      %878 = vmatprep.subr.mxu0 0.0
      %879 = vmatpush2.msra.mxu0 0.0
      %880 = vmatprep.subr.mxu0 0.0
      %881 = vmatpush2.msra.mxu0 0.0
      %882 = vmatprep.subr.mxu0 0.0
      %883 = vmatpush2.msra.mxu0 0.0
      %884 = vmatprep.subr.mxu0 0.0
      %885 = vmatpush2.msra.mxu0 0.0
      %886 = vmatprep.subr.mxu0 0.0
      %887 = vmatpush2.msra.mxu0 0.0
      %888 = vmatprep.subr.mxu0 0.0
      %889 = vmatpush2.msra.mxu0 0.0
      %890 = vmatprep.subr.mxu0 0.0
      %891 = vmatpush2.msra.mxu0 0.0
      %892 = vmatprep.subr.mxu0 0.0
      %893 = vmatpush2.msra.mxu0 0.0
      %894 = vmatprep.subr.mxu0 0.0
      %895 = vmatpush2.msra.mxu0 0.0
      %896 = vmatprep.subr.mxu0 0.0
      %897 = vmatpush2.msra.mxu0 0.0
      %898 = vmatprep.subr.mxu0 0.0
      %899 = vmatpush2.msra.mxu0 0.0
      %900 = vmatprep.subr.mxu0 0.0
      %901 = vmatpush2.msra.mxu0 0.0
      %902 = vmatprep.subr.mxu0 0.0
      %903 = vmatpush2.msra.mxu0 0.0
      %904 = vmatprep.mubr.f32.mxu0 0.0
      %905 = vmatmul.mubr.f32.gmra.mxu0 %v836
      %v906 = vpop.f32.mrf.mxu0
      %v907 = vadd.f32 0.0, %v906
      %v908 = vpop.f32.mrf.mxu0
      %909 = vdwg.mxu0
      %v910 = vadd.f32 %v830, %v907
      %s911 = scalar_lea.vmem %s2, 56
      %v912 = vld [vmem:[%s911] sm:$0xff]
      %913 = vrot.lane.b32.xlu0 %v352, 119
      %v914 = vpop.permute.xlu0 %913
      %v916 = vsel %vm355, %v912, 0
      %v918 = vsel %vm359, %v914, 0
      %920 = vmatprep.subr.mxu0 0.0
      %921 = vmatpush1.msra.mxu0 0.0
      %922 = vmatprep.subr.mxu0 0.0
      %923 = vmatpush1.msra.mxu0 0.0
      %924 = vmatprep.subr.mxu0 0.0
      %925 = vmatpush1.msra.mxu0 0.0
      %926 = vmatprep.subr.mxu0 0.0
      %927 = vmatpush1.msra.mxu0 0.0
      %928 = vmatprep.subr.mxu0 0.0
      %929 = vmatpush1.msra.mxu0 0.0
      %930 = vmatprep.subr.mxu0 0.0
      %931 = vmatpush1.msra.mxu0 0.0
      %932 = vmatprep.subr.mxu0 0.0
      %933 = vmatpush1.msra.mxu0 0.0
      %934 = vmatprep.subr.mxu0 0.0
      %935 = vmatpush1.msra.mxu0 0.0
      %936 = vmatprep.subr.mxu0 0.0
      %937 = vmatpush1.msra.mxu0 0.0
      %938 = vmatprep.subr.mxu0 0.0
      %939 = vmatpush1.msra.mxu0 0.0
      %940 = vmatprep.subr.mxu0 0.0
      %941 = vmatpush1.msra.mxu0 0.0
      %942 = vmatprep.subr.mxu0 0.0
      %943 = vmatpush1.msra.mxu0 0.0
      %944 = vmatprep.subr.mxu0 0.0
      %945 = vmatpush1.msra.mxu0 0.0
      %946 = vmatprep.subr.mxu0 0.0
      %947 = vmatpush1.msra.mxu0 0.0
      %948 = vmatprep.subr.mxu0 0.0
      %949 = vmatpush1.msra.mxu0 0.0
      %950 = vmatprep.subr.mxu0 0.0
      %951 = vmatpush1.msra.mxu0 %v918
      %952 = vmatprep.subr.mxu0 0.0
      %953 = vmatpush2.msra.mxu0 0.0
      %954 = vmatprep.subr.mxu0 0.0
      %955 = vmatpush2.msra.mxu0 0.0
      %956 = vmatprep.subr.mxu0 0.0
      %957 = vmatpush2.msra.mxu0 0.0
      %958 = vmatprep.subr.mxu0 0.0
      %959 = vmatpush2.msra.mxu0 0.0
      %960 = vmatprep.subr.mxu0 0.0
      %961 = vmatpush2.msra.mxu0 0.0
      %962 = vmatprep.subr.mxu0 0.0
      %963 = vmatpush2.msra.mxu0 0.0
      %964 = vmatprep.subr.mxu0 0.0
      %965 = vmatpush2.msra.mxu0 0.0
      %966 = vmatprep.subr.mxu0 0.0
      %967 = vmatpush2.msra.mxu0 0.0
      %968 = vmatprep.subr.mxu0 0.0
      %969 = vmatpush2.msra.mxu0 0.0
      %970 = vmatprep.subr.mxu0 0.0
      %971 = vmatpush2.msra.mxu0 0.0
      %972 = vmatprep.subr.mxu0 0.0
      %973 = vmatpush2.msra.mxu0 0.0
      %974 = vmatprep.subr.mxu0 0.0
      %975 = vmatpush2.msra.mxu0 0.0
      %976 = vmatprep.subr.mxu0 0.0
      %977 = vmatpush2.msra.mxu0 0.0
      %978 = vmatprep.subr.mxu0 0.0
      %979 = vmatpush2.msra.mxu0 0.0
      %980 = vmatprep.subr.mxu0 0.0
      %981 = vmatpush2.msra.mxu0 0.0
      %982 = vmatprep.subr.mxu0 0.0
      %983 = vmatpush2.msra.mxu0 0.0
      %984 = vmatprep.mubr.f32.mxu0 0.0
      %985 = vmatmul.mubr.f32.gmra.mxu0 %v916
      %v986 = vpop.f32.mrf.mxu0
      %v987 = vadd.f32 0.0, %v986
      %v988 = vpop.f32.mrf.mxu0
      %989 = vdwg.mxu0
      %v990 = vadd.f32 %v910, %v987
      %s991 = scalar_lea.vmem %s2, 64
      %v992 = vld [vmem:[%s991] sm:$0xff]
      %993 = vrot.lane.b32.xlu0 %v349, 118
      %v994 = vpop.permute.xlu0 %993
      %v996 = vsel %vm355, %v992, 0
      %v998 = vsel %vm359, %v994, 0
      %1000 = vmatprep.subr.mxu0 0.0
      %1001 = vmatpush1.msra.mxu0 0.0
      %1002 = vmatprep.subr.mxu0 0.0
      %1003 = vmatpush1.msra.mxu0 0.0
      %1004 = vmatprep.subr.mxu0 0.0
      %1005 = vmatpush1.msra.mxu0 0.0
      %1006 = vmatprep.subr.mxu0 0.0
      %1007 = vmatpush1.msra.mxu0 0.0
      %1008 = vmatprep.subr.mxu0 0.0
      %1009 = vmatpush1.msra.mxu0 0.0
      %1010 = vmatprep.subr.mxu0 0.0
      %1011 = vmatpush1.msra.mxu0 0.0
      %1012 = vmatprep.subr.mxu0 0.0
      %1013 = vmatpush1.msra.mxu0 0.0
      %1014 = vmatprep.subr.mxu0 0.0
      %1015 = vmatpush1.msra.mxu0 0.0
      %1016 = vmatprep.subr.mxu0 0.0
      %1017 = vmatpush1.msra.mxu0 0.0
      %1018 = vmatprep.subr.mxu0 0.0
      %1019 = vmatpush1.msra.mxu0 0.0
      %1020 = vmatprep.subr.mxu0 0.0
      %1021 = vmatpush1.msra.mxu0 0.0
      %1022 = vmatprep.subr.mxu0 0.0
      %1023 = vmatpush1.msra.mxu0 0.0
      %1024 = vmatprep.subr.mxu0 0.0
      %1025 = vmatpush1.msra.mxu0 0.0
      %1026 = vmatprep.subr.mxu0 0.0
      %1027 = vmatpush1.msra.mxu0 0.0
      %1028 = vmatprep.subr.mxu0 0.0
      %1029 = vmatpush1.msra.mxu0 0.0
      %1030 = vmatprep.subr.mxu0 0.0
      %1031 = vmatpush1.msra.mxu0 %v998
      %1032 = vmatprep.subr.mxu0 0.0
      %1033 = vmatpush2.msra.mxu0 0.0
      %1034 = vmatprep.subr.mxu0 0.0
      %1035 = vmatpush2.msra.mxu0 0.0
      %1036 = vmatprep.subr.mxu0 0.0
      %1037 = vmatpush2.msra.mxu0 0.0
      %1038 = vmatprep.subr.mxu0 0.0
      %1039 = vmatpush2.msra.mxu0 0.0
      %1040 = vmatprep.subr.mxu0 0.0
      %1041 = vmatpush2.msra.mxu0 0.0
      %1042 = vmatprep.subr.mxu0 0.0
      %1043 = vmatpush2.msra.mxu0 0.0
      %1044 = vmatprep.subr.mxu0 0.0
      %1045 = vmatpush2.msra.mxu0 0.0
      %1046 = vmatprep.subr.mxu0 0.0
      %1047 = vmatpush2.msra.mxu0 0.0
      %1048 = vmatprep.subr.mxu0 0.0
      %1049 = vmatpush2.msra.mxu0 0.0
      %1050 = vmatprep.subr.mxu0 0.0
      %1051 = vmatpush2.msra.mxu0 0.0
      %1052 = vmatprep.subr.mxu0 0.0
      %1053 = vmatpush2.msra.mxu0 0.0
      %1054 = vmatprep.subr.mxu0 0.0
      %1055 = vmatpush2.msra.mxu0 0.0
      %1056 = vmatprep.subr.mxu0 0.0
      %1057 = vmatpush2.msra.mxu0 0.0
      %1058 = vmatprep.subr.mxu0 0.0
      %1059 = vmatpush2.msra.mxu0 0.0
      %1060 = vmatprep.subr.mxu0 0.0
      %1061 = vmatpush2.msra.mxu0 0.0
      %1062 = vmatprep.subr.mxu0 0.0
      %1063 = vmatpush2.msra.mxu0 0.0
      %1064 = vmatprep.mubr.f32.mxu0 0.0
      %1065 = vmatmul.mubr.f32.gmra.mxu0 %v996
      %v1066 = vpop.f32.mrf.mxu0
      %v1067 = vadd.f32 0.0, %v1066
      %v1068 = vpop.f32.mrf.mxu0
      %1069 = vdwg.mxu0
      %v1070 = vadd.f32 %v990, %v1067
      %v1071 = vld [vmem:[%s7] sm:$0xff]
      %1073 = vset.pattern.permute.xlu0 0
      %1074 = vperm.xlu0 %1073, %v1071
      %v1075 = vpop.permute.xlu0 %1074
      %v1077 = vadd.f32 %v1070, %v1075
      %v1079 = vlaneseq
      %v1080 = vshrl.u32 %v1079, 7
      %v1081 = vsub.s32 0, %v1080
      %v1082 = vrot.slane %v348, %v1081
      %v1084 = vmul.f32 %v1077, %v1082
      %v1085 = vld [vmem:[%s3] sm:$0xff]
      %v1086 = vld [vmem:[%s343] sm:$0xf]
      %s1087 = scalar_lea.vmem %s7, 8
      %v1088 = vld [vmem:[%s1087] sm:$0xff]
      %1090 = vset.pattern.permute.xlu0 0
      %1091 = vperm.xlu0 %1090, %v1088
      %v1092 = vpop.permute.xlu0 %1091
      %v1095 = vsel %vm355, %v1085, 0
      %v1098 = vsel %vm359, %v1086, 0
      %1100 = vmatprep.subr.mxu0 0.0
      %1101 = vmatpush1.msra.mxu0 0.0
      %1102 = vmatprep.subr.mxu0 0.0
      %1103 = vmatpush1.msra.mxu0 0.0
      %1104 = vmatprep.subr.mxu0 0.0
      %1105 = vmatpush1.msra.mxu0 0.0
      %1106 = vmatprep.subr.mxu0 0.0
      %1107 = vmatpush1.msra.mxu0 0.0
      %1108 = vmatprep.subr.mxu0 0.0
      %1109 = vmatpush1.msra.mxu0 0.0
      %1110 = vmatprep.subr.mxu0 0.0
      %1111 = vmatpush1.msra.mxu0 0.0
      %1112 = vmatprep.subr.mxu0 0.0
      %1113 = vmatpush1.msra.mxu0 0.0
      %1114 = vmatprep.subr.mxu0 0.0
      %1115 = vmatpush1.msra.mxu0 0.0
      %1116 = vmatprep.subr.mxu0 0.0
      %1117 = vmatpush1.msra.mxu0 0.0
      %1118 = vmatprep.subr.mxu0 0.0
      %1119 = vmatpush1.msra.mxu0 0.0
      %1120 = vmatprep.subr.mxu0 0.0
      %1121 = vmatpush1.msra.mxu0 0.0
      %1122 = vmatprep.subr.mxu0 0.0
      %1123 = vmatpush1.msra.mxu0 0.0
      %1124 = vmatprep.subr.mxu0 0.0
      %1125 = vmatpush1.msra.mxu0 0.0
      %1126 = vmatprep.subr.mxu0 0.0
      %1127 = vmatpush1.msra.mxu0 0.0
      %1128 = vmatprep.subr.mxu0 0.0
      %1129 = vmatpush1.msra.mxu0 0.0
      %1130 = vmatprep.subr.mxu0 0.0
      %1131 = vmatpush1.msra.mxu0 %v1098
      %1132 = vmatprep.subr.mxu0 0.0
      %1133 = vmatpush2.msra.mxu0 0.0
      %1134 = vmatprep.subr.mxu0 0.0
      %1135 = vmatpush2.msra.mxu0 0.0
      %1136 = vmatprep.subr.mxu0 0.0
      %1137 = vmatpush2.msra.mxu0 0.0
      %1138 = vmatprep.subr.mxu0 0.0
      %1139 = vmatpush2.msra.mxu0 0.0
      %1140 = vmatprep.subr.mxu0 0.0
      %1141 = vmatpush2.msra.mxu0 0.0
      %1142 = vmatprep.subr.mxu0 0.0
      %1143 = vmatpush2.msra.mxu0 0.0
      %1144 = vmatprep.subr.mxu0 0.0
      %1145 = vmatpush2.msra.mxu0 0.0
      %1146 = vmatprep.subr.mxu0 0.0
      %1147 = vmatpush2.msra.mxu0 0.0
      %1148 = vmatprep.subr.mxu0 0.0
      %1149 = vmatpush2.msra.mxu0 0.0
      %1150 = vmatprep.subr.mxu0 0.0
      %1151 = vmatpush2.msra.mxu0 0.0
      %1152 = vmatprep.subr.mxu0 0.0
      %1153 = vmatpush2.msra.mxu0 0.0
      %1154 = vmatprep.subr.mxu0 0.0
      %1155 = vmatpush2.msra.mxu0 0.0
      %1156 = vmatprep.subr.mxu0 0.0
      %1157 = vmatpush2.msra.mxu0 0.0
      %1158 = vmatprep.subr.mxu0 0.0
      %1159 = vmatpush2.msra.mxu0 0.0
      %1160 = vmatprep.subr.mxu0 0.0
      %1161 = vmatpush2.msra.mxu0 0.0
      %1162 = vmatprep.subr.mxu0 0.0
      %1163 = vmatpush2.msra.mxu0 0.0
      %1164 = vmatprep.mubr.f32.mxu0 0.0
      %1165 = vmatmul.mubr.f32.gmra.mxu0 %v1095
      %v1166 = vpop.f32.mrf.mxu0
      %v1167 = vadd.f32 %v1092, %v1166
      %v1168 = vpop.f32.mrf.mxu0
      %1169 = vdwg.mxu0
      %v1170 = vmul.f32 %v1167, %v1082
      %v1171 = vld [vmem:[%s4] sm:$0xff]
      %v1172 = vld [vmem:[%s4 + $0x8] sm:$0xff]
      %v1173 = vld [vmem:[%s4 + $0x10] sm:$0xff]
      %v1174 = vld [vmem:[%s4 + $0x18] sm:$0xff]
      %v1175 = vld [vmem:[%s4 + $0x20] sm:$0xff]
      %v1176 = vld [vmem:[%s4 + $0x28] sm:$0xff]
      %v1177 = vld [vmem:[%s4 + $0x30] sm:$0xff]
      %v1178 = vld [vmem:[%s4 + $0x38] sm:$0xff]
      %v1179 = vld [vmem:[%s4 + $0x40] sm:$0xff]
      %s1180 = scalar_lea.vmem %s4, 72
      %v1181 = vld [vmem:[%s1180] sm:$0xff]
      %v1182 = vld [vmem:[%s1180 + $0x8] sm:$0xff]
      %v1183 = vld [vmem:[%s1180 + $0x10] sm:$0xff]
      %v1184 = vld [vmem:[%s1180 + $0x18] sm:$0xff]
      %v1185 = vld [vmem:[%s1180 + $0x20] sm:$0xff]
      %v1186 = vld [vmem:[%s1180 + $0x28] sm:$0xff]
      %v1187 = vld [vmem:[%s1180 + $0x30] sm:$0xff]
      %v1188 = vld [vmem:[%s1180 + $0x38] sm:$0xff]
      %v1189 = vld [vmem:[%s1180 + $0x40] sm:$0xff]
      %s1190 = scalar_lea.vmem %s4, 144
      %v1191 = vld [vmem:[%s1190] sm:$0xff]
      %v1192 = vld [vmem:[%s1190 + $0x8] sm:$0xff]
      %v1193 = vld [vmem:[%s1190 + $0x10] sm:$0xff]
      %v1194 = vld [vmem:[%s1190 + $0x18] sm:$0xff]
      %v1195 = vld [vmem:[%s1190 + $0x20] sm:$0xff]
      %v1196 = vld [vmem:[%s1190 + $0x28] sm:$0xff]
      %v1197 = vld [vmem:[%s1190 + $0x30] sm:$0xff]
      %v1198 = vld [vmem:[%s1190 + $0x38] sm:$0xff]
      %v1199 = vld [vmem:[%s1190 + $0x40] sm:$0xff]
      %v1200 = vld [vmem:[%s5] sm:$0xff]
      %1202 = vset.pattern.permute.xlu0 0
      %1203 = vperm.xlu0 %1202, %v1200
      %v1204 = vpop.permute.xlu0 %1203
      %v1206 = vmul.f32 %v1084, %v1204
      %v1207 = vld [vmem:[%s6] sm:$0xff]
      %1209 = vset.pattern.permute.xlu0 0
      %1210 = vperm.xlu0 %1209, %v1207
      %v1211 = vpop.permute.xlu0 %1210
      %v1213 = vadd.f32 %v1206, %v1211
      %v1214 = vmax.f32 %v1213, 0.0
      %v1215 = vmul.f32 %v1214, %v1082
      %1217 = vrot.lane.b32.xlu0 %v1215, 10
      %v1218 = vpop.permute.xlu0 %1217
      %vm1220 = vcmask 80896
      %v1221 = vsel %vm1220, 0.0, %v1218
      %vm1222 = vcmask 670720
      %v1223 = vsel %vm1222, %v1221, 0.0
      %1225 = vrot.lane.b32.xlu0 %v1223, 127
      %v1226 = vpop.permute.xlu0 %1225
      %vm1228 = vcmask 64512
      %v1230 = vsel %vm1228, %v1172, 0
      %1232 = vmatprep.subr.mxu0 0.0
      %1233 = vmatpush1.msra.mxu0 0.0
      %1234 = vmatprep.subr.mxu0 0.0
      %1235 = vmatpush1.msra.mxu0 0.0
      %1236 = vmatprep.subr.mxu0 0.0
      %1237 = vmatpush1.msra.mxu0 0.0
      %1238 = vmatprep.subr.mxu0 0.0
      %1239 = vmatpush1.msra.mxu0 0.0
      %1240 = vmatprep.subr.mxu0 0.0
      %1241 = vmatpush1.msra.mxu0 0.0
      %1242 = vmatprep.subr.mxu0 0.0
      %1243 = vmatpush1.msra.mxu0 0.0
      %1244 = vmatprep.subr.mxu0 0.0
      %1245 = vmatpush1.msra.mxu0 0.0
      %1246 = vmatprep.subr.mxu0 0.0
      %1247 = vmatpush1.msra.mxu0 0.0
      %1248 = vmatprep.subr.mxu0 0.0
      %1249 = vmatpush1.msra.mxu0 0.0
      %1250 = vmatprep.subr.mxu0 0.0
      %1251 = vmatpush1.msra.mxu0 0.0
      %1252 = vmatprep.subr.mxu0 0.0
      %1253 = vmatpush1.msra.mxu0 0.0
      %1254 = vmatprep.subr.mxu0 0.0
      %1255 = vmatpush1.msra.mxu0 0.0
      %1256 = vmatprep.subr.mxu0 0.0
      %1257 = vmatpush1.msra.mxu0 0.0
      %1258 = vmatprep.subr.mxu0 0.0
      %1259 = vmatpush1.msra.mxu0 0.0
      %1260 = vmatprep.subr.mxu0 0.0
      %1261 = vmatpush1.msra.mxu0 0.0
      %1262 = vmatprep.subr.mxu0 0.0
      %1263 = vmatpush1.msra.mxu0 %v1226
      %1264 = vmatprep.subr.mxu0 0.0
      %1265 = vmatpush2.msra.mxu0 0.0
      %1266 = vmatprep.subr.mxu0 0.0
      %1267 = vmatpush2.msra.mxu0 0.0
      %1268 = vmatprep.subr.mxu0 0.0
      %1269 = vmatpush2.msra.mxu0 0.0
      %1270 = vmatprep.subr.mxu0 0.0
      %1271 = vmatpush2.msra.mxu0 0.0
      %1272 = vmatprep.subr.mxu0 0.0
      %1273 = vmatpush2.msra.mxu0 0.0
      %1274 = vmatprep.subr.mxu0 0.0
      %1275 = vmatpush2.msra.mxu0 0.0
      %1276 = vmatprep.subr.mxu0 0.0
      %1277 = vmatpush2.msra.mxu0 0.0
      %1278 = vmatprep.subr.mxu0 0.0
      %1279 = vmatpush2.msra.mxu0 0.0
      %1280 = vmatprep.subr.mxu0 0.0
      %1281 = vmatpush2.msra.mxu0 0.0
      %1282 = vmatprep.subr.mxu0 0.0
      %1283 = vmatpush2.msra.mxu0 0.0
      %1284 = vmatprep.subr.mxu0 0.0
      %1285 = vmatpush2.msra.mxu0 0.0
      %1286 = vmatprep.subr.mxu0 0.0
      %1287 = vmatpush2.msra.mxu0 0.0
      %1288 = vmatprep.subr.mxu0 0.0
      %1289 = vmatpush2.msra.mxu0 0.0
      %1290 = vmatprep.subr.mxu0 0.0
      %1291 = vmatpush2.msra.mxu0 0.0
      %1292 = vmatprep.subr.mxu0 0.0
      %1293 = vmatpush2.msra.mxu0 0.0
      %1294 = vmatprep.subr.mxu0 0.0
      %1295 = vmatpush2.msra.mxu0 0.0
      %1296 = vmatprep.mubr.f32.mxu0 0.0
      %1297 = vmatmul.mubr.f32.gmra.mxu0 %v1230
      %v1298 = vpop.f32.mrf.mxu0
      %v1299 = vadd.f32 0.0, %v1298
      %v1300 = vpop.f32.mrf.mxu0
      %1301 = vdwg.mxu0
      %v1303 = vsel %vm1228, %v1171, 0
      %1305 = vmatprep.subr.mxu0 0.0
      %1306 = vmatpush1.msra.mxu0 0.0
      %1307 = vmatprep.subr.mxu0 0.0
      %1308 = vmatpush1.msra.mxu0 0.0
      %1309 = vmatprep.subr.mxu0 0.0
      %1310 = vmatpush1.msra.mxu0 0.0
      %1311 = vmatprep.subr.mxu0 0.0
      %1312 = vmatpush1.msra.mxu0 0.0
      %1313 = vmatprep.subr.mxu0 0.0
      %1314 = vmatpush1.msra.mxu0 0.0
      %1315 = vmatprep.subr.mxu0 0.0
      %1316 = vmatpush1.msra.mxu0 0.0
      %1317 = vmatprep.subr.mxu0 0.0
      %1318 = vmatpush1.msra.mxu0 0.0
      %1319 = vmatprep.subr.mxu0 0.0
      %1320 = vmatpush1.msra.mxu0 0.0
      %1321 = vmatprep.subr.mxu0 0.0
      %1322 = vmatpush1.msra.mxu0 0.0
      %1323 = vmatprep.subr.mxu0 0.0
      %1324 = vmatpush1.msra.mxu0 0.0
      %1325 = vmatprep.subr.mxu0 0.0
      %1326 = vmatpush1.msra.mxu0 0.0
      %1327 = vmatprep.subr.mxu0 0.0
      %1328 = vmatpush1.msra.mxu0 0.0
      %1329 = vmatprep.subr.mxu0 0.0
      %1330 = vmatpush1.msra.mxu0 0.0
      %1331 = vmatprep.subr.mxu0 0.0
      %1332 = vmatpush1.msra.mxu0 0.0
      %1333 = vmatprep.subr.mxu0 0.0
      %1334 = vmatpush1.msra.mxu0 0.0
      %1335 = vmatprep.subr.mxu0 0.0
      %1336 = vmatpush1.msra.mxu0 %v1223
      %1337 = vmatprep.subr.mxu0 0.0
      %1338 = vmatpush2.msra.mxu0 0.0
      %1339 = vmatprep.subr.mxu0 0.0
      %1340 = vmatpush2.msra.mxu0 0.0
      %1341 = vmatprep.subr.mxu0 0.0
      %1342 = vmatpush2.msra.mxu0 0.0
      %1343 = vmatprep.subr.mxu0 0.0
      %1344 = vmatpush2.msra.mxu0 0.0
      %1345 = vmatprep.subr.mxu0 0.0
      %1346 = vmatpush2.msra.mxu0 0.0
      %1347 = vmatprep.subr.mxu0 0.0
      %1348 = vmatpush2.msra.mxu0 0.0
      %1349 = vmatprep.subr.mxu0 0.0
      %1350 = vmatpush2.msra.mxu0 0.0
      %1351 = vmatprep.subr.mxu0 0.0
      %1352 = vmatpush2.msra.mxu0 0.0
      %1353 = vmatprep.subr.mxu0 0.0
      %1354 = vmatpush2.msra.mxu0 0.0
      %1355 = vmatprep.subr.mxu0 0.0
      %1356 = vmatpush2.msra.mxu0 0.0
      %1357 = vmatprep.subr.mxu0 0.0
      %1358 = vmatpush2.msra.mxu0 0.0
      %1359 = vmatprep.subr.mxu0 0.0
      %1360 = vmatpush2.msra.mxu0 0.0
      %1361 = vmatprep.subr.mxu0 0.0
      %1362 = vmatpush2.msra.mxu0 0.0
      %1363 = vmatprep.subr.mxu0 0.0
      %1364 = vmatpush2.msra.mxu0 0.0
      %1365 = vmatprep.subr.mxu0 0.0
      %1366 = vmatpush2.msra.mxu0 0.0
      %1367 = vmatprep.subr.mxu0 0.0
      %1368 = vmatpush2.msra.mxu0 0.0
      %1369 = vmatprep.mubr.f32.mxu0 0.0
      %1370 = vmatmul.mubr.f32.gmra.mxu0 %v1303
      %v1371 = vpop.f32.mrf.mxu0
      %v1372 = vadd.f32 %v1299, %v1371
      %v1373 = vpop.f32.mrf.mxu0
      %1374 = vdwg.mxu0
      %1375 = vrot.lane.b32.xlu0 %v1223, 126
      %v1376 = vpop.permute.xlu0 %1375
      %v1379 = vsel %vm1228, %v1173, 0
      %1381 = vmatprep.subr.mxu0 0.0
      %1382 = vmatpush1.msra.mxu0 0.0
      %1383 = vmatprep.subr.mxu0 0.0
      %1384 = vmatpush1.msra.mxu0 0.0
      %1385 = vmatprep.subr.mxu0 0.0
      %1386 = vmatpush1.msra.mxu0 0.0
      %1387 = vmatprep.subr.mxu0 0.0
      %1388 = vmatpush1.msra.mxu0 0.0
      %1389 = vmatprep.subr.mxu0 0.0
      %1390 = vmatpush1.msra.mxu0 0.0
      %1391 = vmatprep.subr.mxu0 0.0
      %1392 = vmatpush1.msra.mxu0 0.0
      %1393 = vmatprep.subr.mxu0 0.0
      %1394 = vmatpush1.msra.mxu0 0.0
      %1395 = vmatprep.subr.mxu0 0.0
      %1396 = vmatpush1.msra.mxu0 0.0
      %1397 = vmatprep.subr.mxu0 0.0
      %1398 = vmatpush1.msra.mxu0 0.0
      %1399 = vmatprep.subr.mxu0 0.0
      %1400 = vmatpush1.msra.mxu0 0.0
      %1401 = vmatprep.subr.mxu0 0.0
      %1402 = vmatpush1.msra.mxu0 0.0
      %1403 = vmatprep.subr.mxu0 0.0
      %1404 = vmatpush1.msra.mxu0 0.0
      %1405 = vmatprep.subr.mxu0 0.0
      %1406 = vmatpush1.msra.mxu0 0.0
      %1407 = vmatprep.subr.mxu0 0.0
      %1408 = vmatpush1.msra.mxu0 0.0
      %1409 = vmatprep.subr.mxu0 0.0
      %1410 = vmatpush1.msra.mxu0 0.0
      %1411 = vmatprep.subr.mxu0 0.0
      %1412 = vmatpush1.msra.mxu0 %v1376
      %1413 = vmatprep.subr.mxu0 0.0
      %1414 = vmatpush2.msra.mxu0 0.0
      %1415 = vmatprep.subr.mxu0 0.0
      %1416 = vmatpush2.msra.mxu0 0.0
      %1417 = vmatprep.subr.mxu0 0.0
      %1418 = vmatpush2.msra.mxu0 0.0
      %1419 = vmatprep.subr.mxu0 0.0
      %1420 = vmatpush2.msra.mxu0 0.0
      %1421 = vmatprep.subr.mxu0 0.0
      %1422 = vmatpush2.msra.mxu0 0.0
      %1423 = vmatprep.subr.mxu0 0.0
      %1424 = vmatpush2.msra.mxu0 0.0
      %1425 = vmatprep.subr.mxu0 0.0
      %1426 = vmatpush2.msra.mxu0 0.0
      %1427 = vmatprep.subr.mxu0 0.0
      %1428 = vmatpush2.msra.mxu0 0.0
      %1429 = vmatprep.subr.mxu0 0.0
      %1430 = vmatpush2.msra.mxu0 0.0
      %1431 = vmatprep.subr.mxu0 0.0
      %1432 = vmatpush2.msra.mxu0 0.0
      %1433 = vmatprep.subr.mxu0 0.0
      %1434 = vmatpush2.msra.mxu0 0.0
      %1435 = vmatprep.subr.mxu0 0.0
      %1436 = vmatpush2.msra.mxu0 0.0
      %1437 = vmatprep.subr.mxu0 0.0
      %1438 = vmatpush2.msra.mxu0 0.0
      %1439 = vmatprep.subr.mxu0 0.0
      %1440 = vmatpush2.msra.mxu0 0.0
      %1441 = vmatprep.subr.mxu0 0.0
      %1442 = vmatpush2.msra.mxu0 0.0
      %1443 = vmatprep.subr.mxu0 0.0
      %1444 = vmatpush2.msra.mxu0 0.0
      %1445 = vmatprep.mubr.f32.mxu0 0.0
      %1446 = vmatmul.mubr.f32.gmra.mxu0 %v1379
      %v1447 = vpop.f32.mrf.mxu0
      %v1448 = vadd.f32 0.0, %v1447
      %v1449 = vpop.f32.mrf.mxu0
      %1450 = vdwg.mxu0
      %v1451 = vadd.f32 %v1372, %v1448
      %1452 = vrot.lane.b32.xlu0 %v1223, 119
      %v1453 = vpop.permute.xlu0 %1452
      %v1456 = vsel %vm1228, %v1174, 0
      %1458 = vmatprep.subr.mxu0 0.0
      %1459 = vmatpush1.msra.mxu0 0.0
      %1460 = vmatprep.subr.mxu0 0.0
      %1461 = vmatpush1.msra.mxu0 0.0
      %1462 = vmatprep.subr.mxu0 0.0
      %1463 = vmatpush1.msra.mxu0 0.0
      %1464 = vmatprep.subr.mxu0 0.0
      %1465 = vmatpush1.msra.mxu0 0.0
      %1466 = vmatprep.subr.mxu0 0.0
      %1467 = vmatpush1.msra.mxu0 0.0
      %1468 = vmatprep.subr.mxu0 0.0
      %1469 = vmatpush1.msra.mxu0 0.0
      %1470 = vmatprep.subr.mxu0 0.0
      %1471 = vmatpush1.msra.mxu0 0.0
      %1472 = vmatprep.subr.mxu0 0.0
      %1473 = vmatpush1.msra.mxu0 0.0
      %1474 = vmatprep.subr.mxu0 0.0
      %1475 = vmatpush1.msra.mxu0 0.0
      %1476 = vmatprep.subr.mxu0 0.0
      %1477 = vmatpush1.msra.mxu0 0.0
      %1478 = vmatprep.subr.mxu0 0.0
      %1479 = vmatpush1.msra.mxu0 0.0
      %1480 = vmatprep.subr.mxu0 0.0
      %1481 = vmatpush1.msra.mxu0 0.0
      %1482 = vmatprep.subr.mxu0 0.0
      %1483 = vmatpush1.msra.mxu0 0.0
      %1484 = vmatprep.subr.mxu0 0.0
      %1485 = vmatpush1.msra.mxu0 0.0
      %1486 = vmatprep.subr.mxu0 0.0
      %1487 = vmatpush1.msra.mxu0 0.0
      %1488 = vmatprep.subr.mxu0 0.0
      %1489 = vmatpush1.msra.mxu0 %v1453
      %1490 = vmatprep.subr.mxu0 0.0
      %1491 = vmatpush2.msra.mxu0 0.0
      %1492 = vmatprep.subr.mxu0 0.0
      %1493 = vmatpush2.msra.mxu0 0.0
      %1494 = vmatprep.subr.mxu0 0.0
      %1495 = vmatpush2.msra.mxu0 0.0
      %1496 = vmatprep.subr.mxu0 0.0
      %1497 = vmatpush2.msra.mxu0 0.0
      %1498 = vmatprep.subr.mxu0 0.0
      %1499 = vmatpush2.msra.mxu0 0.0
      %1500 = vmatprep.subr.mxu0 0.0
      %1501 = vmatpush2.msra.mxu0 0.0
      %1502 = vmatprep.subr.mxu0 0.0
      %1503 = vmatpush2.msra.mxu0 0.0
      %1504 = vmatprep.subr.mxu0 0.0
      %1505 = vmatpush2.msra.mxu0 0.0
      %1506 = vmatprep.subr.mxu0 0.0
      %1507 = vmatpush2.msra.mxu0 0.0
      %1508 = vmatprep.subr.mxu0 0.0
      %1509 = vmatpush2.msra.mxu0 0.0
      %1510 = vmatprep.subr.mxu0 0.0
      %1511 = vmatpush2.msra.mxu0 0.0
      %1512 = vmatprep.subr.mxu0 0.0
      %1513 = vmatpush2.msra.mxu0 0.0
      %1514 = vmatprep.subr.mxu0 0.0
      %1515 = vmatpush2.msra.mxu0 0.0
      %1516 = vmatprep.subr.mxu0 0.0
      %1517 = vmatpush2.msra.mxu0 0.0
      %1518 = vmatprep.subr.mxu0 0.0
      %1519 = vmatpush2.msra.mxu0 0.0
      %1520 = vmatprep.subr.mxu0 0.0
      %1521 = vmatpush2.msra.mxu0 0.0
      %1522 = vmatprep.mubr.f32.mxu0 0.0
      %1523 = vmatmul.mubr.f32.gmra.mxu0 %v1456
      %v1524 = vpop.f32.mrf.mxu0
      %v1525 = vadd.f32 0.0, %v1524
      %v1526 = vpop.f32.mrf.mxu0
      %1527 = vdwg.mxu0
      %v1528 = vadd.f32 %v1451, %v1525
      %1529 = vrot.lane.b32.xlu0 %v1223, 118
      %v1530 = vpop.permute.xlu0 %1529
      %v1533 = vsel %vm1228, %v1175, 0
      %1535 = vmatprep.subr.mxu0 0.0
      %1536 = vmatpush1.msra.mxu0 0.0
      %1537 = vmatprep.subr.mxu0 0.0
      %1538 = vmatpush1.msra.mxu0 0.0
      %1539 = vmatprep.subr.mxu0 0.0
      %1540 = vmatpush1.msra.mxu0 0.0
      %1541 = vmatprep.subr.mxu0 0.0
      %1542 = vmatpush1.msra.mxu0 0.0
      %1543 = vmatprep.subr.mxu0 0.0
      %1544 = vmatpush1.msra.mxu0 0.0
      %1545 = vmatprep.subr.mxu0 0.0
      %1546 = vmatpush1.msra.mxu0 0.0
      %1547 = vmatprep.subr.mxu0 0.0
      %1548 = vmatpush1.msra.mxu0 0.0
      %1549 = vmatprep.subr.mxu0 0.0
      %1550 = vmatpush1.msra.mxu0 0.0
      %1551 = vmatprep.subr.mxu0 0.0
      %1552 = vmatpush1.msra.mxu0 0.0
      %1553 = vmatprep.subr.mxu0 0.0
      %1554 = vmatpush1.msra.mxu0 0.0
      %1555 = vmatprep.subr.mxu0 0.0
      %1556 = vmatpush1.msra.mxu0 0.0
      %1557 = vmatprep.subr.mxu0 0.0
      %1558 = vmatpush1.msra.mxu0 0.0
      %1559 = vmatprep.subr.mxu0 0.0
      %1560 = vmatpush1.msra.mxu0 0.0
      %1561 = vmatprep.subr.mxu0 0.0
      %1562 = vmatpush1.msra.mxu0 0.0
      %1563 = vmatprep.subr.mxu0 0.0
      %1564 = vmatpush1.msra.mxu0 0.0
      %1565 = vmatprep.subr.mxu0 0.0
      %1566 = vmatpush1.msra.mxu0 %v1530
      %1567 = vmatprep.subr.mxu0 0.0
      %1568 = vmatpush2.msra.mxu0 0.0
      %1569 = vmatprep.subr.mxu0 0.0
      %1570 = vmatpush2.msra.mxu0 0.0
      %1571 = vmatprep.subr.mxu0 0.0
      %1572 = vmatpush2.msra.mxu0 0.0
      %1573 = vmatprep.subr.mxu0 0.0
      %1574 = vmatpush2.msra.mxu0 0.0
      %1575 = vmatprep.subr.mxu0 0.0
      %1576 = vmatpush2.msra.mxu0 0.0
      %1577 = vmatprep.subr.mxu0 0.0
      %1578 = vmatpush2.msra.mxu0 0.0
      %1579 = vmatprep.subr.mxu0 0.0
      %1580 = vmatpush2.msra.mxu0 0.0
      %1581 = vmatprep.subr.mxu0 0.0
      %1582 = vmatpush2.msra.mxu0 0.0
      %1583 = vmatprep.subr.mxu0 0.0
      %1584 = vmatpush2.msra.mxu0 0.0
      %1585 = vmatprep.subr.mxu0 0.0
      %1586 = vmatpush2.msra.mxu0 0.0
      %1587 = vmatprep.subr.mxu0 0.0
      %1588 = vmatpush2.msra.mxu0 0.0
      %1589 = vmatprep.subr.mxu0 0.0
      %1590 = vmatpush2.msra.mxu0 0.0
      %1591 = vmatprep.subr.mxu0 0.0
      %1592 = vmatpush2.msra.mxu0 0.0
      %1593 = vmatprep.subr.mxu0 0.0
      %1594 = vmatpush2.msra.mxu0 0.0
      %1595 = vmatprep.subr.mxu0 0.0
      %1596 = vmatpush2.msra.mxu0 0.0
      %1597 = vmatprep.subr.mxu0 0.0
      %1598 = vmatpush2.msra.mxu0 0.0
      %1599 = vmatprep.mubr.f32.mxu0 0.0
      %1600 = vmatmul.mubr.f32.gmra.mxu0 %v1533
      %v1601 = vpop.f32.mrf.mxu0
      %v1602 = vadd.f32 0.0, %v1601
      %v1603 = vpop.f32.mrf.mxu0
      %1604 = vdwg.mxu0
      %v1605 = vadd.f32 %v1528, %v1602
      %1606 = vrot.lane.b32.xlu0 %v1223, 117
      %v1607 = vpop.permute.xlu0 %1606
      %v1610 = vsel %vm1228, %v1176, 0
      %1612 = vmatprep.subr.mxu0 0.0
      %1613 = vmatpush1.msra.mxu0 0.0
      %1614 = vmatprep.subr.mxu0 0.0
      %1615 = vmatpush1.msra.mxu0 0.0
      %1616 = vmatprep.subr.mxu0 0.0
      %1617 = vmatpush1.msra.mxu0 0.0
      %1618 = vmatprep.subr.mxu0 0.0
      %1619 = vmatpush1.msra.mxu0 0.0
      %1620 = vmatprep.subr.mxu0 0.0
      %1621 = vmatpush1.msra.mxu0 0.0
      %1622 = vmatprep.subr.mxu0 0.0
      %1623 = vmatpush1.msra.mxu0 0.0
      %1624 = vmatprep.subr.mxu0 0.0
      %1625 = vmatpush1.msra.mxu0 0.0
      %1626 = vmatprep.subr.mxu0 0.0
      %1627 = vmatpush1.msra.mxu0 0.0
      %1628 = vmatprep.subr.mxu0 0.0
      %1629 = vmatpush1.msra.mxu0 0.0
      %1630 = vmatprep.subr.mxu0 0.0
      %1631 = vmatpush1.msra.mxu0 0.0
      %1632 = vmatprep.subr.mxu0 0.0
      %1633 = vmatpush1.msra.mxu0 0.0
      %1634 = vmatprep.subr.mxu0 0.0
      %1635 = vmatpush1.msra.mxu0 0.0
      %1636 = vmatprep.subr.mxu0 0.0
      %1637 = vmatpush1.msra.mxu0 0.0
      %1638 = vmatprep.subr.mxu0 0.0
      %1639 = vmatpush1.msra.mxu0 0.0
      %1640 = vmatprep.subr.mxu0 0.0
      %1641 = vmatpush1.msra.mxu0 0.0
      %1642 = vmatprep.subr.mxu0 0.0
      %1643 = vmatpush1.msra.mxu0 %v1607
      %1644 = vmatprep.subr.mxu0 0.0
      %1645 = vmatpush2.msra.mxu0 0.0
      %1646 = vmatprep.subr.mxu0 0.0
      %1647 = vmatpush2.msra.mxu0 0.0
      %1648 = vmatprep.subr.mxu0 0.0
      %1649 = vmatpush2.msra.mxu0 0.0
      %1650 = vmatprep.subr.mxu0 0.0
      %1651 = vmatpush2.msra.mxu0 0.0
      %1652 = vmatprep.subr.mxu0 0.0
      %1653 = vmatpush2.msra.mxu0 0.0
      %1654 = vmatprep.subr.mxu0 0.0
      %1655 = vmatpush2.msra.mxu0 0.0
      %1656 = vmatprep.subr.mxu0 0.0
      %1657 = vmatpush2.msra.mxu0 0.0
      %1658 = vmatprep.subr.mxu0 0.0
      %1659 = vmatpush2.msra.mxu0 0.0
      %1660 = vmatprep.subr.mxu0 0.0
      %1661 = vmatpush2.msra.mxu0 0.0
      %1662 = vmatprep.subr.mxu0 0.0
      %1663 = vmatpush2.msra.mxu0 0.0
      %1664 = vmatprep.subr.mxu0 0.0
      %1665 = vmatpush2.msra.mxu0 0.0
      %1666 = vmatprep.subr.mxu0 0.0
      %1667 = vmatpush2.msra.mxu0 0.0
      %1668 = vmatprep.subr.mxu0 0.0
      %1669 = vmatpush2.msra.mxu0 0.0
      %1670 = vmatprep.subr.mxu0 0.0
      %1671 = vmatpush2.msra.mxu0 0.0
      %1672 = vmatprep.subr.mxu0 0.0
      %1673 = vmatpush2.msra.mxu0 0.0
      %1674 = vmatprep.subr.mxu0 0.0
      %1675 = vmatpush2.msra.mxu0 0.0
      %1676 = vmatprep.mubr.f32.mxu0 0.0
      %1677 = vmatmul.mubr.f32.gmra.mxu0 %v1610
      %v1678 = vpop.f32.mrf.mxu0
      %v1679 = vadd.f32 0.0, %v1678
      %v1680 = vpop.f32.mrf.mxu0
      %1681 = vdwg.mxu0
      %v1682 = vadd.f32 %v1605, %v1679
      %1683 = vrot.lane.b32.xlu0 %v1223, 110
      %v1684 = vpop.permute.xlu0 %1683
      %v1687 = vsel %vm1228, %v1177, 0
      %1689 = vmatprep.subr.mxu0 0.0
      %1690 = vmatpush1.msra.mxu0 0.0
      %1691 = vmatprep.subr.mxu0 0.0
      %1692 = vmatpush1.msra.mxu0 0.0
      %1693 = vmatprep.subr.mxu0 0.0
      %1694 = vmatpush1.msra.mxu0 0.0
      %1695 = vmatprep.subr.mxu0 0.0
      %1696 = vmatpush1.msra.mxu0 0.0
      %1697 = vmatprep.subr.mxu0 0.0
      %1698 = vmatpush1.msra.mxu0 0.0
      %1699 = vmatprep.subr.mxu0 0.0
      %1700 = vmatpush1.msra.mxu0 0.0
      %1701 = vmatprep.subr.mxu0 0.0
      %1702 = vmatpush1.msra.mxu0 0.0
      %1703 = vmatprep.subr.mxu0 0.0
      %1704 = vmatpush1.msra.mxu0 0.0
      %1705 = vmatprep.subr.mxu0 0.0
      %1706 = vmatpush1.msra.mxu0 0.0
      %1707 = vmatprep.subr.mxu0 0.0
      %1708 = vmatpush1.msra.mxu0 0.0
      %1709 = vmatprep.subr.mxu0 0.0
      %1710 = vmatpush1.msra.mxu0 0.0
      %1711 = vmatprep.subr.mxu0 0.0
      %1712 = vmatpush1.msra.mxu0 0.0
      %1713 = vmatprep.subr.mxu0 0.0
      %1714 = vmatpush1.msra.mxu0 0.0
      %1715 = vmatprep.subr.mxu0 0.0
      %1716 = vmatpush1.msra.mxu0 0.0
      %1717 = vmatprep.subr.mxu0 0.0
      %1718 = vmatpush1.msra.mxu0 0.0
      %1719 = vmatprep.subr.mxu0 0.0
      %1720 = vmatpush1.msra.mxu0 %v1684
      %1721 = vmatprep.subr.mxu0 0.0
      %1722 = vmatpush2.msra.mxu0 0.0
      %1723 = vmatprep.subr.mxu0 0.0
      %1724 = vmatpush2.msra.mxu0 0.0
      %1725 = vmatprep.subr.mxu0 0.0
      %1726 = vmatpush2.msra.mxu0 0.0
      %1727 = vmatprep.subr.mxu0 0.0
      %1728 = vmatpush2.msra.mxu0 0.0
      %1729 = vmatprep.subr.mxu0 0.0
      %1730 = vmatpush2.msra.mxu0 0.0
      %1731 = vmatprep.subr.mxu0 0.0
      %1732 = vmatpush2.msra.mxu0 0.0
      %1733 = vmatprep.subr.mxu0 0.0
      %1734 = vmatpush2.msra.mxu0 0.0
      %1735 = vmatprep.subr.mxu0 0.0
      %1736 = vmatpush2.msra.mxu0 0.0
      %1737 = vmatprep.subr.mxu0 0.0
      %1738 = vmatpush2.msra.mxu0 0.0
      %1739 = vmatprep.subr.mxu0 0.0
      %1740 = vmatpush2.msra.mxu0 0.0
      %1741 = vmatprep.subr.mxu0 0.0
      %1742 = vmatpush2.msra.mxu0 0.0
      %1743 = vmatprep.subr.mxu0 0.0
      %1744 = vmatpush2.msra.mxu0 0.0
      %1745 = vmatprep.subr.mxu0 0.0
      %1746 = vmatpush2.msra.mxu0 0.0
      %1747 = vmatprep.subr.mxu0 0.0
      %1748 = vmatpush2.msra.mxu0 0.0
      %1749 = vmatprep.subr.mxu0 0.0
      %1750 = vmatpush2.msra.mxu0 0.0
      %1751 = vmatprep.subr.mxu0 0.0
      %1752 = vmatpush2.msra.mxu0 0.0
      %1753 = vmatprep.mubr.f32.mxu0 0.0
      %1754 = vmatmul.mubr.f32.gmra.mxu0 %v1687
      %v1755 = vpop.f32.mrf.mxu0
      %v1756 = vadd.f32 0.0, %v1755
      %v1757 = vpop.f32.mrf.mxu0
      %1758 = vdwg.mxu0
      %v1759 = vadd.f32 %v1682, %v1756
      %1760 = vrot.lane.b32.xlu0 %v1223, 109
      %v1761 = vpop.permute.xlu0 %1760
      %v1764 = vsel %vm1228, %v1178, 0
      %1766 = vmatprep.subr.mxu0 0.0
      %1767 = vmatpush1.msra.mxu0 0.0
      %1768 = vmatprep.subr.mxu0 0.0
      %1769 = vmatpush1.msra.mxu0 0.0
      %1770 = vmatprep.subr.mxu0 0.0
      %1771 = vmatpush1.msra.mxu0 0.0
      %1772 = vmatprep.subr.mxu0 0.0
      %1773 = vmatpush1.msra.mxu0 0.0
      %1774 = vmatprep.subr.mxu0 0.0
      %1775 = vmatpush1.msra.mxu0 0.0
      %1776 = vmatprep.subr.mxu0 0.0
      %1777 = vmatpush1.msra.mxu0 0.0
      %1778 = vmatprep.subr.mxu0 0.0
      %1779 = vmatpush1.msra.mxu0 0.0
      %1780 = vmatprep.subr.mxu0 0.0
      %1781 = vmatpush1.msra.mxu0 0.0
      %1782 = vmatprep.subr.mxu0 0.0
      %1783 = vmatpush1.msra.mxu0 0.0
      %1784 = vmatprep.subr.mxu0 0.0
      %1785 = vmatpush1.msra.mxu0 0.0
      %1786 = vmatprep.subr.mxu0 0.0
      %1787 = vmatpush1.msra.mxu0 0.0
      %1788 = vmatprep.subr.mxu0 0.0
      %1789 = vmatpush1.msra.mxu0 0.0
      %1790 = vmatprep.subr.mxu0 0.0
      %1791 = vmatpush1.msra.mxu0 0.0
      %1792 = vmatprep.subr.mxu0 0.0
      %1793 = vmatpush1.msra.mxu0 0.0
      %1794 = vmatprep.subr.mxu0 0.0
      %1795 = vmatpush1.msra.mxu0 0.0
      %1796 = vmatprep.subr.mxu0 0.0
      %1797 = vmatpush1.msra.mxu0 %v1761
      %1798 = vmatprep.subr.mxu0 0.0
      %1799 = vmatpush2.msra.mxu0 0.0
      %1800 = vmatprep.subr.mxu0 0.0
      %1801 = vmatpush2.msra.mxu0 0.0
      %1802 = vmatprep.subr.mxu0 0.0
      %1803 = vmatpush2.msra.mxu0 0.0
      %1804 = vmatprep.subr.mxu0 0.0
      %1805 = vmatpush2.msra.mxu0 0.0
      %1806 = vmatprep.subr.mxu0 0.0
      %1807 = vmatpush2.msra.mxu0 0.0
      %1808 = vmatprep.subr.mxu0 0.0
      %1809 = vmatpush2.msra.mxu0 0.0
      %1810 = vmatprep.subr.mxu0 0.0
      %1811 = vmatpush2.msra.mxu0 0.0
      %1812 = vmatprep.subr.mxu0 0.0
      %1813 = vmatpush2.msra.mxu0 0.0
      %1814 = vmatprep.subr.mxu0 0.0
      %1815 = vmatpush2.msra.mxu0 0.0
      %1816 = vmatprep.subr.mxu0 0.0
      %1817 = vmatpush2.msra.mxu0 0.0
      %1818 = vmatprep.subr.mxu0 0.0
      %1819 = vmatpush2.msra.mxu0 0.0
      %1820 = vmatprep.subr.mxu0 0.0
      %1821 = vmatpush2.msra.mxu0 0.0
      %1822 = vmatprep.subr.mxu0 0.0
      %1823 = vmatpush2.msra.mxu0 0.0
      %1824 = vmatprep.subr.mxu0 0.0
      %1825 = vmatpush2.msra.mxu0 0.0
      %1826 = vmatprep.subr.mxu0 0.0
      %1827 = vmatpush2.msra.mxu0 0.0
      %1828 = vmatprep.subr.mxu0 0.0
      %1829 = vmatpush2.msra.mxu0 0.0
      %1830 = vmatprep.mubr.f32.mxu0 0.0
      %1831 = vmatmul.mubr.f32.gmra.mxu0 %v1764
      %v1832 = vpop.f32.mrf.mxu0
      %v1833 = vadd.f32 0.0, %v1832
      %v1834 = vpop.f32.mrf.mxu0
      %1835 = vdwg.mxu0
      %v1836 = vadd.f32 %v1759, %v1833
      %1837 = vrot.lane.b32.xlu0 %v1223, 108
      %v1838 = vpop.permute.xlu0 %1837
      %v1841 = vsel %vm1228, %v1179, 0
      %1843 = vmatprep.subr.mxu0 0.0
      %1844 = vmatpush1.msra.mxu0 0.0
      %1845 = vmatprep.subr.mxu0 0.0
      %1846 = vmatpush1.msra.mxu0 0.0
      %1847 = vmatprep.subr.mxu0 0.0
      %1848 = vmatpush1.msra.mxu0 0.0
      %1849 = vmatprep.subr.mxu0 0.0
      %1850 = vmatpush1.msra.mxu0 0.0
      %1851 = vmatprep.subr.mxu0 0.0
      %1852 = vmatpush1.msra.mxu0 0.0
      %1853 = vmatprep.subr.mxu0 0.0
      %1854 = vmatpush1.msra.mxu0 0.0
      %1855 = vmatprep.subr.mxu0 0.0
      %1856 = vmatpush1.msra.mxu0 0.0
      %1857 = vmatprep.subr.mxu0 0.0
      %1858 = vmatpush1.msra.mxu0 0.0
      %1859 = vmatprep.subr.mxu0 0.0
      %1860 = vmatpush1.msra.mxu0 0.0
      %1861 = vmatprep.subr.mxu0 0.0
      %1862 = vmatpush1.msra.mxu0 0.0
      %1863 = vmatprep.subr.mxu0 0.0
      %1864 = vmatpush1.msra.mxu0 0.0
      %1865 = vmatprep.subr.mxu0 0.0
      %1866 = vmatpush1.msra.mxu0 0.0
      %1867 = vmatprep.subr.mxu0 0.0
      %1868 = vmatpush1.msra.mxu0 0.0
      %1869 = vmatprep.subr.mxu0 0.0
      %1870 = vmatpush1.msra.mxu0 0.0
      %1871 = vmatprep.subr.mxu0 0.0
      %1872 = vmatpush1.msra.mxu0 0.0
      %1873 = vmatprep.subr.mxu0 0.0
      %1874 = vmatpush1.msra.mxu0 %v1838
      %1875 = vmatprep.subr.mxu0 0.0
      %1876 = vmatpush2.msra.mxu0 0.0
      %1877 = vmatprep.subr.mxu0 0.0
      %1878 = vmatpush2.msra.mxu0 0.0
      %1879 = vmatprep.subr.mxu0 0.0
      %1880 = vmatpush2.msra.mxu0 0.0
      %1881 = vmatprep.subr.mxu0 0.0
      %1882 = vmatpush2.msra.mxu0 0.0
      %1883 = vmatprep.subr.mxu0 0.0
      %1884 = vmatpush2.msra.mxu0 0.0
      %1885 = vmatprep.subr.mxu0 0.0
      %1886 = vmatpush2.msra.mxu0 0.0
      %1887 = vmatprep.subr.mxu0 0.0
      %1888 = vmatpush2.msra.mxu0 0.0
      %1889 = vmatprep.subr.mxu0 0.0
      %1890 = vmatpush2.msra.mxu0 0.0
      %1891 = vmatprep.subr.mxu0 0.0
      %1892 = vmatpush2.msra.mxu0 0.0
      %1893 = vmatprep.subr.mxu0 0.0
      %1894 = vmatpush2.msra.mxu0 0.0
      %1895 = vmatprep.subr.mxu0 0.0
      %1896 = vmatpush2.msra.mxu0 0.0
      %1897 = vmatprep.subr.mxu0 0.0
      %1898 = vmatpush2.msra.mxu0 0.0
      %1899 = vmatprep.subr.mxu0 0.0
      %1900 = vmatpush2.msra.mxu0 0.0
      %1901 = vmatprep.subr.mxu0 0.0
      %1902 = vmatpush2.msra.mxu0 0.0
      %1903 = vmatprep.subr.mxu0 0.0
      %1904 = vmatpush2.msra.mxu0 0.0
      %1905 = vmatprep.subr.mxu0 0.0
      %1906 = vmatpush2.msra.mxu0 0.0
      %1907 = vmatprep.mubr.f32.mxu0 0.0
      %1908 = vmatmul.mubr.f32.gmra.mxu0 %v1841
      %v1909 = vpop.f32.mrf.mxu0
      %v1910 = vadd.f32 0.0, %v1909
      %v1911 = vpop.f32.mrf.mxu0
      %1912 = vdwg.mxu0
      %v1913 = vadd.f32 %v1836, %v1910
      %s1914 = scalar_lea.vmem %s7, 16
      %v1915 = vld [vmem:[%s1914] sm:$0xff]
      %1917 = vset.pattern.permute.xlu0 0
      %1918 = vperm.xlu0 %1917, %v1915
      %v1919 = vpop.permute.xlu0 %1918
      %v1921 = vadd.f32 %v1913, %v1919
      %v1922 = vmul.f32 %v1921, %v1082
      %v1923 = vadd.f32 %v1922, %v1170
      %s1924 = scalar_lea.vmem %s5, 8
      %v1925 = vld [vmem:[%s1924] sm:$0xff]
      %1927 = vset.pattern.permute.xlu0 0
      %1928 = vperm.xlu0 %1927, %v1925
      %v1929 = vpop.permute.xlu0 %1928
      %v1931 = vmul.f32 %v1923, %v1929
      %s1932 = scalar_lea.vmem %s6, 8
      %v1933 = vld [vmem:[%s1932] sm:$0xff]
      %1935 = vset.pattern.permute.xlu0 0
      %1936 = vperm.xlu0 %1935, %v1933
      %v1937 = vpop.permute.xlu0 %1936
      %v1939 = vadd.f32 %v1931, %v1937
      %v1940 = vmax.f32 %v1939, 0.0
      %v1941 = vmul.f32 %v1940, %v1082
      %1943 = vrot.lane.b32.xlu0 %v1941, 10
      %v1944 = vpop.permute.xlu0 %1943
      %v1946 = vsel %vm1220, 0.0, %v1944
      %v1947 = vsel %vm1222, %v1946, 0.0
      %1949 = vrot.lane.b32.xlu0 %v1947, 127
      %v1950 = vpop.permute.xlu0 %1949
      %v1953 = vsel %vm1228, %v1182, 0
      %1955 = vmatprep.subr.mxu0 0.0
      %1956 = vmatpush1.msra.mxu0 0.0
      %1957 = vmatprep.subr.mxu0 0.0
      %1958 = vmatpush1.msra.mxu0 0.0
      %1959 = vmatprep.subr.mxu0 0.0
      %1960 = vmatpush1.msra.mxu0 0.0
      %1961 = vmatprep.subr.mxu0 0.0
      %1962 = vmatpush1.msra.mxu0 0.0
      %1963 = vmatprep.subr.mxu0 0.0
      %1964 = vmatpush1.msra.mxu0 0.0
      %1965 = vmatprep.subr.mxu0 0.0
      %1966 = vmatpush1.msra.mxu0 0.0
      %1967 = vmatprep.subr.mxu0 0.0
      %1968 = vmatpush1.msra.mxu0 0.0
      %1969 = vmatprep.subr.mxu0 0.0
      %1970 = vmatpush1.msra.mxu0 0.0
      %1971 = vmatprep.subr.mxu0 0.0
      %1972 = vmatpush1.msra.mxu0 0.0
      %1973 = vmatprep.subr.mxu0 0.0
      %1974 = vmatpush1.msra.mxu0 0.0
      %1975 = vmatprep.subr.mxu0 0.0
      %1976 = vmatpush1.msra.mxu0 0.0
      %1977 = vmatprep.subr.mxu0 0.0
      %1978 = vmatpush1.msra.mxu0 0.0
      %1979 = vmatprep.subr.mxu0 0.0
      %1980 = vmatpush1.msra.mxu0 0.0
      %1981 = vmatprep.subr.mxu0 0.0
      %1982 = vmatpush1.msra.mxu0 0.0
      %1983 = vmatprep.subr.mxu0 0.0
      %1984 = vmatpush1.msra.mxu0 0.0
      %1985 = vmatprep.subr.mxu0 0.0
      %1986 = vmatpush1.msra.mxu0 %v1950
      %1987 = vmatprep.subr.mxu0 0.0
      %1988 = vmatpush2.msra.mxu0 0.0
      %1989 = vmatprep.subr.mxu0 0.0
      %1990 = vmatpush2.msra.mxu0 0.0
      %1991 = vmatprep.subr.mxu0 0.0
      %1992 = vmatpush2.msra.mxu0 0.0
      %1993 = vmatprep.subr.mxu0 0.0
      %1994 = vmatpush2.msra.mxu0 0.0
      %1995 = vmatprep.subr.mxu0 0.0
      %1996 = vmatpush2.msra.mxu0 0.0
      %1997 = vmatprep.subr.mxu0 0.0
      %1998 = vmatpush2.msra.mxu0 0.0
      %1999 = vmatprep.subr.mxu0 0.0
      %2000 = vmatpush2.msra.mxu0 0.0
      %2001 = vmatprep.subr.mxu0 0.0
      %2002 = vmatpush2.msra.mxu0 0.0
      %2003 = vmatprep.subr.mxu0 0.0
      %2004 = vmatpush2.msra.mxu0 0.0
      %2005 = vmatprep.subr.mxu0 0.0
      %2006 = vmatpush2.msra.mxu0 0.0
      %2007 = vmatprep.subr.mxu0 0.0
      %2008 = vmatpush2.msra.mxu0 0.0
      %2009 = vmatprep.subr.mxu0 0.0
      %2010 = vmatpush2.msra.mxu0 0.0
      %2011 = vmatprep.subr.mxu0 0.0
      %2012 = vmatpush2.msra.mxu0 0.0
      %2013 = vmatprep.subr.mxu0 0.0
      %2014 = vmatpush2.msra.mxu0 0.0
      %2015 = vmatprep.subr.mxu0 0.0
      %2016 = vmatpush2.msra.mxu0 0.0
      %2017 = vmatprep.subr.mxu0 0.0
      %2018 = vmatpush2.msra.mxu0 0.0
      %2019 = vmatprep.mubr.f32.mxu0 0.0
      %2020 = vmatmul.mubr.f32.gmra.mxu0 %v1953
      %v2021 = vpop.f32.mrf.mxu0
      %v2022 = vadd.f32 0.0, %v2021
      %v2023 = vpop.f32.mrf.mxu0
      %2024 = vdwg.mxu0
      %v2026 = vsel %vm1228, %v1181, 0
      %2028 = vmatprep.subr.mxu0 0.0
      %2029 = vmatpush1.msra.mxu0 0.0
      %2030 = vmatprep.subr.mxu0 0.0
      %2031 = vmatpush1.msra.mxu0 0.0
      %2032 = vmatprep.subr.mxu0 0.0
      %2033 = vmatpush1.msra.mxu0 0.0
      %2034 = vmatprep.subr.mxu0 0.0
      %2035 = vmatpush1.msra.mxu0 0.0
      %2036 = vmatprep.subr.mxu0 0.0
      %2037 = vmatpush1.msra.mxu0 0.0
      %2038 = vmatprep.subr.mxu0 0.0
      %2039 = vmatpush1.msra.mxu0 0.0
      %2040 = vmatprep.subr.mxu0 0.0
      %2041 = vmatpush1.msra.mxu0 0.0
      %2042 = vmatprep.subr.mxu0 0.0
      %2043 = vmatpush1.msra.mxu0 0.0
      %2044 = vmatprep.subr.mxu0 0.0
      %2045 = vmatpush1.msra.mxu0 0.0
      %2046 = vmatprep.subr.mxu0 0.0
      %2047 = vmatpush1.msra.mxu0 0.0
      %2048 = vmatprep.subr.mxu0 0.0
      %2049 = vmatpush1.msra.mxu0 0.0
      %2050 = vmatprep.subr.mxu0 0.0
      %2051 = vmatpush1.msra.mxu0 0.0
      %2052 = vmatprep.subr.mxu0 0.0
      %2053 = vmatpush1.msra.mxu0 0.0
      %2054 = vmatprep.subr.mxu0 0.0
      %2055 = vmatpush1.msra.mxu0 0.0
      %2056 = vmatprep.subr.mxu0 0.0
      %2057 = vmatpush1.msra.mxu0 0.0
      %2058 = vmatprep.subr.mxu0 0.0
      %2059 = vmatpush1.msra.mxu0 %v1947
      %2060 = vmatprep.subr.mxu0 0.0
      %2061 = vmatpush2.msra.mxu0 0.0
      %2062 = vmatprep.subr.mxu0 0.0
      %2063 = vmatpush2.msra.mxu0 0.0
      %2064 = vmatprep.subr.mxu0 0.0
      %2065 = vmatpush2.msra.mxu0 0.0
      %2066 = vmatprep.subr.mxu0 0.0
      %2067 = vmatpush2.msra.mxu0 0.0
      %2068 = vmatprep.subr.mxu0 0.0
      %2069 = vmatpush2.msra.mxu0 0.0
      %2070 = vmatprep.subr.mxu0 0.0
      %2071 = vmatpush2.msra.mxu0 0.0
      %2072 = vmatprep.subr.mxu0 0.0
      %2073 = vmatpush2.msra.mxu0 0.0
      %2074 = vmatprep.subr.mxu0 0.0
      %2075 = vmatpush2.msra.mxu0 0.0
      %2076 = vmatprep.subr.mxu0 0.0
      %2077 = vmatpush2.msra.mxu0 0.0
      %2078 = vmatprep.subr.mxu0 0.0
      %2079 = vmatpush2.msra.mxu0 0.0
      %2080 = vmatprep.subr.mxu0 0.0
      %2081 = vmatpush2.msra.mxu0 0.0
      %2082 = vmatprep.subr.mxu0 0.0
      %2083 = vmatpush2.msra.mxu0 0.0
      %2084 = vmatprep.subr.mxu0 0.0
      %2085 = vmatpush2.msra.mxu0 0.0
      %2086 = vmatprep.subr.mxu0 0.0
      %2087 = vmatpush2.msra.mxu0 0.0
      %2088 = vmatprep.subr.mxu0 0.0
      %2089 = vmatpush2.msra.mxu0 0.0
      %2090 = vmatprep.subr.mxu0 0.0
      %2091 = vmatpush2.msra.mxu0 0.0
      %2092 = vmatprep.mubr.f32.mxu0 0.0
      %2093 = vmatmul.mubr.f32.gmra.mxu0 %v2026
      %v2094 = vpop.f32.mrf.mxu0
      %v2095 = vadd.f32 %v2022, %v2094
      %v2096 = vpop.f32.mrf.mxu0
      %2097 = vdwg.mxu0
      %2098 = vrot.lane.b32.xlu0 %v1947, 126
      %v2099 = vpop.permute.xlu0 %2098
      %v2102 = vsel %vm1228, %v1183, 0
      %2104 = vmatprep.subr.mxu0 0.0
      %2105 = vmatpush1.msra.mxu0 0.0
      %2106 = vmatprep.subr.mxu0 0.0
      %2107 = vmatpush1.msra.mxu0 0.0
      %2108 = vmatprep.subr.mxu0 0.0
      %2109 = vmatpush1.msra.mxu0 0.0
      %2110 = vmatprep.subr.mxu0 0.0
      %2111 = vmatpush1.msra.mxu0 0.0
      %2112 = vmatprep.subr.mxu0 0.0
      %2113 = vmatpush1.msra.mxu0 0.0
      %2114 = vmatprep.subr.mxu0 0.0
      %2115 = vmatpush1.msra.mxu0 0.0
      %2116 = vmatprep.subr.mxu0 0.0
      %2117 = vmatpush1.msra.mxu0 0.0
      %2118 = vmatprep.subr.mxu0 0.0
      %2119 = vmatpush1.msra.mxu0 0.0
      %2120 = vmatprep.subr.mxu0 0.0
      %2121 = vmatpush1.msra.mxu0 0.0
      %2122 = vmatprep.subr.mxu0 0.0
      %2123 = vmatpush1.msra.mxu0 0.0
      %2124 = vmatprep.subr.mxu0 0.0
      %2125 = vmatpush1.msra.mxu0 0.0
      %2126 = vmatprep.subr.mxu0 0.0
      %2127 = vmatpush1.msra.mxu0 0.0
      %2128 = vmatprep.subr.mxu0 0.0
      %2129 = vmatpush1.msra.mxu0 0.0
      %2130 = vmatprep.subr.mxu0 0.0
      %2131 = vmatpush1.msra.mxu0 0.0
      %2132 = vmatprep.subr.mxu0 0.0
      %2133 = vmatpush1.msra.mxu0 0.0
      %2134 = vmatprep.subr.mxu0 0.0
      %2135 = vmatpush1.msra.mxu0 %v2099
      %2136 = vmatprep.subr.mxu0 0.0
      %2137 = vmatpush2.msra.mxu0 0.0
      %2138 = vmatprep.subr.mxu0 0.0
      %2139 = vmatpush2.msra.mxu0 0.0
      %2140 = vmatprep.subr.mxu0 0.0
      %2141 = vmatpush2.msra.mxu0 0.0
      %2142 = vmatprep.subr.mxu0 0.0
      %2143 = vmatpush2.msra.mxu0 0.0
      %2144 = vmatprep.subr.mxu0 0.0
      %2145 = vmatpush2.msra.mxu0 0.0
      %2146 = vmatprep.subr.mxu0 0.0
      %2147 = vmatpush2.msra.mxu0 0.0
      %2148 = vmatprep.subr.mxu0 0.0
      %2149 = vmatpush2.msra.mxu0 0.0
      %2150 = vmatprep.subr.mxu0 0.0
      %2151 = vmatpush2.msra.mxu0 0.0
      %2152 = vmatprep.subr.mxu0 0.0
      %2153 = vmatpush2.msra.mxu0 0.0
      %2154 = vmatprep.subr.mxu0 0.0
      %2155 = vmatpush2.msra.mxu0 0.0
      %2156 = vmatprep.subr.mxu0 0.0
      %2157 = vmatpush2.msra.mxu0 0.0
      %2158 = vmatprep.subr.mxu0 0.0
      %2159 = vmatpush2.msra.mxu0 0.0
      %2160 = vmatprep.subr.mxu0 0.0
      %2161 = vmatpush2.msra.mxu0 0.0
      %2162 = vmatprep.subr.mxu0 0.0
      %2163 = vmatpush2.msra.mxu0 0.0
      %2164 = vmatprep.subr.mxu0 0.0
      %2165 = vmatpush2.msra.mxu0 0.0
      %2166 = vmatprep.subr.mxu0 0.0
      %2167 = vmatpush2.msra.mxu0 0.0
      %2168 = vmatprep.mubr.f32.mxu0 0.0
      %2169 = vmatmul.mubr.f32.gmra.mxu0 %v2102
      %v2170 = vpop.f32.mrf.mxu0
      %v2171 = vadd.f32 0.0, %v2170
      %v2172 = vpop.f32.mrf.mxu0
      %2173 = vdwg.mxu0
      %v2174 = vadd.f32 %v2095, %v2171
      %2175 = vrot.lane.b32.xlu0 %v1947, 119
      %v2176 = vpop.permute.xlu0 %2175
      %v2179 = vsel %vm1228, %v1184, 0
      %2181 = vmatprep.subr.mxu0 0.0
      %2182 = vmatpush1.msra.mxu0 0.0
      %2183 = vmatprep.subr.mxu0 0.0
      %2184 = vmatpush1.msra.mxu0 0.0
      %2185 = vmatprep.subr.mxu0 0.0
      %2186 = vmatpush1.msra.mxu0 0.0
      %2187 = vmatprep.subr.mxu0 0.0
      %2188 = vmatpush1.msra.mxu0 0.0
      %2189 = vmatprep.subr.mxu0 0.0
      %2190 = vmatpush1.msra.mxu0 0.0
      %2191 = vmatprep.subr.mxu0 0.0
      %2192 = vmatpush1.msra.mxu0 0.0
      %2193 = vmatprep.subr.mxu0 0.0
      %2194 = vmatpush1.msra.mxu0 0.0
      %2195 = vmatprep.subr.mxu0 0.0
      %2196 = vmatpush1.msra.mxu0 0.0
      %2197 = vmatprep.subr.mxu0 0.0
      %2198 = vmatpush1.msra.mxu0 0.0
      %2199 = vmatprep.subr.mxu0 0.0
      %2200 = vmatpush1.msra.mxu0 0.0
      %2201 = vmatprep.subr.mxu0 0.0
      %2202 = vmatpush1.msra.mxu0 0.0
      %2203 = vmatprep.subr.mxu0 0.0
      %2204 = vmatpush1.msra.mxu0 0.0
      %2205 = vmatprep.subr.mxu0 0.0
      %2206 = vmatpush1.msra.mxu0 0.0
      %2207 = vmatprep.subr.mxu0 0.0
      %2208 = vmatpush1.msra.mxu0 0.0
      %2209 = vmatprep.subr.mxu0 0.0
      %2210 = vmatpush1.msra.mxu0 0.0
      %2211 = vmatprep.subr.mxu0 0.0
      %2212 = vmatpush1.msra.mxu0 %v2176
      %2213 = vmatprep.subr.mxu0 0.0
      %2214 = vmatpush2.msra.mxu0 0.0
      %2215 = vmatprep.subr.mxu0 0.0
      %2216 = vmatpush2.msra.mxu0 0.0
      %2217 = vmatprep.subr.mxu0 0.0
      %2218 = vmatpush2.msra.mxu0 0.0
      %2219 = vmatprep.subr.mxu0 0.0
      %2220 = vmatpush2.msra.mxu0 0.0
      %2221 = vmatprep.subr.mxu0 0.0
      %2222 = vmatpush2.msra.mxu0 0.0
      %2223 = vmatprep.subr.mxu0 0.0
      %2224 = vmatpush2.msra.mxu0 0.0
      %2225 = vmatprep.subr.mxu0 0.0
      %2226 = vmatpush2.msra.mxu0 0.0
      %2227 = vmatprep.subr.mxu0 0.0
      %2228 = vmatpush2.msra.mxu0 0.0
      %2229 = vmatprep.subr.mxu0 0.0
      %2230 = vmatpush2.msra.mxu0 0.0
      %2231 = vmatprep.subr.mxu0 0.0
      %2232 = vmatpush2.msra.mxu0 0.0
      %2233 = vmatprep.subr.mxu0 0.0
      %2234 = vmatpush2.msra.mxu0 0.0
      %2235 = vmatprep.subr.mxu0 0.0
      %2236 = vmatpush2.msra.mxu0 0.0
      %2237 = vmatprep.subr.mxu0 0.0
      %2238 = vmatpush2.msra.mxu0 0.0
      %2239 = vmatprep.subr.mxu0 0.0
      %2240 = vmatpush2.msra.mxu0 0.0
      %2241 = vmatprep.subr.mxu0 0.0
      %2242 = vmatpush2.msra.mxu0 0.0
      %2243 = vmatprep.subr.mxu0 0.0
      %2244 = vmatpush2.msra.mxu0 0.0
      %2245 = vmatprep.mubr.f32.mxu0 0.0
      %2246 = vmatmul.mubr.f32.gmra.mxu0 %v2179
      %v2247 = vpop.f32.mrf.mxu0
      %v2248 = vadd.f32 0.0, %v2247
      %v2249 = vpop.f32.mrf.mxu0
      %2250 = vdwg.mxu0
      %v2251 = vadd.f32 %v2174, %v2248
      %2252 = vrot.lane.b32.xlu0 %v1947, 118
      %v2253 = vpop.permute.xlu0 %2252
      %v2256 = vsel %vm1228, %v1185, 0
      %2258 = vmatprep.subr.mxu0 0.0
      %2259 = vmatpush1.msra.mxu0 0.0
      %2260 = vmatprep.subr.mxu0 0.0
      %2261 = vmatpush1.msra.mxu0 0.0
      %2262 = vmatprep.subr.mxu0 0.0
      %2263 = vmatpush1.msra.mxu0 0.0
      %2264 = vmatprep.subr.mxu0 0.0
      %2265 = vmatpush1.msra.mxu0 0.0
      %2266 = vmatprep.subr.mxu0 0.0
      %2267 = vmatpush1.msra.mxu0 0.0
      %2268 = vmatprep.subr.mxu0 0.0
      %2269 = vmatpush1.msra.mxu0 0.0
      %2270 = vmatprep.subr.mxu0 0.0
      %2271 = vmatpush1.msra.mxu0 0.0
      %2272 = vmatprep.subr.mxu0 0.0
      %2273 = vmatpush1.msra.mxu0 0.0
      %2274 = vmatprep.subr.mxu0 0.0
      %2275 = vmatpush1.msra.mxu0 0.0
      %2276 = vmatprep.subr.mxu0 0.0
      %2277 = vmatpush1.msra.mxu0 0.0
      %2278 = vmatprep.subr.mxu0 0.0
      %2279 = vmatpush1.msra.mxu0 0.0
      %2280 = vmatprep.subr.mxu0 0.0
      %2281 = vmatpush1.msra.mxu0 0.0
      %2282 = vmatprep.subr.mxu0 0.0
      %2283 = vmatpush1.msra.mxu0 0.0
      %2284 = vmatprep.subr.mxu0 0.0
      %2285 = vmatpush1.msra.mxu0 0.0
      %2286 = vmatprep.subr.mxu0 0.0
      %2287 = vmatpush1.msra.mxu0 0.0
      %2288 = vmatprep.subr.mxu0 0.0
      %2289 = vmatpush1.msra.mxu0 %v2253
      %2290 = vmatprep.subr.mxu0 0.0
      %2291 = vmatpush2.msra.mxu0 0.0
      %2292 = vmatprep.subr.mxu0 0.0
      %2293 = vmatpush2.msra.mxu0 0.0
      %2294 = vmatprep.subr.mxu0 0.0
      %2295 = vmatpush2.msra.mxu0 0.0
      %2296 = vmatprep.subr.mxu0 0.0
      %2297 = vmatpush2.msra.mxu0 0.0
      %2298 = vmatprep.subr.mxu0 0.0
      %2299 = vmatpush2.msra.mxu0 0.0
      %2300 = vmatprep.subr.mxu0 0.0
      %2301 = vmatpush2.msra.mxu0 0.0
      %2302 = vmatprep.subr.mxu0 0.0
      %2303 = vmatpush2.msra.mxu0 0.0
      %2304 = vmatprep.subr.mxu0 0.0
      %2305 = vmatpush2.msra.mxu0 0.0
      %2306 = vmatprep.subr.mxu0 0.0
      %2307 = vmatpush2.msra.mxu0 0.0
      %2308 = vmatprep.subr.mxu0 0.0
      %2309 = vmatpush2.msra.mxu0 0.0
      %2310 = vmatprep.subr.mxu0 0.0
      %2311 = vmatpush2.msra.mxu0 0.0
      %2312 = vmatprep.subr.mxu0 0.0
      %2313 = vmatpush2.msra.mxu0 0.0
      %2314 = vmatprep.subr.mxu0 0.0
      %2315 = vmatpush2.msra.mxu0 0.0
      %2316 = vmatprep.subr.mxu0 0.0
      %2317 = vmatpush2.msra.mxu0 0.0
      %2318 = vmatprep.subr.mxu0 0.0
      %2319 = vmatpush2.msra.mxu0 0.0
      %2320 = vmatprep.subr.mxu0 0.0
      %2321 = vmatpush2.msra.mxu0 0.0
      %2322 = vmatprep.mubr.f32.mxu0 0.0
      %2323 = vmatmul.mubr.f32.gmra.mxu0 %v2256
      %v2324 = vpop.f32.mrf.mxu0
      %v2325 = vadd.f32 0.0, %v2324
      %v2326 = vpop.f32.mrf.mxu0
      %2327 = vdwg.mxu0
      %v2328 = vadd.f32 %v2251, %v2325
      %2329 = vrot.lane.b32.xlu0 %v1947, 117
      %v2330 = vpop.permute.xlu0 %2329
      %v2333 = vsel %vm1228, %v1186, 0
      %2335 = vmatprep.subr.mxu0 0.0
      %2336 = vmatpush1.msra.mxu0 0.0
      %2337 = vmatprep.subr.mxu0 0.0
      %2338 = vmatpush1.msra.mxu0 0.0
      %2339 = vmatprep.subr.mxu0 0.0
      %2340 = vmatpush1.msra.mxu0 0.0
      %2341 = vmatprep.subr.mxu0 0.0
      %2342 = vmatpush1.msra.mxu0 0.0
      %2343 = vmatprep.subr.mxu0 0.0
      %2344 = vmatpush1.msra.mxu0 0.0
      %2345 = vmatprep.subr.mxu0 0.0
      %2346 = vmatpush1.msra.mxu0 0.0
      %2347 = vmatprep.subr.mxu0 0.0
      %2348 = vmatpush1.msra.mxu0 0.0
      %2349 = vmatprep.subr.mxu0 0.0
      %2350 = vmatpush1.msra.mxu0 0.0
      %2351 = vmatprep.subr.mxu0 0.0
      %2352 = vmatpush1.msra.mxu0 0.0
      %2353 = vmatprep.subr.mxu0 0.0
      %2354 = vmatpush1.msra.mxu0 0.0
      %2355 = vmatprep.subr.mxu0 0.0
      %2356 = vmatpush1.msra.mxu0 0.0
      %2357 = vmatprep.subr.mxu0 0.0
      %2358 = vmatpush1.msra.mxu0 0.0
      %2359 = vmatprep.subr.mxu0 0.0
      %2360 = vmatpush1.msra.mxu0 0.0
      %2361 = vmatprep.subr.mxu0 0.0
      %2362 = vmatpush1.msra.mxu0 0.0
      %2363 = vmatprep.subr.mxu0 0.0
      %2364 = vmatpush1.msra.mxu0 0.0
      %2365 = vmatprep.subr.mxu0 0.0
      %2366 = vmatpush1.msra.mxu0 %v2330
      %2367 = vmatprep.subr.mxu0 0.0
      %2368 = vmatpush2.msra.mxu0 0.0
      %2369 = vmatprep.subr.mxu0 0.0
      %2370 = vmatpush2.msra.mxu0 0.0
      %2371 = vmatprep.subr.mxu0 0.0
      %2372 = vmatpush2.msra.mxu0 0.0
      %2373 = vmatprep.subr.mxu0 0.0
      %2374 = vmatpush2.msra.mxu0 0.0
      %2375 = vmatprep.subr.mxu0 0.0
      %2376 = vmatpush2.msra.mxu0 0.0
      %2377 = vmatprep.subr.mxu0 0.0
      %2378 = vmatpush2.msra.mxu0 0.0
      %2379 = vmatprep.subr.mxu0 0.0
      %2380 = vmatpush2.msra.mxu0 0.0
      %2381 = vmatprep.subr.mxu0 0.0
      %2382 = vmatpush2.msra.mxu0 0.0
      %2383 = vmatprep.subr.mxu0 0.0
      %2384 = vmatpush2.msra.mxu0 0.0
      %2385 = vmatprep.subr.mxu0 0.0
      %2386 = vmatpush2.msra.mxu0 0.0
      %2387 = vmatprep.subr.mxu0 0.0
      %2388 = vmatpush2.msra.mxu0 0.0
      %2389 = vmatprep.subr.mxu0 0.0
      %2390 = vmatpush2.msra.mxu0 0.0
      %2391 = vmatprep.subr.mxu0 0.0
      %2392 = vmatpush2.msra.mxu0 0.0
      %2393 = vmatprep.subr.mxu0 0.0
      %2394 = vmatpush2.msra.mxu0 0.0
      %2395 = vmatprep.subr.mxu0 0.0
      %2396 = vmatpush2.msra.mxu0 0.0
      %2397 = vmatprep.subr.mxu0 0.0
      %2398 = vmatpush2.msra.mxu0 0.0
      %2399 = vmatprep.mubr.f32.mxu0 0.0
      %2400 = vmatmul.mubr.f32.gmra.mxu0 %v2333
      %v2401 = vpop.f32.mrf.mxu0
      %v2402 = vadd.f32 0.0, %v2401
      %v2403 = vpop.f32.mrf.mxu0
      %2404 = vdwg.mxu0
      %v2405 = vadd.f32 %v2328, %v2402
      %2406 = vrot.lane.b32.xlu0 %v1947, 110
      %v2407 = vpop.permute.xlu0 %2406
      %v2410 = vsel %vm1228, %v1187, 0
      %2412 = vmatprep.subr.mxu0 0.0
      %2413 = vmatpush1.msra.mxu0 0.0
      %2414 = vmatprep.subr.mxu0 0.0
      %2415 = vmatpush1.msra.mxu0 0.0
      %2416 = vmatprep.subr.mxu0 0.0
      %2417 = vmatpush1.msra.mxu0 0.0
      %2418 = vmatprep.subr.mxu0 0.0
      %2419 = vmatpush1.msra.mxu0 0.0
      %2420 = vmatprep.subr.mxu0 0.0
      %2421 = vmatpush1.msra.mxu0 0.0
      %2422 = vmatprep.subr.mxu0 0.0
      %2423 = vmatpush1.msra.mxu0 0.0
      %2424 = vmatprep.subr.mxu0 0.0
      %2425 = vmatpush1.msra.mxu0 0.0
      %2426 = vmatprep.subr.mxu0 0.0
      %2427 = vmatpush1.msra.mxu0 0.0
      %2428 = vmatprep.subr.mxu0 0.0
      %2429 = vmatpush1.msra.mxu0 0.0
      %2430 = vmatprep.subr.mxu0 0.0
      %2431 = vmatpush1.msra.mxu0 0.0
      %2432 = vmatprep.subr.mxu0 0.0
      %2433 = vmatpush1.msra.mxu0 0.0
      %2434 = vmatprep.subr.mxu0 0.0
      %2435 = vmatpush1.msra.mxu0 0.0
      %2436 = vmatprep.subr.mxu0 0.0
      %2437 = vmatpush1.msra.mxu0 0.0
      %2438 = vmatprep.subr.mxu0 0.0
      %2439 = vmatpush1.msra.mxu0 0.0
      %2440 = vmatprep.subr.mxu0 0.0
      %2441 = vmatpush1.msra.mxu0 0.0
      %2442 = vmatprep.subr.mxu0 0.0
      %2443 = vmatpush1.msra.mxu0 %v2407
      %2444 = vmatprep.subr.mxu0 0.0
      %2445 = vmatpush2.msra.mxu0 0.0
      %2446 = vmatprep.subr.mxu0 0.0
      %2447 = vmatpush2.msra.mxu0 0.0
      %2448 = vmatprep.subr.mxu0 0.0
      %2449 = vmatpush2.msra.mxu0 0.0
      %2450 = vmatprep.subr.mxu0 0.0
      %2451 = vmatpush2.msra.mxu0 0.0
      %2452 = vmatprep.subr.mxu0 0.0
      %2453 = vmatpush2.msra.mxu0 0.0
      %2454 = vmatprep.subr.mxu0 0.0
      %2455 = vmatpush2.msra.mxu0 0.0
      %2456 = vmatprep.subr.mxu0 0.0
      %2457 = vmatpush2.msra.mxu0 0.0
      %2458 = vmatprep.subr.mxu0 0.0
      %2459 = vmatpush2.msra.mxu0 0.0
      %2460 = vmatprep.subr.mxu0 0.0
      %2461 = vmatpush2.msra.mxu0 0.0
      %2462 = vmatprep.subr.mxu0 0.0
      %2463 = vmatpush2.msra.mxu0 0.0
      %2464 = vmatprep.subr.mxu0 0.0
      %2465 = vmatpush2.msra.mxu0 0.0
      %2466 = vmatprep.subr.mxu0 0.0
      %2467 = vmatpush2.msra.mxu0 0.0
      %2468 = vmatprep.subr.mxu0 0.0
      %2469 = vmatpush2.msra.mxu0 0.0
      %2470 = vmatprep.subr.mxu0 0.0
      %2471 = vmatpush2.msra.mxu0 0.0
      %2472 = vmatprep.subr.mxu0 0.0
      %2473 = vmatpush2.msra.mxu0 0.0
      %2474 = vmatprep.subr.mxu0 0.0
      %2475 = vmatpush2.msra.mxu0 0.0
      %2476 = vmatprep.mubr.f32.mxu0 0.0
      %2477 = vmatmul.mubr.f32.gmra.mxu0 %v2410
      %v2478 = vpop.f32.mrf.mxu0
      %v2479 = vadd.f32 0.0, %v2478
      %v2480 = vpop.f32.mrf.mxu0
      %2481 = vdwg.mxu0
      %v2482 = vadd.f32 %v2405, %v2479
      %2483 = vrot.lane.b32.xlu0 %v1947, 109
      %v2484 = vpop.permute.xlu0 %2483
      %v2487 = vsel %vm1228, %v1188, 0
      %2489 = vmatprep.subr.mxu0 0.0
      %2490 = vmatpush1.msra.mxu0 0.0
      %2491 = vmatprep.subr.mxu0 0.0
      %2492 = vmatpush1.msra.mxu0 0.0
      %2493 = vmatprep.subr.mxu0 0.0
      %2494 = vmatpush1.msra.mxu0 0.0
      %2495 = vmatprep.subr.mxu0 0.0
      %2496 = vmatpush1.msra.mxu0 0.0
      %2497 = vmatprep.subr.mxu0 0.0
      %2498 = vmatpush1.msra.mxu0 0.0
      %2499 = vmatprep.subr.mxu0 0.0
      %2500 = vmatpush1.msra.mxu0 0.0
      %2501 = vmatprep.subr.mxu0 0.0
      %2502 = vmatpush1.msra.mxu0 0.0
      %2503 = vmatprep.subr.mxu0 0.0
      %2504 = vmatpush1.msra.mxu0 0.0
      %2505 = vmatprep.subr.mxu0 0.0
      %2506 = vmatpush1.msra.mxu0 0.0
      %2507 = vmatprep.subr.mxu0 0.0
      %2508 = vmatpush1.msra.mxu0 0.0
      %2509 = vmatprep.subr.mxu0 0.0
      %2510 = vmatpush1.msra.mxu0 0.0
      %2511 = vmatprep.subr.mxu0 0.0
      %2512 = vmatpush1.msra.mxu0 0.0
      %2513 = vmatprep.subr.mxu0 0.0
      %2514 = vmatpush1.msra.mxu0 0.0
      %2515 = vmatprep.subr.mxu0 0.0
      %2516 = vmatpush1.msra.mxu0 0.0
      %2517 = vmatprep.subr.mxu0 0.0
      %2518 = vmatpush1.msra.mxu0 0.0
      %2519 = vmatprep.subr.mxu0 0.0
      %2520 = vmatpush1.msra.mxu0 %v2484
      %2521 = vmatprep.subr.mxu0 0.0
      %2522 = vmatpush2.msra.mxu0 0.0
      %2523 = vmatprep.subr.mxu0 0.0
      %2524 = vmatpush2.msra.mxu0 0.0
      %2525 = vmatprep.subr.mxu0 0.0
      %2526 = vmatpush2.msra.mxu0 0.0
      %2527 = vmatprep.subr.mxu0 0.0
      %2528 = vmatpush2.msra.mxu0 0.0
      %2529 = vmatprep.subr.mxu0 0.0
      %2530 = vmatpush2.msra.mxu0 0.0
      %2531 = vmatprep.subr.mxu0 0.0
      %2532 = vmatpush2.msra.mxu0 0.0
      %2533 = vmatprep.subr.mxu0 0.0
      %2534 = vmatpush2.msra.mxu0 0.0
      %2535 = vmatprep.subr.mxu0 0.0
      %2536 = vmatpush2.msra.mxu0 0.0
      %2537 = vmatprep.subr.mxu0 0.0
      %2538 = vmatpush2.msra.mxu0 0.0
      %2539 = vmatprep.subr.mxu0 0.0
      %2540 = vmatpush2.msra.mxu0 0.0
      %2541 = vmatprep.subr.mxu0 0.0
      %2542 = vmatpush2.msra.mxu0 0.0
      %2543 = vmatprep.subr.mxu0 0.0
      %2544 = vmatpush2.msra.mxu0 0.0
      %2545 = vmatprep.subr.mxu0 0.0
      %2546 = vmatpush2.msra.mxu0 0.0
      %2547 = vmatprep.subr.mxu0 0.0
      %2548 = vmatpush2.msra.mxu0 0.0
      %2549 = vmatprep.subr.mxu0 0.0
      %2550 = vmatpush2.msra.mxu0 0.0
      %2551 = vmatprep.subr.mxu0 0.0
      %2552 = vmatpush2.msra.mxu0 0.0
      %2553 = vmatprep.mubr.f32.mxu0 0.0
      %2554 = vmatmul.mubr.f32.gmra.mxu0 %v2487
      %v2555 = vpop.f32.mrf.mxu0
      %v2556 = vadd.f32 0.0, %v2555
      %v2557 = vpop.f32.mrf.mxu0
      %2558 = vdwg.mxu0
      %v2559 = vadd.f32 %v2482, %v2556
      %2560 = vrot.lane.b32.xlu0 %v1947, 108
      %v2561 = vpop.permute.xlu0 %2560
      %v2564 = vsel %vm1228, %v1189, 0
      %2566 = vmatprep.subr.mxu0 0.0
      %2567 = vmatpush1.msra.mxu0 0.0
      %2568 = vmatprep.subr.mxu0 0.0
      %2569 = vmatpush1.msra.mxu0 0.0
      %2570 = vmatprep.subr.mxu0 0.0
      %2571 = vmatpush1.msra.mxu0 0.0
      %2572 = vmatprep.subr.mxu0 0.0
      %2573 = vmatpush1.msra.mxu0 0.0
      %2574 = vmatprep.subr.mxu0 0.0
      %2575 = vmatpush1.msra.mxu0 0.0
      %2576 = vmatprep.subr.mxu0 0.0
      %2577 = vmatpush1.msra.mxu0 0.0
      %2578 = vmatprep.subr.mxu0 0.0
      %2579 = vmatpush1.msra.mxu0 0.0
      %2580 = vmatprep.subr.mxu0 0.0
      %2581 = vmatpush1.msra.mxu0 0.0
      %2582 = vmatprep.subr.mxu0 0.0
      %2583 = vmatpush1.msra.mxu0 0.0
      %2584 = vmatprep.subr.mxu0 0.0
      %2585 = vmatpush1.msra.mxu0 0.0
      %2586 = vmatprep.subr.mxu0 0.0
      %2587 = vmatpush1.msra.mxu0 0.0
      %2588 = vmatprep.subr.mxu0 0.0
      %2589 = vmatpush1.msra.mxu0 0.0
      %2590 = vmatprep.subr.mxu0 0.0
      %2591 = vmatpush1.msra.mxu0 0.0
      %2592 = vmatprep.subr.mxu0 0.0
      %2593 = vmatpush1.msra.mxu0 0.0
      %2594 = vmatprep.subr.mxu0 0.0
      %2595 = vmatpush1.msra.mxu0 0.0
      %2596 = vmatprep.subr.mxu0 0.0
      %2597 = vmatpush1.msra.mxu0 %v2561
      %2598 = vmatprep.subr.mxu0 0.0
      %2599 = vmatpush2.msra.mxu0 0.0
      %2600 = vmatprep.subr.mxu0 0.0
      %2601 = vmatpush2.msra.mxu0 0.0
      %2602 = vmatprep.subr.mxu0 0.0
      %2603 = vmatpush2.msra.mxu0 0.0
      %2604 = vmatprep.subr.mxu0 0.0
      %2605 = vmatpush2.msra.mxu0 0.0
      %2606 = vmatprep.subr.mxu0 0.0
      %2607 = vmatpush2.msra.mxu0 0.0
      %2608 = vmatprep.subr.mxu0 0.0
      %2609 = vmatpush2.msra.mxu0 0.0
      %2610 = vmatprep.subr.mxu0 0.0
      %2611 = vmatpush2.msra.mxu0 0.0
      %2612 = vmatprep.subr.mxu0 0.0
      %2613 = vmatpush2.msra.mxu0 0.0
      %2614 = vmatprep.subr.mxu0 0.0
      %2615 = vmatpush2.msra.mxu0 0.0
      %2616 = vmatprep.subr.mxu0 0.0
      %2617 = vmatpush2.msra.mxu0 0.0
      %2618 = vmatprep.subr.mxu0 0.0
      %2619 = vmatpush2.msra.mxu0 0.0
      %2620 = vmatprep.subr.mxu0 0.0
      %2621 = vmatpush2.msra.mxu0 0.0
      %2622 = vmatprep.subr.mxu0 0.0
      %2623 = vmatpush2.msra.mxu0 0.0
      %2624 = vmatprep.subr.mxu0 0.0
      %2625 = vmatpush2.msra.mxu0 0.0
      %2626 = vmatprep.subr.mxu0 0.0
      %2627 = vmatpush2.msra.mxu0 0.0
      %2628 = vmatprep.subr.mxu0 0.0
      %2629 = vmatpush2.msra.mxu0 0.0
      %2630 = vmatprep.mubr.f32.mxu0 0.0
      %2631 = vmatmul.mubr.f32.gmra.mxu0 %v2564
      %v2632 = vpop.f32.mrf.mxu0
      %v2633 = vadd.f32 0.0, %v2632
      %v2634 = vpop.f32.mrf.mxu0
      %2635 = vdwg.mxu0
      %v2636 = vadd.f32 %v2559, %v2633
      %s2637 = scalar_lea.vmem %s7, 24
      %v2638 = vld [vmem:[%s2637] sm:$0xff]
      %2640 = vset.pattern.permute.xlu0 0
      %2641 = vperm.xlu0 %2640, %v2638
      %v2642 = vpop.permute.xlu0 %2641
      %v2644 = vadd.f32 %v2636, %v2642
      %v2645 = vmul.f32 %v2644, %v1082
      %s2646 = scalar_lea.vmem %s5, 16
      %v2647 = vld [vmem:[%s2646] sm:$0xff]
      %2649 = vset.pattern.permute.xlu0 0
      %2650 = vperm.xlu0 %2649, %v2647
      %v2651 = vpop.permute.xlu0 %2650
      %v2653 = vmul.f32 %v2645, %v2651
      %s2654 = scalar_lea.vmem %s6, 16
      %v2655 = vld [vmem:[%s2654] sm:$0xff]
      %2657 = vset.pattern.permute.xlu0 0
      %2658 = vperm.xlu0 %2657, %v2655
      %v2659 = vpop.permute.xlu0 %2658
      %v2661 = vadd.f32 %v2653, %v2659
      %v2662 = vmax.f32 %v2661, 0.0
      %v2663 = vmul.f32 %v2662, %v1082
      %2665 = vrot.lane.b32.xlu0 %v2663, 10
      %v2666 = vpop.permute.xlu0 %2665
      %v2668 = vsel %vm1220, 0.0, %v2666
      %v2669 = vsel %vm1222, %v2668, 0.0
      %2671 = vrot.lane.b32.xlu0 %v2669, 127
      %v2672 = vpop.permute.xlu0 %2671
      %v2675 = vsel %vm1228, %v1192, 0
      %2677 = vmatprep.subr.mxu0 0.0
      %2678 = vmatpush1.msra.mxu0 0.0
      %2679 = vmatprep.subr.mxu0 0.0
      %2680 = vmatpush1.msra.mxu0 0.0
      %2681 = vmatprep.subr.mxu0 0.0
      %2682 = vmatpush1.msra.mxu0 0.0
      %2683 = vmatprep.subr.mxu0 0.0
      %2684 = vmatpush1.msra.mxu0 0.0
      %2685 = vmatprep.subr.mxu0 0.0
      %2686 = vmatpush1.msra.mxu0 0.0
      %2687 = vmatprep.subr.mxu0 0.0
      %2688 = vmatpush1.msra.mxu0 0.0
      %2689 = vmatprep.subr.mxu0 0.0
      %2690 = vmatpush1.msra.mxu0 0.0
      %2691 = vmatprep.subr.mxu0 0.0
      %2692 = vmatpush1.msra.mxu0 0.0
      %2693 = vmatprep.subr.mxu0 0.0
      %2694 = vmatpush1.msra.mxu0 0.0
      %2695 = vmatprep.subr.mxu0 0.0
      %2696 = vmatpush1.msra.mxu0 0.0
      %2697 = vmatprep.subr.mxu0 0.0
      %2698 = vmatpush1.msra.mxu0 0.0
      %2699 = vmatprep.subr.mxu0 0.0
      %2700 = vmatpush1.msra.mxu0 0.0
      %2701 = vmatprep.subr.mxu0 0.0
      %2702 = vmatpush1.msra.mxu0 0.0
      %2703 = vmatprep.subr.mxu0 0.0
      %2704 = vmatpush1.msra.mxu0 0.0
      %2705 = vmatprep.subr.mxu0 0.0
      %2706 = vmatpush1.msra.mxu0 0.0
      %2707 = vmatprep.subr.mxu0 0.0
      %2708 = vmatpush1.msra.mxu0 %v2672
      %2709 = vmatprep.subr.mxu0 0.0
      %2710 = vmatpush2.msra.mxu0 0.0
      %2711 = vmatprep.subr.mxu0 0.0
      %2712 = vmatpush2.msra.mxu0 0.0
      %2713 = vmatprep.subr.mxu0 0.0
      %2714 = vmatpush2.msra.mxu0 0.0
      %2715 = vmatprep.subr.mxu0 0.0
      %2716 = vmatpush2.msra.mxu0 0.0
      %2717 = vmatprep.subr.mxu0 0.0
      %2718 = vmatpush2.msra.mxu0 0.0
      %2719 = vmatprep.subr.mxu0 0.0
      %2720 = vmatpush2.msra.mxu0 0.0
      %2721 = vmatprep.subr.mxu0 0.0
      %2722 = vmatpush2.msra.mxu0 0.0
      %2723 = vmatprep.subr.mxu0 0.0
      %2724 = vmatpush2.msra.mxu0 0.0
      %2725 = vmatprep.subr.mxu0 0.0
      %2726 = vmatpush2.msra.mxu0 0.0
      %2727 = vmatprep.subr.mxu0 0.0
      %2728 = vmatpush2.msra.mxu0 0.0
      %2729 = vmatprep.subr.mxu0 0.0
      %2730 = vmatpush2.msra.mxu0 0.0
      %2731 = vmatprep.subr.mxu0 0.0
      %2732 = vmatpush2.msra.mxu0 0.0
      %2733 = vmatprep.subr.mxu0 0.0
      %2734 = vmatpush2.msra.mxu0 0.0
      %2735 = vmatprep.subr.mxu0 0.0
      %2736 = vmatpush2.msra.mxu0 0.0
      %2737 = vmatprep.subr.mxu0 0.0
      %2738 = vmatpush2.msra.mxu0 0.0
      %2739 = vmatprep.subr.mxu0 0.0
      %2740 = vmatpush2.msra.mxu0 0.0
      %2741 = vmatprep.mubr.f32.mxu0 0.0
      %2742 = vmatmul.mubr.f32.gmra.mxu0 %v2675
      %v2743 = vpop.f32.mrf.mxu0
      %v2744 = vadd.f32 0.0, %v2743
      %v2745 = vpop.f32.mrf.mxu0
      %2746 = vdwg.mxu0
      %v2748 = vsel %vm1228, %v1191, 0
      %2750 = vmatprep.subr.mxu0 0.0
      %2751 = vmatpush1.msra.mxu0 0.0
      %2752 = vmatprep.subr.mxu0 0.0
      %2753 = vmatpush1.msra.mxu0 0.0
      %2754 = vmatprep.subr.mxu0 0.0
      %2755 = vmatpush1.msra.mxu0 0.0
      %2756 = vmatprep.subr.mxu0 0.0
      %2757 = vmatpush1.msra.mxu0 0.0
      %2758 = vmatprep.subr.mxu0 0.0
      %2759 = vmatpush1.msra.mxu0 0.0
      %2760 = vmatprep.subr.mxu0 0.0
      %2761 = vmatpush1.msra.mxu0 0.0
      %2762 = vmatprep.subr.mxu0 0.0
      %2763 = vmatpush1.msra.mxu0 0.0
      %2764 = vmatprep.subr.mxu0 0.0
      %2765 = vmatpush1.msra.mxu0 0.0
      %2766 = vmatprep.subr.mxu0 0.0
      %2767 = vmatpush1.msra.mxu0 0.0
      %2768 = vmatprep.subr.mxu0 0.0
      %2769 = vmatpush1.msra.mxu0 0.0
      %2770 = vmatprep.subr.mxu0 0.0
      %2771 = vmatpush1.msra.mxu0 0.0
      %2772 = vmatprep.subr.mxu0 0.0
      %2773 = vmatpush1.msra.mxu0 0.0
      %2774 = vmatprep.subr.mxu0 0.0
      %2775 = vmatpush1.msra.mxu0 0.0
      %2776 = vmatprep.subr.mxu0 0.0
      %2777 = vmatpush1.msra.mxu0 0.0
      %2778 = vmatprep.subr.mxu0 0.0
      %2779 = vmatpush1.msra.mxu0 0.0
      %2780 = vmatprep.subr.mxu0 0.0
      %2781 = vmatpush1.msra.mxu0 %v2669
      %2782 = vmatprep.subr.mxu0 0.0
      %2783 = vmatpush2.msra.mxu0 0.0
      %2784 = vmatprep.subr.mxu0 0.0
      %2785 = vmatpush2.msra.mxu0 0.0
      %2786 = vmatprep.subr.mxu0 0.0
      %2787 = vmatpush2.msra.mxu0 0.0
      %2788 = vmatprep.subr.mxu0 0.0
      %2789 = vmatpush2.msra.mxu0 0.0
      %2790 = vmatprep.subr.mxu0 0.0
      %2791 = vmatpush2.msra.mxu0 0.0
      %2792 = vmatprep.subr.mxu0 0.0
      %2793 = vmatpush2.msra.mxu0 0.0
      %2794 = vmatprep.subr.mxu0 0.0
      %2795 = vmatpush2.msra.mxu0 0.0
      %2796 = vmatprep.subr.mxu0 0.0
      %2797 = vmatpush2.msra.mxu0 0.0
      %2798 = vmatprep.subr.mxu0 0.0
      %2799 = vmatpush2.msra.mxu0 0.0
      %2800 = vmatprep.subr.mxu0 0.0
      %2801 = vmatpush2.msra.mxu0 0.0
      %2802 = vmatprep.subr.mxu0 0.0
      %2803 = vmatpush2.msra.mxu0 0.0
      %2804 = vmatprep.subr.mxu0 0.0
      %2805 = vmatpush2.msra.mxu0 0.0
      %2806 = vmatprep.subr.mxu0 0.0
      %2807 = vmatpush2.msra.mxu0 0.0
      %2808 = vmatprep.subr.mxu0 0.0
      %2809 = vmatpush2.msra.mxu0 0.0
      %2810 = vmatprep.subr.mxu0 0.0
      %2811 = vmatpush2.msra.mxu0 0.0
      %2812 = vmatprep.subr.mxu0 0.0
      %2813 = vmatpush2.msra.mxu0 0.0
      %2814 = vmatprep.mubr.f32.mxu0 0.0
      %2815 = vmatmul.mubr.f32.gmra.mxu0 %v2748
      %v2816 = vpop.f32.mrf.mxu0
      %v2817 = vadd.f32 %v2744, %v2816
      %v2818 = vpop.f32.mrf.mxu0
      %2819 = vdwg.mxu0
      %2820 = vrot.lane.b32.xlu0 %v2669, 126
      %v2821 = vpop.permute.xlu0 %2820
      %v2824 = vsel %vm1228, %v1193, 0
      %2826 = vmatprep.subr.mxu0 0.0
      %2827 = vmatpush1.msra.mxu0 0.0
      %2828 = vmatprep.subr.mxu0 0.0
      %2829 = vmatpush1.msra.mxu0 0.0
      %2830 = vmatprep.subr.mxu0 0.0
      %2831 = vmatpush1.msra.mxu0 0.0
      %2832 = vmatprep.subr.mxu0 0.0
      %2833 = vmatpush1.msra.mxu0 0.0
      %2834 = vmatprep.subr.mxu0 0.0
      %2835 = vmatpush1.msra.mxu0 0.0
      %2836 = vmatprep.subr.mxu0 0.0
      %2837 = vmatpush1.msra.mxu0 0.0
      %2838 = vmatprep.subr.mxu0 0.0
      %2839 = vmatpush1.msra.mxu0 0.0
      %2840 = vmatprep.subr.mxu0 0.0
      %2841 = vmatpush1.msra.mxu0 0.0
      %2842 = vmatprep.subr.mxu0 0.0
      %2843 = vmatpush1.msra.mxu0 0.0
      %2844 = vmatprep.subr.mxu0 0.0
      %2845 = vmatpush1.msra.mxu0 0.0
      %2846 = vmatprep.subr.mxu0 0.0
      %2847 = vmatpush1.msra.mxu0 0.0
      %2848 = vmatprep.subr.mxu0 0.0
      %2849 = vmatpush1.msra.mxu0 0.0
      %2850 = vmatprep.subr.mxu0 0.0
      %2851 = vmatpush1.msra.mxu0 0.0
      %2852 = vmatprep.subr.mxu0 0.0
      %2853 = vmatpush1.msra.mxu0 0.0
      %2854 = vmatprep.subr.mxu0 0.0
      %2855 = vmatpush1.msra.mxu0 0.0
      %2856 = vmatprep.subr.mxu0 0.0
      %2857 = vmatpush1.msra.mxu0 %v2821
      %2858 = vmatprep.subr.mxu0 0.0
      %2859 = vmatpush2.msra.mxu0 0.0
      %2860 = vmatprep.subr.mxu0 0.0
      %2861 = vmatpush2.msra.mxu0 0.0
      %2862 = vmatprep.subr.mxu0 0.0
      %2863 = vmatpush2.msra.mxu0 0.0
      %2864 = vmatprep.subr.mxu0 0.0
      %2865 = vmatpush2.msra.mxu0 0.0
      %2866 = vmatprep.subr.mxu0 0.0
      %2867 = vmatpush2.msra.mxu0 0.0
      %2868 = vmatprep.subr.mxu0 0.0
      %2869 = vmatpush2.msra.mxu0 0.0
      %2870 = vmatprep.subr.mxu0 0.0
      %2871 = vmatpush2.msra.mxu0 0.0
      %2872 = vmatprep.subr.mxu0 0.0
      %2873 = vmatpush2.msra.mxu0 0.0
      %2874 = vmatprep.subr.mxu0 0.0
      %2875 = vmatpush2.msra.mxu0 0.0
      %2876 = vmatprep.subr.mxu0 0.0
      %2877 = vmatpush2.msra.mxu0 0.0
      %2878 = vmatprep.subr.mxu0 0.0
      %2879 = vmatpush2.msra.mxu0 0.0
      %2880 = vmatprep.subr.mxu0 0.0
      %2881 = vmatpush2.msra.mxu0 0.0
      %2882 = vmatprep.subr.mxu0 0.0
      %2883 = vmatpush2.msra.mxu0 0.0
      %2884 = vmatprep.subr.mxu0 0.0
      %2885 = vmatpush2.msra.mxu0 0.0
      %2886 = vmatprep.subr.mxu0 0.0
      %2887 = vmatpush2.msra.mxu0 0.0
      %2888 = vmatprep.subr.mxu0 0.0
      %2889 = vmatpush2.msra.mxu0 0.0
      %2890 = vmatprep.mubr.f32.mxu0 0.0
      %2891 = vmatmul.mubr.f32.gmra.mxu0 %v2824
      %v2892 = vpop.f32.mrf.mxu0
      %v2893 = vadd.f32 0.0, %v2892
      %v2894 = vpop.f32.mrf.mxu0
      %2895 = vdwg.mxu0
      %v2896 = vadd.f32 %v2817, %v2893
      %2897 = vrot.lane.b32.xlu0 %v2669, 119
      %v2898 = vpop.permute.xlu0 %2897
      %v2901 = vsel %vm1228, %v1194, 0
      %2903 = vmatprep.subr.mxu0 0.0
      %2904 = vmatpush1.msra.mxu0 0.0
      %2905 = vmatprep.subr.mxu0 0.0
      %2906 = vmatpush1.msra.mxu0 0.0
      %2907 = vmatprep.subr.mxu0 0.0
      %2908 = vmatpush1.msra.mxu0 0.0
      %2909 = vmatprep.subr.mxu0 0.0
      %2910 = vmatpush1.msra.mxu0 0.0
      %2911 = vmatprep.subr.mxu0 0.0
      %2912 = vmatpush1.msra.mxu0 0.0
      %2913 = vmatprep.subr.mxu0 0.0
      %2914 = vmatpush1.msra.mxu0 0.0
      %2915 = vmatprep.subr.mxu0 0.0
      %2916 = vmatpush1.msra.mxu0 0.0
      %2917 = vmatprep.subr.mxu0 0.0
      %2918 = vmatpush1.msra.mxu0 0.0
      %2919 = vmatprep.subr.mxu0 0.0
      %2920 = vmatpush1.msra.mxu0 0.0
      %2921 = vmatprep.subr.mxu0 0.0
      %2922 = vmatpush1.msra.mxu0 0.0
      %2923 = vmatprep.subr.mxu0 0.0
      %2924 = vmatpush1.msra.mxu0 0.0
      %2925 = vmatprep.subr.mxu0 0.0
      %2926 = vmatpush1.msra.mxu0 0.0
      %2927 = vmatprep.subr.mxu0 0.0
      %2928 = vmatpush1.msra.mxu0 0.0
      %2929 = vmatprep.subr.mxu0 0.0
      %2930 = vmatpush1.msra.mxu0 0.0
      %2931 = vmatprep.subr.mxu0 0.0
      %2932 = vmatpush1.msra.mxu0 0.0
      %2933 = vmatprep.subr.mxu0 0.0
      %2934 = vmatpush1.msra.mxu0 %v2898
      %2935 = vmatprep.subr.mxu0 0.0
      %2936 = vmatpush2.msra.mxu0 0.0
      %2937 = vmatprep.subr.mxu0 0.0
      %2938 = vmatpush2.msra.mxu0 0.0
      %2939 = vmatprep.subr.mxu0 0.0
      %2940 = vmatpush2.msra.mxu0 0.0
      %2941 = vmatprep.subr.mxu0 0.0
      %2942 = vmatpush2.msra.mxu0 0.0
      %2943 = vmatprep.subr.mxu0 0.0
      %2944 = vmatpush2.msra.mxu0 0.0
      %2945 = vmatprep.subr.mxu0 0.0
      %2946 = vmatpush2.msra.mxu0 0.0
      %2947 = vmatprep.subr.mxu0 0.0
      %2948 = vmatpush2.msra.mxu0 0.0
      %2949 = vmatprep.subr.mxu0 0.0
      %2950 = vmatpush2.msra.mxu0 0.0
      %2951 = vmatprep.subr.mxu0 0.0
      %2952 = vmatpush2.msra.mxu0 0.0
      %2953 = vmatprep.subr.mxu0 0.0
      %2954 = vmatpush2.msra.mxu0 0.0
      %2955 = vmatprep.subr.mxu0 0.0
      %2956 = vmatpush2.msra.mxu0 0.0
      %2957 = vmatprep.subr.mxu0 0.0
      %2958 = vmatpush2.msra.mxu0 0.0
      %2959 = vmatprep.subr.mxu0 0.0
      %2960 = vmatpush2.msra.mxu0 0.0
      %2961 = vmatprep.subr.mxu0 0.0
      %2962 = vmatpush2.msra.mxu0 0.0
      %2963 = vmatprep.subr.mxu0 0.0
      %2964 = vmatpush2.msra.mxu0 0.0
      %2965 = vmatprep.subr.mxu0 0.0
      %2966 = vmatpush2.msra.mxu0 0.0
      %2967 = vmatprep.mubr.f32.mxu0 0.0
      %2968 = vmatmul.mubr.f32.gmra.mxu0 %v2901
      %v2969 = vpop.f32.mrf.mxu0
      %v2970 = vadd.f32 0.0, %v2969
      %v2971 = vpop.f32.mrf.mxu0
      %2972 = vdwg.mxu0
      %v2973 = vadd.f32 %v2896, %v2970
      %2974 = vrot.lane.b32.xlu0 %v2669, 118
      %v2975 = vpop.permute.xlu0 %2974
      %v2978 = vsel %vm1228, %v1195, 0
      %2980 = vmatprep.subr.mxu0 0.0
      %2981 = vmatpush1.msra.mxu0 0.0
      %2982 = vmatprep.subr.mxu0 0.0
      %2983 = vmatpush1.msra.mxu0 0.0
      %2984 = vmatprep.subr.mxu0 0.0
      %2985 = vmatpush1.msra.mxu0 0.0
      %2986 = vmatprep.subr.mxu0 0.0
      %2987 = vmatpush1.msra.mxu0 0.0
      %2988 = vmatprep.subr.mxu0 0.0
      %2989 = vmatpush1.msra.mxu0 0.0
      %2990 = vmatprep.subr.mxu0 0.0
      %2991 = vmatpush1.msra.mxu0 0.0
      %2992 = vmatprep.subr.mxu0 0.0
      %2993 = vmatpush1.msra.mxu0 0.0
      %2994 = vmatprep.subr.mxu0 0.0
      %2995 = vmatpush1.msra.mxu0 0.0
      %2996 = vmatprep.subr.mxu0 0.0
      %2997 = vmatpush1.msra.mxu0 0.0
      %2998 = vmatprep.subr.mxu0 0.0
      %2999 = vmatpush1.msra.mxu0 0.0
      %3000 = vmatprep.subr.mxu0 0.0
      %3001 = vmatpush1.msra.mxu0 0.0
      %3002 = vmatprep.subr.mxu0 0.0
      %3003 = vmatpush1.msra.mxu0 0.0
      %3004 = vmatprep.subr.mxu0 0.0
      %3005 = vmatpush1.msra.mxu0 0.0
      %3006 = vmatprep.subr.mxu0 0.0
      %3007 = vmatpush1.msra.mxu0 0.0
      %3008 = vmatprep.subr.mxu0 0.0
      %3009 = vmatpush1.msra.mxu0 0.0
      %3010 = vmatprep.subr.mxu0 0.0
      %3011 = vmatpush1.msra.mxu0 %v2975
      %3012 = vmatprep.subr.mxu0 0.0
      %3013 = vmatpush2.msra.mxu0 0.0
      %3014 = vmatprep.subr.mxu0 0.0
      %3015 = vmatpush2.msra.mxu0 0.0
      %3016 = vmatprep.subr.mxu0 0.0
      %3017 = vmatpush2.msra.mxu0 0.0
      %3018 = vmatprep.subr.mxu0 0.0
      %3019 = vmatpush2.msra.mxu0 0.0
      %3020 = vmatprep.subr.mxu0 0.0
      %3021 = vmatpush2.msra.mxu0 0.0
      %3022 = vmatprep.subr.mxu0 0.0
      %3023 = vmatpush2.msra.mxu0 0.0
      %3024 = vmatprep.subr.mxu0 0.0
      %3025 = vmatpush2.msra.mxu0 0.0
      %3026 = vmatprep.subr.mxu0 0.0
      %3027 = vmatpush2.msra.mxu0 0.0
      %3028 = vmatprep.subr.mxu0 0.0
      %3029 = vmatpush2.msra.mxu0 0.0
      %3030 = vmatprep.subr.mxu0 0.0
      %3031 = vmatpush2.msra.mxu0 0.0
      %3032 = vmatprep.subr.mxu0 0.0
      %3033 = vmatpush2.msra.mxu0 0.0
      %3034 = vmatprep.subr.mxu0 0.0
      %3035 = vmatpush2.msra.mxu0 0.0
      %3036 = vmatprep.subr.mxu0 0.0
      %3037 = vmatpush2.msra.mxu0 0.0
      %3038 = vmatprep.subr.mxu0 0.0
      %3039 = vmatpush2.msra.mxu0 0.0
      %3040 = vmatprep.subr.mxu0 0.0
      %3041 = vmatpush2.msra.mxu0 0.0
      %3042 = vmatprep.subr.mxu0 0.0
      %3043 = vmatpush2.msra.mxu0 0.0
      %3044 = vmatprep.mubr.f32.mxu0 0.0
      %3045 = vmatmul.mubr.f32.gmra.mxu0 %v2978
      %v3046 = vpop.f32.mrf.mxu0
      %v3047 = vadd.f32 0.0, %v3046
      %v3048 = vpop.f32.mrf.mxu0
      %3049 = vdwg.mxu0
      %v3050 = vadd.f32 %v2973, %v3047
      %3051 = vrot.lane.b32.xlu0 %v2669, 117
      %v3052 = vpop.permute.xlu0 %3051
      %v3055 = vsel %vm1228, %v1196, 0
      %3057 = vmatprep.subr.mxu0 0.0
      %3058 = vmatpush1.msra.mxu0 0.0
      %3059 = vmatprep.subr.mxu0 0.0
      %3060 = vmatpush1.msra.mxu0 0.0
      %3061 = vmatprep.subr.mxu0 0.0
      %3062 = vmatpush1.msra.mxu0 0.0
      %3063 = vmatprep.subr.mxu0 0.0
      %3064 = vmatpush1.msra.mxu0 0.0
      %3065 = vmatprep.subr.mxu0 0.0
      %3066 = vmatpush1.msra.mxu0 0.0
      %3067 = vmatprep.subr.mxu0 0.0
      %3068 = vmatpush1.msra.mxu0 0.0
      %3069 = vmatprep.subr.mxu0 0.0
      %3070 = vmatpush1.msra.mxu0 0.0
      %3071 = vmatprep.subr.mxu0 0.0
      %3072 = vmatpush1.msra.mxu0 0.0
      %3073 = vmatprep.subr.mxu0 0.0
      %3074 = vmatpush1.msra.mxu0 0.0
      %3075 = vmatprep.subr.mxu0 0.0
      %3076 = vmatpush1.msra.mxu0 0.0
      %3077 = vmatprep.subr.mxu0 0.0
      %3078 = vmatpush1.msra.mxu0 0.0
      %3079 = vmatprep.subr.mxu0 0.0
      %3080 = vmatpush1.msra.mxu0 0.0
      %3081 = vmatprep.subr.mxu0 0.0
      %3082 = vmatpush1.msra.mxu0 0.0
      %3083 = vmatprep.subr.mxu0 0.0
      %3084 = vmatpush1.msra.mxu0 0.0
      %3085 = vmatprep.subr.mxu0 0.0
      %3086 = vmatpush1.msra.mxu0 0.0
      %3087 = vmatprep.subr.mxu0 0.0
      %3088 = vmatpush1.msra.mxu0 %v3052
      %3089 = vmatprep.subr.mxu0 0.0
      %3090 = vmatpush2.msra.mxu0 0.0
      %3091 = vmatprep.subr.mxu0 0.0
      %3092 = vmatpush2.msra.mxu0 0.0
      %3093 = vmatprep.subr.mxu0 0.0
      %3094 = vmatpush2.msra.mxu0 0.0
      %3095 = vmatprep.subr.mxu0 0.0
      %3096 = vmatpush2.msra.mxu0 0.0
      %3097 = vmatprep.subr.mxu0 0.0
      %3098 = vmatpush2.msra.mxu0 0.0
      %3099 = vmatprep.subr.mxu0 0.0
      %3100 = vmatpush2.msra.mxu0 0.0
      %3101 = vmatprep.subr.mxu0 0.0
      %3102 = vmatpush2.msra.mxu0 0.0
      %3103 = vmatprep.subr.mxu0 0.0
      %3104 = vmatpush2.msra.mxu0 0.0
      %3105 = vmatprep.subr.mxu0 0.0
      %3106 = vmatpush2.msra.mxu0 0.0
      %3107 = vmatprep.subr.mxu0 0.0
      %3108 = vmatpush2.msra.mxu0 0.0
      %3109 = vmatprep.subr.mxu0 0.0
      %3110 = vmatpush2.msra.mxu0 0.0
      %3111 = vmatprep.subr.mxu0 0.0
      %3112 = vmatpush2.msra.mxu0 0.0
      %3113 = vmatprep.subr.mxu0 0.0
      %3114 = vmatpush2.msra.mxu0 0.0
      %3115 = vmatprep.subr.mxu0 0.0
      %3116 = vmatpush2.msra.mxu0 0.0
      %3117 = vmatprep.subr.mxu0 0.0
      %3118 = vmatpush2.msra.mxu0 0.0
      %3119 = vmatprep.subr.mxu0 0.0
      %3120 = vmatpush2.msra.mxu0 0.0
      %3121 = vmatprep.mubr.f32.mxu0 0.0
      %3122 = vmatmul.mubr.f32.gmra.mxu0 %v3055
      %v3123 = vpop.f32.mrf.mxu0
      %v3124 = vadd.f32 0.0, %v3123
      %v3125 = vpop.f32.mrf.mxu0
      %3126 = vdwg.mxu0
      %v3127 = vadd.f32 %v3050, %v3124
      %3128 = vrot.lane.b32.xlu0 %v2669, 110
      %v3129 = vpop.permute.xlu0 %3128
      %v3132 = vsel %vm1228, %v1197, 0
      %3134 = vmatprep.subr.mxu0 0.0
      %3135 = vmatpush1.msra.mxu0 0.0
      %3136 = vmatprep.subr.mxu0 0.0
      %3137 = vmatpush1.msra.mxu0 0.0
      %3138 = vmatprep.subr.mxu0 0.0
      %3139 = vmatpush1.msra.mxu0 0.0
      %3140 = vmatprep.subr.mxu0 0.0
      %3141 = vmatpush1.msra.mxu0 0.0
      %3142 = vmatprep.subr.mxu0 0.0
      %3143 = vmatpush1.msra.mxu0 0.0
      %3144 = vmatprep.subr.mxu0 0.0
      %3145 = vmatpush1.msra.mxu0 0.0
      %3146 = vmatprep.subr.mxu0 0.0
      %3147 = vmatpush1.msra.mxu0 0.0
      %3148 = vmatprep.subr.mxu0 0.0
      %3149 = vmatpush1.msra.mxu0 0.0
      %3150 = vmatprep.subr.mxu0 0.0
      %3151 = vmatpush1.msra.mxu0 0.0
      %3152 = vmatprep.subr.mxu0 0.0
      %3153 = vmatpush1.msra.mxu0 0.0
      %3154 = vmatprep.subr.mxu0 0.0
      %3155 = vmatpush1.msra.mxu0 0.0
      %3156 = vmatprep.subr.mxu0 0.0
      %3157 = vmatpush1.msra.mxu0 0.0
      %3158 = vmatprep.subr.mxu0 0.0
      %3159 = vmatpush1.msra.mxu0 0.0
      %3160 = vmatprep.subr.mxu0 0.0
      %3161 = vmatpush1.msra.mxu0 0.0
      %3162 = vmatprep.subr.mxu0 0.0
      %3163 = vmatpush1.msra.mxu0 0.0
      %3164 = vmatprep.subr.mxu0 0.0
      %3165 = vmatpush1.msra.mxu0 %v3129
      %3166 = vmatprep.subr.mxu0 0.0
      %3167 = vmatpush2.msra.mxu0 0.0
      %3168 = vmatprep.subr.mxu0 0.0
      %3169 = vmatpush2.msra.mxu0 0.0
      %3170 = vmatprep.subr.mxu0 0.0
      %3171 = vmatpush2.msra.mxu0 0.0
      %3172 = vmatprep.subr.mxu0 0.0
      %3173 = vmatpush2.msra.mxu0 0.0
      %3174 = vmatprep.subr.mxu0 0.0
      %3175 = vmatpush2.msra.mxu0 0.0
      %3176 = vmatprep.subr.mxu0 0.0
      %3177 = vmatpush2.msra.mxu0 0.0
      %3178 = vmatprep.subr.mxu0 0.0
      %3179 = vmatpush2.msra.mxu0 0.0
      %3180 = vmatprep.subr.mxu0 0.0
      %3181 = vmatpush2.msra.mxu0 0.0
      %3182 = vmatprep.subr.mxu0 0.0
      %3183 = vmatpush2.msra.mxu0 0.0
      %3184 = vmatprep.subr.mxu0 0.0
      %3185 = vmatpush2.msra.mxu0 0.0
      %3186 = vmatprep.subr.mxu0 0.0
      %3187 = vmatpush2.msra.mxu0 0.0
      %3188 = vmatprep.subr.mxu0 0.0
      %3189 = vmatpush2.msra.mxu0 0.0
      %3190 = vmatprep.subr.mxu0 0.0
      %3191 = vmatpush2.msra.mxu0 0.0
      %3192 = vmatprep.subr.mxu0 0.0
      %3193 = vmatpush2.msra.mxu0 0.0
      %3194 = vmatprep.subr.mxu0 0.0
      %3195 = vmatpush2.msra.mxu0 0.0
      %3196 = vmatprep.subr.mxu0 0.0
      %3197 = vmatpush2.msra.mxu0 0.0
      %3198 = vmatprep.mubr.f32.mxu0 0.0
      %3199 = vmatmul.mubr.f32.gmra.mxu0 %v3132
      %v3200 = vpop.f32.mrf.mxu0
      %v3201 = vadd.f32 0.0, %v3200
      %v3202 = vpop.f32.mrf.mxu0
      %3203 = vdwg.mxu0
      %v3204 = vadd.f32 %v3127, %v3201
      %3205 = vrot.lane.b32.xlu0 %v2669, 109
      %v3206 = vpop.permute.xlu0 %3205
      %v3209 = vsel %vm1228, %v1198, 0
      %3211 = vmatprep.subr.mxu0 0.0
      %3212 = vmatpush1.msra.mxu0 0.0
      %3213 = vmatprep.subr.mxu0 0.0
      %3214 = vmatpush1.msra.mxu0 0.0
      %3215 = vmatprep.subr.mxu0 0.0
      %3216 = vmatpush1.msra.mxu0 0.0
      %3217 = vmatprep.subr.mxu0 0.0
      %3218 = vmatpush1.msra.mxu0 0.0
      %3219 = vmatprep.subr.mxu0 0.0
      %3220 = vmatpush1.msra.mxu0 0.0
      %3221 = vmatprep.subr.mxu0 0.0
      %3222 = vmatpush1.msra.mxu0 0.0
      %3223 = vmatprep.subr.mxu0 0.0
      %3224 = vmatpush1.msra.mxu0 0.0
      %3225 = vmatprep.subr.mxu0 0.0
      %3226 = vmatpush1.msra.mxu0 0.0
      %3227 = vmatprep.subr.mxu0 0.0
      %3228 = vmatpush1.msra.mxu0 0.0
      %3229 = vmatprep.subr.mxu0 0.0
      %3230 = vmatpush1.msra.mxu0 0.0
      %3231 = vmatprep.subr.mxu0 0.0
      %3232 = vmatpush1.msra.mxu0 0.0
      %3233 = vmatprep.subr.mxu0 0.0
      %3234 = vmatpush1.msra.mxu0 0.0
      %3235 = vmatprep.subr.mxu0 0.0
      %3236 = vmatpush1.msra.mxu0 0.0
      %3237 = vmatprep.subr.mxu0 0.0
      %3238 = vmatpush1.msra.mxu0 0.0
      %3239 = vmatprep.subr.mxu0 0.0
      %3240 = vmatpush1.msra.mxu0 0.0
      %3241 = vmatprep.subr.mxu0 0.0
      %3242 = vmatpush1.msra.mxu0 %v3206
      %3243 = vmatprep.subr.mxu0 0.0
      %3244 = vmatpush2.msra.mxu0 0.0
      %3245 = vmatprep.subr.mxu0 0.0
      %3246 = vmatpush2.msra.mxu0 0.0
      %3247 = vmatprep.subr.mxu0 0.0
      %3248 = vmatpush2.msra.mxu0 0.0
      %3249 = vmatprep.subr.mxu0 0.0
      %3250 = vmatpush2.msra.mxu0 0.0
      %3251 = vmatprep.subr.mxu0 0.0
      %3252 = vmatpush2.msra.mxu0 0.0
      %3253 = vmatprep.subr.mxu0 0.0
      %3254 = vmatpush2.msra.mxu0 0.0
      %3255 = vmatprep.subr.mxu0 0.0
      %3256 = vmatpush2.msra.mxu0 0.0
      %3257 = vmatprep.subr.mxu0 0.0
      %3258 = vmatpush2.msra.mxu0 0.0
      %3259 = vmatprep.subr.mxu0 0.0
      %3260 = vmatpush2.msra.mxu0 0.0
      %3261 = vmatprep.subr.mxu0 0.0
      %3262 = vmatpush2.msra.mxu0 0.0
      %3263 = vmatprep.subr.mxu0 0.0
      %3264 = vmatpush2.msra.mxu0 0.0
      %3265 = vmatprep.subr.mxu0 0.0
      %3266 = vmatpush2.msra.mxu0 0.0
      %3267 = vmatprep.subr.mxu0 0.0
      %3268 = vmatpush2.msra.mxu0 0.0
      %3269 = vmatprep.subr.mxu0 0.0
      %3270 = vmatpush2.msra.mxu0 0.0
      %3271 = vmatprep.subr.mxu0 0.0
      %3272 = vmatpush2.msra.mxu0 0.0
      %3273 = vmatprep.subr.mxu0 0.0
      %3274 = vmatpush2.msra.mxu0 0.0
      %3275 = vmatprep.mubr.f32.mxu0 0.0
      %3276 = vmatmul.mubr.f32.gmra.mxu0 %v3209
      %v3277 = vpop.f32.mrf.mxu0
      %v3278 = vadd.f32 0.0, %v3277
      %v3279 = vpop.f32.mrf.mxu0
      %3280 = vdwg.mxu0
      %v3281 = vadd.f32 %v3204, %v3278
      %3282 = vrot.lane.b32.xlu0 %v2669, 108
      %v3283 = vpop.permute.xlu0 %3282
      %v3286 = vsel %vm1228, %v1199, 0
      %3288 = vmatprep.subr.mxu0 0.0
      %3289 = vmatpush1.msra.mxu0 0.0
      %3290 = vmatprep.subr.mxu0 0.0
      %3291 = vmatpush1.msra.mxu0 0.0
      %3292 = vmatprep.subr.mxu0 0.0
      %3293 = vmatpush1.msra.mxu0 0.0
      %3294 = vmatprep.subr.mxu0 0.0
      %3295 = vmatpush1.msra.mxu0 0.0
      %3296 = vmatprep.subr.mxu0 0.0
      %3297 = vmatpush1.msra.mxu0 0.0
      %3298 = vmatprep.subr.mxu0 0.0
      %3299 = vmatpush1.msra.mxu0 0.0
      %3300 = vmatprep.subr.mxu0 0.0
      %3301 = vmatpush1.msra.mxu0 0.0
      %3302 = vmatprep.subr.mxu0 0.0
      %3303 = vmatpush1.msra.mxu0 0.0
      %3304 = vmatprep.subr.mxu0 0.0
      %3305 = vmatpush1.msra.mxu0 0.0
      %3306 = vmatprep.subr.mxu0 0.0
      %3307 = vmatpush1.msra.mxu0 0.0
      %3308 = vmatprep.subr.mxu0 0.0
      %3309 = vmatpush1.msra.mxu0 0.0
      %3310 = vmatprep.subr.mxu0 0.0
      %3311 = vmatpush1.msra.mxu0 0.0
      %3312 = vmatprep.subr.mxu0 0.0
      %3313 = vmatpush1.msra.mxu0 0.0
      %3314 = vmatprep.subr.mxu0 0.0
      %3315 = vmatpush1.msra.mxu0 0.0
      %3316 = vmatprep.subr.mxu0 0.0
      %3317 = vmatpush1.msra.mxu0 0.0
      %3318 = vmatprep.subr.mxu0 0.0
      %3319 = vmatpush1.msra.mxu0 %v3283
      %3320 = vmatprep.subr.mxu0 0.0
      %3321 = vmatpush2.msra.mxu0 0.0
      %3322 = vmatprep.subr.mxu0 0.0
      %3323 = vmatpush2.msra.mxu0 0.0
      %3324 = vmatprep.subr.mxu0 0.0
      %3325 = vmatpush2.msra.mxu0 0.0
      %3326 = vmatprep.subr.mxu0 0.0
      %3327 = vmatpush2.msra.mxu0 0.0
      %3328 = vmatprep.subr.mxu0 0.0
      %3329 = vmatpush2.msra.mxu0 0.0
      %3330 = vmatprep.subr.mxu0 0.0
      %3331 = vmatpush2.msra.mxu0 0.0
      %3332 = vmatprep.subr.mxu0 0.0
      %3333 = vmatpush2.msra.mxu0 0.0
      %3334 = vmatprep.subr.mxu0 0.0
      %3335 = vmatpush2.msra.mxu0 0.0
      %3336 = vmatprep.subr.mxu0 0.0
      %3337 = vmatpush2.msra.mxu0 0.0
      %3338 = vmatprep.subr.mxu0 0.0
      %3339 = vmatpush2.msra.mxu0 0.0
      %3340 = vmatprep.subr.mxu0 0.0
      %3341 = vmatpush2.msra.mxu0 0.0
      %3342 = vmatprep.subr.mxu0 0.0
      %3343 = vmatpush2.msra.mxu0 0.0
      %3344 = vmatprep.subr.mxu0 0.0
      %3345 = vmatpush2.msra.mxu0 0.0
      %3346 = vmatprep.subr.mxu0 0.0
      %3347 = vmatpush2.msra.mxu0 0.0
      %3348 = vmatprep.subr.mxu0 0.0
      %3349 = vmatpush2.msra.mxu0 0.0
      %3350 = vmatprep.subr.mxu0 0.0
      %3351 = vmatpush2.msra.mxu0 0.0
      %3352 = vmatprep.mubr.f32.mxu0 0.0
      %3353 = vmatmul.mubr.f32.gmra.mxu0 %v3286
      %v3354 = vpop.f32.mrf.mxu0
      %v3355 = vadd.f32 0.0, %v3354
      %v3356 = vpop.f32.mrf.mxu0
      %3357 = vdwg.mxu0
      %v3358 = vadd.f32 %v3281, %v3355
      %s3359 = scalar_lea.vmem %s7, 32
      %v3360 = vld [vmem:[%s3359] sm:$0xff]
      %3362 = vset.pattern.permute.xlu0 0
      %3363 = vperm.xlu0 %3362, %v3360
      %v3364 = vpop.permute.xlu0 %3363
      %v3366 = vadd.f32 %v3358, %v3364
      %v3367 = vmul.f32 %v3366, %v1082
      %v3368 = vadd.f32 %v3367, %v1923
      %vm3369 = vcmask 588800
      %3370 = vst.msk [vmem:[%s347] sm:$0xff] %vm3369, %v3368
      %p3371 = scmp.lt.s32.totalorder %s20, 1
      %s3372 = scalar_select %p3371, %s20, 1
      %s3373 = smul.addr %s3372, 8
      %s3374 = scalar_lea.vmem %s9, %s3373
      // Predicated region
      $region57: #{down_forward_pallas.1} parent=55 // pred_check
        %p3375 = pneg %p237
      $region58: #{down_forward_pallas.1} parent=55 // pred_check_branch
        %3377 = sbr.rel (%p3375) target = $region60
      $region59: #{down_forward_pallas.1} parent=55 // pred_region
        _
      $region60: #{down_forward_pallas.1} parent=55 // pred_fallthru
        _
    $region56: #{down_forward_pallas.1} parent=5 // pred_fallthru
      _
    %p3378 = scmp.le.s32.totalorder 2, %s15
    // Predicated region
    $region61: #{down_forward_pallas.1} parent=5 // pred_check
      %p3379 = pneg %p3378
    $region62: #{down_forward_pallas.1} parent=5 // pred_check_branch
      %3381 = sbr.rel (%p3379) target = $region64
    $region63: #{down_forward_pallas.1} parent=5 // pred_region
      %s3382 = ssub.s32 %s15, 2
      // Predicated region
      $region65: #{down_forward_pallas.1} parent=63 // pred_check
        %p3383 = pneg %p243
      $region66: #{down_forward_pallas.1} parent=63 // pred_check_branch
        %3385 = sbr.rel (%p3383) target = $region68
      $region67: #{down_forward_pallas.1} parent=63 // pred_region
        %p3386 = scmp.lt.s32.totalorder %s21, 1
        %s3387 = scalar_select %p3386, %s21, 1
        %s3388 = smul.addr %s3387, 8
        %s3389 = scalar_lea.vmem %s9, %s3388
      $region68: #{down_forward_pallas.1} parent=63 // pred_fallthru
        _
    $region64: #{down_forward_pallas.1} parent=5 // pred_fallthru
      _
  $region6: #{down_forward_pallas.1} parent=0 // loop_footer
    %s19 = sadd.s32 1, %s15
  $region7: #{down_forward_pallas.1} parent=0 // loop_footer_branch
    %14 = sbr.rel target = $region3
  $region8: #{down_forward_pallas.1} parent=0 // loop_exit
    _

</llo_original>
